<compile_context>
chip_gen: v7x
topology: tpu7x:2x2x1
jax: 0.10.0
libtpu: 0.0.40
codegen_flags: <defaults>
</compile_context>

<pallas_src>
import jax
import jax.numpy as jnp
from jax.experimental import pallas as pl

# ---- Model dimensions (small, consistent with the module's __init__) -------
BATCH = 2
N1 = 32                       # fine-graph nodes
N2 = 16                       # coarse-graph nodes (= resolution[0])
T = 15                        # BOLD window length (== H1, collapse_H=True)
F1, G1, K1, H1 = 1, 64, 12, 15
F2, G2, K2, H2 = G1, 32, 8, 1
K_CHEB = K1                   # module uses K=k1 for both convs
NUM_CLASSES = 6


# ---------------------------- Pallas kernel ---------------------------------
def _tgcn_kernel(x_ref, l1_ref, l2_ref, bmap_ref, w1_ref, b1_ref,
                 w2_ref, b2_ref, wcat_ref, mask_ref, selc_ref, selr_ref,
                 bfc_ref, out_ref):
    # Batch is stacked along sublanes everywhere:
    #   x    (B*N1, T)        l1 (B*N1, B*N1) = kron(I_B, L1~)
    #   bmap (B*N2, B*N1)     l2 (B*N2, B*N2) = kron(I_B, L2~)
    #   w1   (K, T, G1)       w2 (K, G1, G2)
    def mm(a, b):
        return jnp.dot(a, b, preferred_element_type=jnp.float32)

    k_cheb = w1_ref.shape[0]

    # ---- conv1: Chebyshev recurrence with per-k contraction interleaved ----
    x = x_ref[...]                      # (B*N1, T)
    l1 = l1_ref[...]
    l1x2 = l1 + l1                      # fold the 2.0 of the recurrence (once)
    z_prev = x
    z_cur = mm(l1, x)
    h1 = mm(z_prev, w1_ref[0]) + mm(z_cur, w1_ref[1])
    for k in range(2, k_cheb):
        z_next = mm(l1x2, z_cur) - z_prev
        h1 = h1 + mm(z_next, w1_ref[k])          # fills MXU bubbles of the chain
        z_prev, z_cur = z_cur, z_next
    h1 = jnp.maximum(h1 + b1_ref[...], 0.0)      # (B*N1, G1), ReLU

    # ---- pooling: block-diag(b) @ h1 over the node axis, all samples ----
    hp = mm(bmap_ref[...], h1)                   # (B*N2, G1)

    # ---- conv2: Chebyshev recurrence on the coarse graph, H = 1 ----
    l2 = l2_ref[...]
    l2x2 = l2 + l2
    y_prev = hp
    y_cur = mm(l2, hp)
    h2 = mm(y_prev, w2_ref[0]) + mm(y_cur, w2_ref[1])
    for k in range(2, k_cheb):
        y_next = mm(l2x2, y_cur) - y_prev
        h2 = h2 + mm(y_next, w2_ref[k])
        y_prev, y_cur = y_cur, y_next
    h2 = h2 + b2_ref[...]                        # (B*N2, G2), no ReLU

    # ---- fc1 over per-sample node-major flatten, no in-kernel reshape ----
    # p[m, n*C+c] = sum_g h2[m, g] * wfc[n, g, c]; keep only n == (m mod N2),
    # fold the C-blocks per class, then sum each sample's N2 rows.
    p = mm(h2, wcat_ref[...])                    # (B*N2, N2*C)
    q = mm(p * mask_ref[...], selc_ref[...])     # (B*N2, C)
    logits = mm(selr_ref[...], q) + bfc_ref[...]  # (B, C)

    # ---- log_softmax vectorized over the batch, single store ----
    mx = jnp.max(logits, axis=-1, keepdims=True)
    sh = logits - mx
    lse = jnp.log(jnp.sum(jnp.exp(sh), axis=-1, keepdims=True))
    out_ref[...] = sh - lse


# --------------------- One-time static operand construction -----------------
def build_operands(l1, l2, bmap, w1, b1, w2, b2, wfc, bfc, batch):
    """Precompute everything that depends only on weights/graphs/static dims.

    Called ONCE per model (not per forward call), per the review: the kron /
    mask / selector construction must not sit inside the per-call jitted path.
    """
    f32 = jnp.float32
    n1 = l1.shape[0]
    n2 = l2.shape[0]
    g2, c = wfc.shape[1], wfc.shape[2]
    eye_b = jnp.eye(batch, dtype=f32)

    l1_bd = jnp.kron(eye_b, l1.astype(f32))            # (B*N1, B*N1)
    l2_bd = jnp.kron(eye_b, l2.astype(f32))            # (B*N2, B*N2)
    bmap_bd = jnp.kron(eye_b, bmap.astype(f32))        # (B*N2, B*N1)

    # fc1 helpers: wcat[g, n*C+c] = wfc[n, g, c]
    wcat = jnp.transpose(wfc, (1, 0, 2)).reshape(g2, n2 * c)
    # mask[b*N2+n, n'*C+c] = (n == n')
    mask = jnp.tile(jnp.repeat(jnp.eye(n2, dtype=f32), c, axis=1), (batch, 1))
    # selc[n*C+c, c'] = (c == c')
    selc = jnp.tile(jnp.eye(c, dtype=f32), (n2, 1))
    # selr[b, m] = (m // N2 == b)
    selr = jnp.kron(eye_b, jnp.ones((1, n2), f32))

    return (l1_bd, l2_bd, bmap_bd,
            w1.astype(f32), b1.astype(f32),
            w2.astype(f32), b2.astype(f32),
            wcat, mask, selc, selr, bfc.astype(f32))


# ------------------------------ Forward wrapper ------------------------------
@jax.jit
def tgcn_forward(x, ops):
    batch, n1, _t = x.shape
    c = ops[-1].shape[-1]
    xs = x.reshape(batch * n1, _t)                      # batch stacked on sublanes

    # ~170 KiB of dense operands total: everything fits VMEM, single invocation,
    # no grid / pipelining needed (also avoids pointless double-buffering).
    return pl.pallas_call(
        _tgcn_kernel,
        out_shape=jax.ShapeDtypeStruct((batch, c), jnp.float32),
    )(xs, *ops)


# ------------------------- Plain-JAX reference ------------------------------
def tgcn_reference(x, l1, l2, bmap, w1, b1, w2, b2, wfc, bfc):
    def cheb_stack(lap, x0, k_order):
        zs = [x0, lap @ x0]
        for _ in range(2, k_order):
            zs.append(2.0 * (lap @ zs[-1]) - zs[-2])
        return zs

    k_cheb = w1.shape[0]
    rows = []
    for b_i in range(x.shape[0]):
        zs = cheb_stack(l1, x[b_i], k_cheb)
        h1 = jax.nn.relu(sum(z @ w1[k] for k, z in enumerate(zs)) + b1)
        hp = bmap @ h1
        ys = cheb_stack(l2, hp, k_cheb)
        h2 = sum(y @ w2[k] for k, y in enumerate(ys)) + b2
        logits = h2.reshape(1, -1) @ wfc.reshape(-1, wfc.shape[-1]) + bfc
        rows.append(jax.nn.log_softmax(logits, axis=-1))
    return jnp.concatenate(rows, axis=0)


# ------------------------------ Setup / glue ---------------------------------
def scaled_laplacian(key, n):
    """Random symmetric graph -> normalized Laplacian rescaled to ~[-1, 1]."""
    a = jax.random.uniform(key, (n, n), jnp.float32)
    a = 0.5 * (a + a.T) * (1.0 - jnp.eye(n, dtype=jnp.float32))
    deg = jnp.sum(a, axis=1)
    d_inv_sqrt = 1.0 / jnp.sqrt(jnp.maximum(deg, 1e-6))
    lap = jnp.eye(n, dtype=jnp.float32) - d_inv_sqrt[:, None] * a * d_inv_sqrt[None, :]
    return lap - jnp.eye(n, dtype=jnp.float32)   # 2L/lambda_max - I, lambda_max ~ 2


if __name__ == "__main__":
    key = jax.random.PRNGKey(0)
    kx, kg1, kg2, kw1, kb1, kw2, kb2, kwf, kbf = jax.random.split(key, 9)

    # Inputs (synthetic, deterministic)
    x = jax.random.normal(kx, (BATCH, N1, T), jnp.float32)
    l1 = scaled_laplacian(kg1, N1)                 # graph_list[0][0]
    l2 = scaled_laplacian(kg2, N2)                 # graph_list[1][0]
    # mapping_list[1][0]: average-pool pairs of fine nodes onto coarse nodes
    bmap = jnp.kron(jnp.eye(N2, dtype=jnp.float32),
                    jnp.full((1, N1 // N2), float(N2) / float(N1), jnp.float32))

    # Parameters. ChebTimeConv weight is (K, H, Fin, Fout); singleton dims squeezed:
    #   conv1 weight -> (K, H1, G1) since Fin=1 ; conv2 weight -> (K, F2, G2) since H=1.
    w1 = jax.random.normal(kw1, (K_CHEB, H1, G1), jnp.float32) * (K_CHEB * H1 * F1) ** -0.5
    b1 = 0.1 * jax.random.normal(kb1, (1, G1), jnp.float32)
    w2 = jax.random.normal(kw2, (K_CHEB, F2, G2), jnp.float32) * (K_CHEB * H2 * F2) ** -0.5
    b2 = 0.1 * jax.random.normal(kb2, (1, G2), jnp.float32)
    # fc1: Linear(N2 * G2, 6); weight stored as (N2, G2, C) == per-node slices of
    # the (N2*G2, C) matrix so row index m*G2+g matches the flatten order.
    wfc = jax.random.normal(kwf, (N2, G2, NUM_CLASSES), jnp.float32) * (N2 * G2) ** -0.5
    bfc = 0.1 * jax.random.normal(kbf, (1, NUM_CLASSES), jnp.float32)

    # One-time static operand construction (graphs, weights, fc selectors).
    ops = build_operands(l1, l2, bmap, w1, b1, w2, b2, wfc, bfc, BATCH)

    out = tgcn_forward(x, ops)
    out = jax.block_until_ready(out)
    assert out.shape == (BATCH, NUM_CLASSES)

    ref = tgcn_reference(x, l1, l2, bmap, w1, b1, w2, b2, wfc, bfc)
    max_err = float(jnp.max(jnp.abs(out - ref)))
    if not bool(jnp.allclose(out, ref, atol=1e-3, rtol=1e-3)):
        raise AssertionError(f"Pallas kernel mismatch vs JAX reference (max_err={max_err})")

    print("KERNEL_OK")
</pallas_src>

<mosaic_0001>
module attributes {stable_mosaic.version = 11 : i64} {
  func.func @_tgcn_kernel(%arg0: memref<64x15xf32, #tpu.memory_space<vmem>>, %arg1: memref<64x64xf32, #tpu.memory_space<vmem>>, %arg2: memref<32x32xf32, #tpu.memory_space<vmem>>, %arg3: memref<32x64xf32, #tpu.memory_space<vmem>>, %arg4: memref<12x15x64xf32, #tpu.memory_space<vmem>>, %arg5: memref<1x64xf32, #tpu.memory_space<vmem>>, %arg6: memref<12x64x32xf32, #tpu.memory_space<vmem>>, %arg7: memref<1x32xf32, #tpu.memory_space<vmem>>, %arg8: memref<32x96xf32, #tpu.memory_space<vmem>>, %arg9: memref<32x96xf32, #tpu.memory_space<vmem>>, %arg10: memref<96x6xf32, #tpu.memory_space<vmem>>, %arg11: memref<2x32xf32, #tpu.memory_space<vmem>>, %arg12: memref<1x6xf32, #tpu.memory_space<vmem>>, %arg13: memref<2x6xf32, #tpu.memory_space<vmem>>) attributes {dimension_semantics = [], scalar_prefetch = 0 : i64, scratch_operands = 0 : i64, tpu.core_type = #tpu.core_type<tc>} {
    %c0 = arith.constant 0 : index
    %c0_0 = arith.constant 0 : index
    %0 = vector.load %arg0[%c0, %c0_0] : memref<64x15xf32, #tpu.memory_space<vmem>>, vector<64x15xf32>
    %c0_1 = arith.constant 0 : index
    %c0_2 = arith.constant 0 : index
    %1 = vector.load %arg1[%c0_1, %c0_2] : memref<64x64xf32, #tpu.memory_space<vmem>>, vector<64x64xf32>
    %2 = arith.addf %1, %1 : vector<64x64xf32>
    %cst = arith.constant dense<0.000000e+00> : vector<64x15xf32>
    %3 = tpu.matmul %1, %0, %cst {dimension_numbers = #tpu.dot_dimension_numbers<[1], [0], [0], [1], [0, 0, 1, 1], [], []>} : vector<64x64xf32>, vector<64x15xf32>, vector<64x15xf32> -> vector<64x15xf32>
    %c0_3 = arith.constant 0 : index
    %c0_4 = arith.constant 0 : index
    %c0_5 = arith.constant 0 : index
    %4 = vector.load %arg4[%c0_3, %c0_4, %c0_5] : memref<12x15x64xf32, #tpu.memory_space<vmem>>, vector<1x15x64xf32>
    %5 = vector.shape_cast %4 : vector<1x15x64xf32> to vector<15x64xf32>
    %cst_6 = arith.constant dense<0.000000e+00> : vector<64x64xf32>
    %6 = tpu.matmul %0, %5, %cst_6 {dimension_numbers = #tpu.dot_dimension_numbers<[1], [0], [0], [1], [0, 0, 1, 1], [], []>} : vector<64x15xf32>, vector<15x64xf32>, vector<64x64xf32> -> vector<64x64xf32>
    %c1 = arith.constant 1 : index
    %c0_7 = arith.constant 0 : index
    %c0_8 = arith.constant 0 : index
    %7 = vector.load %arg4[%c1, %c0_7, %c0_8] : memref<12x15x64xf32, #tpu.memory_space<vmem>>, vector<1x15x64xf32>
    %8 = vector.shape_cast %7 : vector<1x15x64xf32> to vector<15x64xf32>
    %cst_9 = arith.constant dense<0.000000e+00> : vector<64x64xf32>
    %9 = tpu.matmul %3, %8, %cst_9 {dimension_numbers = #tpu.dot_dimension_numbers<[1], [0], [0], [1], [0, 0, 1, 1], [], []>} : vector<64x15xf32>, vector<15x64xf32>, vector<64x64xf32> -> vector<64x64xf32>
    %10 = arith.addf %6, %9 : vector<64x64xf32>
    %cst_10 = arith.constant dense<0.000000e+00> : vector<64x15xf32>
    %11 = tpu.matmul %2, %3, %cst_10 {dimension_numbers = #tpu.dot_dimension_numbers<[1], [0], [0], [1], [0, 0, 1, 1], [], []>} : vector<64x64xf32>, vector<64x15xf32>, vector<64x15xf32> -> vector<64x15xf32>
    %12 = arith.subf %11, %0 : vector<64x15xf32>
    %c2 = arith.constant 2 : index
    %c0_11 = arith.constant 0 : index
    %c0_12 = arith.constant 0 : index
    %13 = vector.load %arg4[%c2, %c0_11, %c0_12] : memref<12x15x64xf32, #tpu.memory_space<vmem>>, vector<1x15x64xf32>
    %14 = vector.shape_cast %13 : vector<1x15x64xf32> to vector<15x64xf32>
    %cst_13 = arith.constant dense<0.000000e+00> : vector<64x64xf32>
    %15 = tpu.matmul %12, %14, %cst_13 {dimension_numbers = #tpu.dot_dimension_numbers<[1], [0], [0], [1], [0, 0, 1, 1], [], []>} : vector<64x15xf32>, vector<15x64xf32>, vector<64x64xf32> -> vector<64x64xf32>
    %16 = arith.addf %10, %15 : vector<64x64xf32>
    %cst_14 = arith.constant dense<0.000000e+00> : vector<64x15xf32>
    %17 = tpu.matmul %2, %12, %cst_14 {dimension_numbers = #tpu.dot_dimension_numbers<[1], [0], [0], [1], [0, 0, 1, 1], [], []>} : vector<64x64xf32>, vector<64x15xf32>, vector<64x15xf32> -> vector<64x15xf32>
    %18 = arith.subf %17, %3 : vector<64x15xf32>
    %c3 = arith.constant 3 : index
    %c0_15 = arith.constant 0 : index
    %c0_16 = arith.constant 0 : index
    %19 = vector.load %arg4[%c3, %c0_15, %c0_16] : memref<12x15x64xf32, #tpu.memory_space<vmem>>, vector<1x15x64xf32>
    %20 = vector.shape_cast %19 : vector<1x15x64xf32> to vector<15x64xf32>
    %cst_17 = arith.constant dense<0.000000e+00> : vector<64x64xf32>
    %21 = tpu.matmul %18, %20, %cst_17 {dimension_numbers = #tpu.dot_dimension_numbers<[1], [0], [0], [1], [0, 0, 1, 1], [], []>} : vector<64x15xf32>, vector<15x64xf32>, vector<64x64xf32> -> vector<64x64xf32>
    %22 = arith.addf %16, %21 : vector<64x64xf32>
    %cst_18 = arith.constant dense<0.000000e+00> : vector<64x15xf32>
    %23 = tpu.matmul %2, %18, %cst_18 {dimension_numbers = #tpu.dot_dimension_numbers<[1], [0], [0], [1], [0, 0, 1, 1], [], []>} : vector<64x64xf32>, vector<64x15xf32>, vector<64x15xf32> -> vector<64x15xf32>
    %24 = arith.subf %23, %12 : vector<64x15xf32>
    %c4 = arith.constant 4 : index
    %c0_19 = arith.constant 0 : index
    %c0_20 = arith.constant 0 : index
    %25 = vector.load %arg4[%c4, %c0_19, %c0_20] : memref<12x15x64xf32, #tpu.memory_space<vmem>>, vector<1x15x64xf32>
    %26 = vector.shape_cast %25 : vector<1x15x64xf32> to vector<15x64xf32>
    %cst_21 = arith.constant dense<0.000000e+00> : vector<64x64xf32>
    %27 = tpu.matmul %24, %26, %cst_21 {dimension_numbers = #tpu.dot_dimension_numbers<[1], [0], [0], [1], [0, 0, 1, 1], [], []>} : vector<64x15xf32>, vector<15x64xf32>, vector<64x64xf32> -> vector<64x64xf32>
    %28 = arith.addf %22, %27 : vector<64x64xf32>
    %cst_22 = arith.constant dense<0.000000e+00> : vector<64x15xf32>
    %29 = tpu.matmul %2, %24, %cst_22 {dimension_numbers = #tpu.dot_dimension_numbers<[1], [0], [0], [1], [0, 0, 1, 1], [], []>} : vector<64x64xf32>, vector<64x15xf32>, vector<64x15xf32> -> vector<64x15xf32>
    %30 = arith.subf %29, %18 : vector<64x15xf32>
    %c5 = arith.constant 5 : index
    %c0_23 = arith.constant 0 : index
    %c0_24 = arith.constant 0 : index
    %31 = vector.load %arg4[%c5, %c0_23, %c0_24] : memref<12x15x64xf32, #tpu.memory_space<vmem>>, vector<1x15x64xf32>
    %32 = vector.shape_cast %31 : vector<1x15x64xf32> to vector<15x64xf32>
    %cst_25 = arith.constant dense<0.000000e+00> : vector<64x64xf32>
    %33 = tpu.matmul %30, %32, %cst_25 {dimension_numbers = #tpu.dot_dimension_numbers<[1], [0], [0], [1], [0, 0, 1, 1], [], []>} : vector<64x15xf32>, vector<15x64xf32>, vector<64x64xf32> -> vector<64x64xf32>
    %34 = arith.addf %28, %33 : vector<64x64xf32>
    %cst_26 = arith.constant dense<0.000000e+00> : vector<64x15xf32>
    %35 = tpu.matmul %2, %30, %cst_26 {dimension_numbers = #tpu.dot_dimension_numbers<[1], [0], [0], [1], [0, 0, 1, 1], [], []>} : vector<64x64xf32>, vector<64x15xf32>, vector<64x15xf32> -> vector<64x15xf32>
    %36 = arith.subf %35, %24 : vector<64x15xf32>
    %c6 = arith.constant 6 : index
    %c0_27 = arith.constant 0 : index
    %c0_28 = arith.constant 0 : index
    %37 = vector.load %arg4[%c6, %c0_27, %c0_28] : memref<12x15x64xf32, #tpu.memory_space<vmem>>, vector<1x15x64xf32>
    %38 = vector.shape_cast %37 : vector<1x15x64xf32> to vector<15x64xf32>
    %cst_29 = arith.constant dense<0.000000e+00> : vector<64x64xf32>
    %39 = tpu.matmul %36, %38, %cst_29 {dimension_numbers = #tpu.dot_dimension_numbers<[1], [0], [0], [1], [0, 0, 1, 1], [], []>} : vector<64x15xf32>, vector<15x64xf32>, vector<64x64xf32> -> vector<64x64xf32>
    %40 = arith.addf %34, %39 : vector<64x64xf32>
    %cst_30 = arith.constant dense<0.000000e+00> : vector<64x15xf32>
    %41 = tpu.matmul %2, %36, %cst_30 {dimension_numbers = #tpu.dot_dimension_numbers<[1], [0], [0], [1], [0, 0, 1, 1], [], []>} : vector<64x64xf32>, vector<64x15xf32>, vector<64x15xf32> -> vector<64x15xf32>
    %42 = arith.subf %41, %30 : vector<64x15xf32>
    %c7 = arith.constant 7 : index
    %c0_31 = arith.constant 0 : index
    %c0_32 = arith.constant 0 : index
    %43 = vector.load %arg4[%c7, %c0_31, %c0_32] : memref<12x15x64xf32, #tpu.memory_space<vmem>>, vector<1x15x64xf32>
    %44 = vector.shape_cast %43 : vector<1x15x64xf32> to vector<15x64xf32>
    %cst_33 = arith.constant dense<0.000000e+00> : vector<64x64xf32>
    %45 = tpu.matmul %42, %44, %cst_33 {dimension_numbers = #tpu.dot_dimension_numbers<[1], [0], [0], [1], [0, 0, 1, 1], [], []>} : vector<64x15xf32>, vector<15x64xf32>, vector<64x64xf32> -> vector<64x64xf32>
    %46 = arith.addf %40, %45 : vector<64x64xf32>
    %cst_34 = arith.constant dense<0.000000e+00> : vector<64x15xf32>
    %47 = tpu.matmul %2, %42, %cst_34 {dimension_numbers = #tpu.dot_dimension_numbers<[1], [0], [0], [1], [0, 0, 1, 1], [], []>} : vector<64x64xf32>, vector<64x15xf32>, vector<64x15xf32> -> vector<64x15xf32>
    %48 = arith.subf %47, %36 : vector<64x15xf32>
    %c8 = arith.constant 8 : index
    %c0_35 = arith.constant 0 : index
    %c0_36 = arith.constant 0 : index
    %49 = vector.load %arg4[%c8, %c0_35, %c0_36] : memref<12x15x64xf32, #tpu.memory_space<vmem>>, vector<1x15x64xf32>
    %50 = vector.shape_cast %49 : vector<1x15x64xf32> to vector<15x64xf32>
    %cst_37 = arith.constant dense<0.000000e+00> : vector<64x64xf32>
    %51 = tpu.matmul %48, %50, %cst_37 {dimension_numbers = #tpu.dot_dimension_numbers<[1], [0], [0], [1], [0, 0, 1, 1], [], []>} : vector<64x15xf32>, vector<15x64xf32>, vector<64x64xf32> -> vector<64x64xf32>
    %52 = arith.addf %46, %51 : vector<64x64xf32>
    %cst_38 = arith.constant dense<0.000000e+00> : vector<64x15xf32>
    %53 = tpu.matmul %2, %48, %cst_38 {dimension_numbers = #tpu.dot_dimension_numbers<[1], [0], [0], [1], [0, 0, 1, 1], [], []>} : vector<64x64xf32>, vector<64x15xf32>, vector<64x15xf32> -> vector<64x15xf32>
    %54 = arith.subf %53, %42 : vector<64x15xf32>
    %c9 = arith.constant 9 : index
    %c0_39 = arith.constant 0 : index
    %c0_40 = arith.constant 0 : index
    %55 = vector.load %arg4[%c9, %c0_39, %c0_40] : memref<12x15x64xf32, #tpu.memory_space<vmem>>, vector<1x15x64xf32>
    %56 = vector.shape_cast %55 : vector<1x15x64xf32> to vector<15x64xf32>
    %cst_41 = arith.constant dense<0.000000e+00> : vector<64x64xf32>
    %57 = tpu.matmul %54, %56, %cst_41 {dimension_numbers = #tpu.dot_dimension_numbers<[1], [0], [0], [1], [0, 0, 1, 1], [], []>} : vector<64x15xf32>, vector<15x64xf32>, vector<64x64xf32> -> vector<64x64xf32>
    %58 = arith.addf %52, %57 : vector<64x64xf32>
    %cst_42 = arith.constant dense<0.000000e+00> : vector<64x15xf32>
    %59 = tpu.matmul %2, %54, %cst_42 {dimension_numbers = #tpu.dot_dimension_numbers<[1], [0], [0], [1], [0, 0, 1, 1], [], []>} : vector<64x64xf32>, vector<64x15xf32>, vector<64x15xf32> -> vector<64x15xf32>
    %60 = arith.subf %59, %48 : vector<64x15xf32>
    %c10 = arith.constant 10 : index
    %c0_43 = arith.constant 0 : index
    %c0_44 = arith.constant 0 : index
    %61 = vector.load %arg4[%c10, %c0_43, %c0_44] : memref<12x15x64xf32, #tpu.memory_space<vmem>>, vector<1x15x64xf32>
    %62 = vector.shape_cast %61 : vector<1x15x64xf32> to vector<15x64xf32>
    %cst_45 = arith.constant dense<0.000000e+00> : vector<64x64xf32>
    %63 = tpu.matmul %60, %62, %cst_45 {dimension_numbers = #tpu.dot_dimension_numbers<[1], [0], [0], [1], [0, 0, 1, 1], [], []>} : vector<64x15xf32>, vector<15x64xf32>, vector<64x64xf32> -> vector<64x64xf32>
    %64 = arith.addf %58, %63 : vector<64x64xf32>
    %cst_46 = arith.constant dense<0.000000e+00> : vector<64x15xf32>
    %65 = tpu.matmul %2, %60, %cst_46 {dimension_numbers = #tpu.dot_dimension_numbers<[1], [0], [0], [1], [0, 0, 1, 1], [], []>} : vector<64x64xf32>, vector<64x15xf32>, vector<64x15xf32> -> vector<64x15xf32>
    %66 = arith.subf %65, %54 : vector<64x15xf32>
    %c11 = arith.constant 11 : index
    %c0_47 = arith.constant 0 : index
    %c0_48 = arith.constant 0 : index
    %67 = vector.load %arg4[%c11, %c0_47, %c0_48] : memref<12x15x64xf32, #tpu.memory_space<vmem>>, vector<1x15x64xf32>
    %68 = vector.shape_cast %67 : vector<1x15x64xf32> to vector<15x64xf32>
    %cst_49 = arith.constant dense<0.000000e+00> : vector<64x64xf32>
    %69 = tpu.matmul %66, %68, %cst_49 {dimension_numbers = #tpu.dot_dimension_numbers<[1], [0], [0], [1], [0, 0, 1, 1], [], []>} : vector<64x15xf32>, vector<15x64xf32>, vector<64x64xf32> -> vector<64x64xf32>
    %70 = arith.addf %64, %69 : vector<64x64xf32>
    %c0_50 = arith.constant 0 : index
    %c0_51 = arith.constant 0 : index
    %71 = vector.load %arg5[%c0_50, %c0_51] : memref<1x64xf32, #tpu.memory_space<vmem>>, vector<1x64xf32>
    %72 = vector.broadcast %71 : vector<1x64xf32> to vector<64x64xf32>
    %73 = arith.addf %70, %72 : vector<64x64xf32>
    %cst_52 = arith.constant 0.000000e+00 : f32
    %74 = vector.broadcast %cst_52 : f32 to vector<64x64xf32>
    %75 = arith.maximumf %73, %74 : vector<64x64xf32>
    %c0_53 = arith.constant 0 : index
    %c0_54 = arith.constant 0 : index
    %76 = vector.load %arg3[%c0_53, %c0_54] : memref<32x64xf32, #tpu.memory_space<vmem>>, vector<32x64xf32>
    %cst_55 = arith.constant dense<0.000000e+00> : vector<32x64xf32>
    %77 = tpu.matmul %76, %75, %cst_55 {dimension_numbers = #tpu.dot_dimension_numbers<[1], [0], [0], [1], [0, 0, 1, 1], [], []>} : vector<32x64xf32>, vector<64x64xf32>, vector<32x64xf32> -> vector<32x64xf32>
    %c0_56 = arith.constant 0 : index
    %c0_57 = arith.constant 0 : index
    %78 = vector.load %arg2[%c0_56, %c0_57] : memref<32x32xf32, #tpu.memory_space<vmem>>, vector<32x32xf32>
    %79 = arith.addf %78, %78 : vector<32x32xf32>
    %cst_58 = arith.constant dense<0.000000e+00> : vector<32x64xf32>
    %80 = tpu.matmul %78, %77, %cst_58 {dimension_numbers = #tpu.dot_dimension_numbers<[1], [0], [0], [1], [0, 0, 1, 1], [], []>} : vector<32x32xf32>, vector<32x64xf32>, vector<32x64xf32> -> vector<32x64xf32>
    %c0_59 = arith.constant 0 : index
    %c0_60 = arith.constant 0 : index
    %c0_61 = arith.constant 0 : index
    %81 = vector.load %arg6[%c0_59, %c0_60, %c0_61] : memref<12x64x32xf32, #tpu.memory_space<vmem>>, vector<1x64x32xf32>
    %82 = vector.shape_cast %81 : vector<1x64x32xf32> to vector<64x32xf32>
    %cst_62 = arith.constant dense<0.000000e+00> : vector<32x32xf32>
    %83 = tpu.matmul %77, %82, %cst_62 {dimension_numbers = #tpu.dot_dimension_numbers<[1], [0], [0], [1], [0, 0, 1, 1], [], []>} : vector<32x64xf32>, vector<64x32xf32>, vector<32x32xf32> -> vector<32x32xf32>
    %c1_63 = arith.constant 1 : index
    %c0_64 = arith.constant 0 : index
    %c0_65 = arith.constant 0 : index
    %84 = vector.load %arg6[%c1_63, %c0_64, %c0_65] : memref<12x64x32xf32, #tpu.memory_space<vmem>>, vector<1x64x32xf32>
    %85 = vector.shape_cast %84 : vector<1x64x32xf32> to vector<64x32xf32>
    %cst_66 = arith.constant dense<0.000000e+00> : vector<32x32xf32>
    %86 = tpu.matmul %80, %85, %cst_66 {dimension_numbers = #tpu.dot_dimension_numbers<[1], [0], [0], [1], [0, 0, 1, 1], [], []>} : vector<32x64xf32>, vector<64x32xf32>, vector<32x32xf32> -> vector<32x32xf32>
    %87 = arith.addf %83, %86 : vector<32x32xf32>
    %cst_67 = arith.constant dense<0.000000e+00> : vector<32x64xf32>
    %88 = tpu.matmul %79, %80, %cst_67 {dimension_numbers = #tpu.dot_dimension_numbers<[1], [0], [0], [1], [0, 0, 1, 1], [], []>} : vector<32x32xf32>, vector<32x64xf32>, vector<32x64xf32> -> vector<32x64xf32>
    %89 = arith.subf %88, %77 : vector<32x64xf32>
    %c2_68 = arith.constant 2 : index
    %c0_69 = arith.constant 0 : index
    %c0_70 = arith.constant 0 : index
    %90 = vector.load %arg6[%c2_68, %c0_69, %c0_70] : memref<12x64x32xf32, #tpu.memory_space<vmem>>, vector<1x64x32xf32>
    %91 = vector.shape_cast %90 : vector<1x64x32xf32> to vector<64x32xf32>
    %cst_71 = arith.constant dense<0.000000e+00> : vector<32x32xf32>
    %92 = tpu.matmul %89, %91, %cst_71 {dimension_numbers = #tpu.dot_dimension_numbers<[1], [0], [0], [1], [0, 0, 1, 1], [], []>} : vector<32x64xf32>, vector<64x32xf32>, vector<32x32xf32> -> vector<32x32xf32>
    %93 = arith.addf %87, %92 : vector<32x32xf32>
    %cst_72 = arith.constant dense<0.000000e+00> : vector<32x64xf32>
    %94 = tpu.matmul %79, %89, %cst_72 {dimension_numbers = #tpu.dot_dimension_numbers<[1], [0], [0], [1], [0, 0, 1, 1], [], []>} : vector<32x32xf32>, vector<32x64xf32>, vector<32x64xf32> -> vector<32x64xf32>
    %95 = arith.subf %94, %80 : vector<32x64xf32>
    %c3_73 = arith.constant 3 : index
    %c0_74 = arith.constant 0 : index
    %c0_75 = arith.constant 0 : index
    %96 = vector.load %arg6[%c3_73, %c0_74, %c0_75] : memref<12x64x32xf32, #tpu.memory_space<vmem>>, vector<1x64x32xf32>
    %97 = vector.shape_cast %96 : vector<1x64x32xf32> to vector<64x32xf32>
    %cst_76 = arith.constant dense<0.000000e+00> : vector<32x32xf32>
    %98 = tpu.matmul %95, %97, %cst_76 {dimension_numbers = #tpu.dot_dimension_numbers<[1], [0], [0], [1], [0, 0, 1, 1], [], []>} : vector<32x64xf32>, vector<64x32xf32>, vector<32x32xf32> -> vector<32x32xf32>
    %99 = arith.addf %93, %98 : vector<32x32xf32>
    %cst_77 = arith.constant dense<0.000000e+00> : vector<32x64xf32>
    %100 = tpu.matmul %79, %95, %cst_77 {dimension_numbers = #tpu.dot_dimension_numbers<[1], [0], [0], [1], [0, 0, 1, 1], [], []>} : vector<32x32xf32>, vector<32x64xf32>, vector<32x64xf32> -> vector<32x64xf32>
    %101 = arith.subf %100, %89 : vector<32x64xf32>
    %c4_78 = arith.constant 4 : index
    %c0_79 = arith.constant 0 : index
    %c0_80 = arith.constant 0 : index
    %102 = vector.load %arg6[%c4_78, %c0_79, %c0_80] : memref<12x64x32xf32, #tpu.memory_space<vmem>>, vector<1x64x32xf32>
    %103 = vector.shape_cast %102 : vector<1x64x32xf32> to vector<64x32xf32>
    %cst_81 = arith.constant dense<0.000000e+00> : vector<32x32xf32>
    %104 = tpu.matmul %101, %103, %cst_81 {dimension_numbers = #tpu.dot_dimension_numbers<[1], [0], [0], [1], [0, 0, 1, 1], [], []>} : vector<32x64xf32>, vector<64x32xf32>, vector<32x32xf32> -> vector<32x32xf32>
    %105 = arith.addf %99, %104 : vector<32x32xf32>
    %cst_82 = arith.constant dense<0.000000e+00> : vector<32x64xf32>
    %106 = tpu.matmul %79, %101, %cst_82 {dimension_numbers = #tpu.dot_dimension_numbers<[1], [0], [0], [1], [0, 0, 1, 1], [], []>} : vector<32x32xf32>, vector<32x64xf32>, vector<32x64xf32> -> vector<32x64xf32>
    %107 = arith.subf %106, %95 : vector<32x64xf32>
    %c5_83 = arith.constant 5 : index
    %c0_84 = arith.constant 0 : index
    %c0_85 = arith.constant 0 : index
    %108 = vector.load %arg6[%c5_83, %c0_84, %c0_85] : memref<12x64x32xf32, #tpu.memory_space<vmem>>, vector<1x64x32xf32>
    %109 = vector.shape_cast %108 : vector<1x64x32xf32> to vector<64x32xf32>
    %cst_86 = arith.constant dense<0.000000e+00> : vector<32x32xf32>
    %110 = tpu.matmul %107, %109, %cst_86 {dimension_numbers = #tpu.dot_dimension_numbers<[1], [0], [0], [1], [0, 0, 1, 1], [], []>} : vector<32x64xf32>, vector<64x32xf32>, vector<32x32xf32> -> vector<32x32xf32>
    %111 = arith.addf %105, %110 : vector<32x32xf32>
    %cst_87 = arith.constant dense<0.000000e+00> : vector<32x64xf32>
    %112 = tpu.matmul %79, %107, %cst_87 {dimension_numbers = #tpu.dot_dimension_numbers<[1], [0], [0], [1], [0, 0, 1, 1], [], []>} : vector<32x32xf32>, vector<32x64xf32>, vector<32x64xf32> -> vector<32x64xf32>
    %113 = arith.subf %112, %101 : vector<32x64xf32>
    %c6_88 = arith.constant 6 : index
    %c0_89 = arith.constant 0 : index
    %c0_90 = arith.constant 0 : index
    %114 = vector.load %arg6[%c6_88, %c0_89, %c0_90] : memref<12x64x32xf32, #tpu.memory_space<vmem>>, vector<1x64x32xf32>
    %115 = vector.shape_cast %114 : vector<1x64x32xf32> to vector<64x32xf32>
    %cst_91 = arith.constant dense<0.000000e+00> : vector<32x32xf32>
    %116 = tpu.matmul %113, %115, %cst_91 {dimension_numbers = #tpu.dot_dimension_numbers<[1], [0], [0], [1], [0, 0, 1, 1], [], []>} : vector<32x64xf32>, vector<64x32xf32>, vector<32x32xf32> -> vector<32x32xf32>
    %117 = arith.addf %111, %116 : vector<32x32xf32>
    %cst_92 = arith.constant dense<0.000000e+00> : vector<32x64xf32>
    %118 = tpu.matmul %79, %113, %cst_92 {dimension_numbers = #tpu.dot_dimension_numbers<[1], [0], [0], [1], [0, 0, 1, 1], [], []>} : vector<32x32xf32>, vector<32x64xf32>, vector<32x64xf32> -> vector<32x64xf32>
    %119 = arith.subf %118, %107 : vector<32x64xf32>
    %c7_93 = arith.constant 7 : index
    %c0_94 = arith.constant 0 : index
    %c0_95 = arith.constant 0 : index
    %120 = vector.load %arg6[%c7_93, %c0_94, %c0_95] : memref<12x64x32xf32, #tpu.memory_space<vmem>>, vector<1x64x32xf32>
    %121 = vector.shape_cast %120 : vector<1x64x32xf32> to vector<64x32xf32>
    %cst_96 = arith.constant dense<0.000000e+00> : vector<32x32xf32>
    %122 = tpu.matmul %119, %121, %cst_96 {dimension_numbers = #tpu.dot_dimension_numbers<[1], [0], [0], [1], [0, 0, 1, 1], [], []>} : vector<32x64xf32>, vector<64x32xf32>, vector<32x32xf32> -> vector<32x32xf32>
    %123 = arith.addf %117, %122 : vector<32x32xf32>
    %cst_97 = arith.constant dense<0.000000e+00> : vector<32x64xf32>
    %124 = tpu.matmul %79, %119, %cst_97 {dimension_numbers = #tpu.dot_dimension_numbers<[1], [0], [0], [1], [0, 0, 1, 1], [], []>} : vector<32x32xf32>, vector<32x64xf32>, vector<32x64xf32> -> vector<32x64xf32>
    %125 = arith.subf %124, %113 : vector<32x64xf32>
    %c8_98 = arith.constant 8 : index
    %c0_99 = arith.constant 0 : index
    %c0_100 = arith.constant 0 : index
    %126 = vector.load %arg6[%c8_98, %c0_99, %c0_100] : memref<12x64x32xf32, #tpu.memory_space<vmem>>, vector<1x64x32xf32>
    %127 = vector.shape_cast %126 : vector<1x64x32xf32> to vector<64x32xf32>
    %cst_101 = arith.constant dense<0.000000e+00> : vector<32x32xf32>
    %128 = tpu.matmul %125, %127, %cst_101 {dimension_numbers = #tpu.dot_dimension_numbers<[1], [0], [0], [1], [0, 0, 1, 1], [], []>} : vector<32x64xf32>, vector<64x32xf32>, vector<32x32xf32> -> vector<32x32xf32>
    %129 = arith.addf %123, %128 : vector<32x32xf32>
    %cst_102 = arith.constant dense<0.000000e+00> : vector<32x64xf32>
    %130 = tpu.matmul %79, %125, %cst_102 {dimension_numbers = #tpu.dot_dimension_numbers<[1], [0], [0], [1], [0, 0, 1, 1], [], []>} : vector<32x32xf32>, vector<32x64xf32>, vector<32x64xf32> -> vector<32x64xf32>
    %131 = arith.subf %130, %119 : vector<32x64xf32>
    %c9_103 = arith.constant 9 : index
    %c0_104 = arith.constant 0 : index
    %c0_105 = arith.constant 0 : index
    %132 = vector.load %arg6[%c9_103, %c0_104, %c0_105] : memref<12x64x32xf32, #tpu.memory_space<vmem>>, vector<1x64x32xf32>
    %133 = vector.shape_cast %132 : vector<1x64x32xf32> to vector<64x32xf32>
    %cst_106 = arith.constant dense<0.000000e+00> : vector<32x32xf32>
    %134 = tpu.matmul %131, %133, %cst_106 {dimension_numbers = #tpu.dot_dimension_numbers<[1], [0], [0], [1], [0, 0, 1, 1], [], []>} : vector<32x64xf32>, vector<64x32xf32>, vector<32x32xf32> -> vector<32x32xf32>
    %135 = arith.addf %129, %134 : vector<32x32xf32>
    %cst_107 = arith.constant dense<0.000000e+00> : vector<32x64xf32>
    %136 = tpu.matmul %79, %131, %cst_107 {dimension_numbers = #tpu.dot_dimension_numbers<[1], [0], [0], [1], [0, 0, 1, 1], [], []>} : vector<32x32xf32>, vector<32x64xf32>, vector<32x64xf32> -> vector<32x64xf32>
    %137 = arith.subf %136, %125 : vector<32x64xf32>
    %c10_108 = arith.constant 10 : index
    %c0_109 = arith.constant 0 : index
    %c0_110 = arith.constant 0 : index
    %138 = vector.load %arg6[%c10_108, %c0_109, %c0_110] : memref<12x64x32xf32, #tpu.memory_space<vmem>>, vector<1x64x32xf32>
    %139 = vector.shape_cast %138 : vector<1x64x32xf32> to vector<64x32xf32>
    %cst_111 = arith.constant dense<0.000000e+00> : vector<32x32xf32>
    %140 = tpu.matmul %137, %139, %cst_111 {dimension_numbers = #tpu.dot_dimension_numbers<[1], [0], [0], [1], [0, 0, 1, 1], [], []>} : vector<32x64xf32>, vector<64x32xf32>, vector<32x32xf32> -> vector<32x32xf32>
    %141 = arith.addf %135, %140 : vector<32x32xf32>
    %cst_112 = arith.constant dense<0.000000e+00> : vector<32x64xf32>
    %142 = tpu.matmul %79, %137, %cst_112 {dimension_numbers = #tpu.dot_dimension_numbers<[1], [0], [0], [1], [0, 0, 1, 1], [], []>} : vector<32x32xf32>, vector<32x64xf32>, vector<32x64xf32> -> vector<32x64xf32>
    %143 = arith.subf %142, %131 : vector<32x64xf32>
    %c11_113 = arith.constant 11 : index
    %c0_114 = arith.constant 0 : index
    %c0_115 = arith.constant 0 : index
    %144 = vector.load %arg6[%c11_113, %c0_114, %c0_115] : memref<12x64x32xf32, #tpu.memory_space<vmem>>, vector<1x64x32xf32>
    %145 = vector.shape_cast %144 : vector<1x64x32xf32> to vector<64x32xf32>
    %cst_116 = arith.constant dense<0.000000e+00> : vector<32x32xf32>
    %146 = tpu.matmul %143, %145, %cst_116 {dimension_numbers = #tpu.dot_dimension_numbers<[1], [0], [0], [1], [0, 0, 1, 1], [], []>} : vector<32x64xf32>, vector<64x32xf32>, vector<32x32xf32> -> vector<32x32xf32>
    %147 = arith.addf %141, %146 : vector<32x32xf32>
    %c0_117 = arith.constant 0 : index
    %c0_118 = arith.constant 0 : index
    %148 = vector.load %arg7[%c0_117, %c0_118] : memref<1x32xf32, #tpu.memory_space<vmem>>, vector<1x32xf32>
    %149 = vector.broadcast %148 : vector<1x32xf32> to vector<32x32xf32>
    %150 = arith.addf %147, %149 : vector<32x32xf32>
    %c0_119 = arith.constant 0 : index
    %c0_120 = arith.constant 0 : index
    %151 = vector.load %arg8[%c0_119, %c0_120] : memref<32x96xf32, #tpu.memory_space<vmem>>, vector<32x96xf32>
    %cst_121 = arith.constant dense<0.000000e+00> : vector<32x96xf32>
    %152 = tpu.matmul %150, %151, %cst_121 {dimension_numbers = #tpu.dot_dimension_numbers<[1], [0], [0], [1], [0, 0, 1, 1], [], []>} : vector<32x32xf32>, vector<32x96xf32>, vector<32x96xf32> -> vector<32x96xf32>
    %c0_122 = arith.constant 0 : index
    %c0_123 = arith.constant 0 : index
    %153 = vector.load %arg9[%c0_122, %c0_123] : memref<32x96xf32, #tpu.memory_space<vmem>>, vector<32x96xf32>
    %154 = arith.mulf %152, %153 : vector<32x96xf32>
    %c0_124 = arith.constant 0 : index
    %c0_125 = arith.constant 0 : index
    %155 = vector.load %arg10[%c0_124, %c0_125] : memref<96x6xf32, #tpu.memory_space<vmem>>, vector<96x6xf32>
    %cst_126 = arith.constant dense<0.000000e+00> : vector<32x6xf32>
    %156 = tpu.matmul %154, %155, %cst_126 {dimension_numbers = #tpu.dot_dimension_numbers<[1], [0], [0], [1], [0, 0, 1, 1], [], []>} : vector<32x96xf32>, vector<96x6xf32>, vector<32x6xf32> -> vector<32x6xf32>
    %c0_127 = arith.constant 0 : index
    %c0_128 = arith.constant 0 : index
    %157 = vector.load %arg11[%c0_127, %c0_128] : memref<2x32xf32, #tpu.memory_space<vmem>>, vector<2x32xf32>
    %cst_129 = arith.constant dense<0.000000e+00> : vector<2x6xf32>
    %158 = tpu.matmul %157, %156, %cst_129 {dimension_numbers = #tpu.dot_dimension_numbers<[1], [0], [0], [1], [0, 0, 1, 1], [], []>} : vector<2x32xf32>, vector<32x6xf32>, vector<2x6xf32> -> vector<2x6xf32>
    %c0_130 = arith.constant 0 : index
    %c0_131 = arith.constant 0 : index
    %159 = vector.load %arg12[%c0_130, %c0_131] : memref<1x6xf32, #tpu.memory_space<vmem>>, vector<1x6xf32>
    %160 = vector.broadcast %159 : vector<1x6xf32> to vector<2x6xf32>
    %161 = arith.addf %158, %160 : vector<2x6xf32>
    %cst_132 = arith.constant dense<0xFF800000> : vector<2xf32>
    %162 = vector.multi_reduction <maximumf>, %161, %cst_132 [1] : vector<2x6xf32> to vector<2xf32>
    %163 = vector.shape_cast %162 : vector<2xf32> to vector<2x1xf32>
    %164 = vector.broadcast %163 : vector<2x1xf32> to vector<2x6xf32>
    %165 = arith.subf %161, %164 : vector<2x6xf32>
    %166 = math.exp %165 : vector<2x6xf32>
    %cst_133 = arith.constant dense<0.000000e+00> : vector<2xf32>
    %167 = vector.multi_reduction <add>, %166, %cst_133 [1] : vector<2x6xf32> to vector<2xf32>
    %168 = vector.shape_cast %167 : vector<2xf32> to vector<2x1xf32>
    %169 = math.log %168 : vector<2x1xf32>
    %170 = vector.broadcast %169 : vector<2x1xf32> to vector<2x6xf32>
    %171 = arith.subf %165, %170 : vector<2x6xf32>
    %c0_134 = arith.constant 0 : index
    %c0_135 = arith.constant 0 : index
    %172 = vector.load %arg13[%c0_134, %c0_135] : memref<2x6xf32, #tpu.memory_space<vmem>>, vector<2x6xf32>
    tpu.vector_store %arg13[%c0_134, %c0_135], %171 {strides = array<i32>} : memref<2x6xf32, #tpu.memory_space<vmem>>, vector<2x6xf32>,
    return
  }
}

</mosaic_0001>

<llo_original>
// kernel: tgcn_forward.1
$region0: #{tgcn_forward.1}
  #allocation0 [shape = 'u32[]', space=smem, size = 0x4, offset = 0x4, fixed_abs, tag = 'smem constant byte address 0x4 - core index']
  #allocation1 [shape = 'u32[144,128]{1,0:T(1,128)}', space=vmem, size = 0x12000, scoped, tag = 'internal scratch']
  %s0 = inlined_call_operand.vmem [shape: f32[64,15], index: 0, kind: input, shape index: {}]
  %s1 = inlined_call_operand.vmem [shape: f32[64,64], index: 1, kind: input, shape index: {}]
  %s2 = inlined_call_operand.vmem [shape: f32[32,32], index: 2, kind: input, shape index: {}]
  %s3 = inlined_call_operand.vmem [shape: f32[32,64], index: 3, kind: input, shape index: {}]
  %s4 = inlined_call_operand.vmem [shape: f32[12,15,64], index: 4, kind: input, shape index: {}]
  %s5 = inlined_call_operand.vmem [shape: f32[1,64], index: 5, kind: input, shape index: {}]
  %s6 = inlined_call_operand.vmem [shape: f32[12,64,32], index: 6, kind: input, shape index: {}]
  %s7 = inlined_call_operand.vmem [shape: f32[1,32], index: 7, kind: input, shape index: {}]
  %s8 = inlined_call_operand.vmem [shape: f32[32,96], index: 8, kind: input, shape index: {}]
  %s9 = inlined_call_operand.vmem [shape: f32[32,96], index: 9, kind: input, shape index: {}]
  %s10 = inlined_call_operand.vmem [shape: f32[96,6], index: 10, kind: input, shape index: {}]
  %s11 = inlined_call_operand.vmem [shape: f32[2,32], index: 11, kind: input, shape index: {}]
  %s12 = inlined_call_operand.vmem [shape: f32[1,6], index: 12, kind: input, shape index: {}]
  %s13 = inlined_call_operand.hbm [shape: f32[2,6], index: 13, kind: output, shape index: {}]
  %s14 = sld [smem:[#allocation0]]
  $region62: #{tgcn_forward.1} parent=0
    _
  %s16 = ssub.s32 1, %s14
  %s17 = scalar_select 0, %s16, %s14
  $region1: #{tgcn_forward.1} parent=0
    #allocation2 [shape = 'u8[1024]{0}', space=vmem, size = 0x400, scoped, tag = 'output window, operand 0, single buffered']
    #allocation3 [shape = 's32[1]{0}', space=sflag, size = 0x4, scoped, tag = 'scoped memory for tgcn_forward.1']
    %18 = vsyncpa [#allocation3], 0
    // Predicated region
    $region2: #{tgcn_forward.1} parent=1 // pred_check
      _
    $region3: #{tgcn_forward.1} parent=1 // pred_check_branch
      %20 = sbr.rel (0) target = $region5
    $region4: #{tgcn_forward.1} parent=1 // pred_region
      _
    $region5: #{tgcn_forward.1} parent=1 // pred_fallthru
      _
    // Predicated region
    $region6: #{tgcn_forward.1} parent=1 // pred_check
      _
    $region7: #{tgcn_forward.1} parent=1 // pred_check_branch
      %22 = sbr.rel (0) target = $region9
    $region8: #{tgcn_forward.1} parent=1 // pred_region
      _
    $region9: #{tgcn_forward.1} parent=1 // pred_fallthru
      _
    // Predicated region
    $region10: #{tgcn_forward.1} parent=1 // pred_check
      _
    $region11: #{tgcn_forward.1} parent=1 // pred_check_branch
      %24 = sbr.rel (0) target = $region13
    $region12: #{tgcn_forward.1} parent=1 // pred_region
      _
    $region13: #{tgcn_forward.1} parent=1 // pred_fallthru
      _
    // Predicated region
    $region14: #{tgcn_forward.1} parent=1 // pred_check
      _
    $region15: #{tgcn_forward.1} parent=1 // pred_check_branch
      %26 = sbr.rel (0) target = $region17
    $region16: #{tgcn_forward.1} parent=1 // pred_region
      _
    $region17: #{tgcn_forward.1} parent=1 // pred_fallthru
      _
    // Predicated region
    $region18: #{tgcn_forward.1} parent=1 // pred_check
      _
    $region19: #{tgcn_forward.1} parent=1 // pred_check_branch
      %28 = sbr.rel (0) target = $region21
    $region20: #{tgcn_forward.1} parent=1 // pred_region
      _
    $region21: #{tgcn_forward.1} parent=1 // pred_fallthru
      _
    // Predicated region
    $region22: #{tgcn_forward.1} parent=1 // pred_check
      _
    $region23: #{tgcn_forward.1} parent=1 // pred_check_branch
      %30 = sbr.rel (0) target = $region25
    $region24: #{tgcn_forward.1} parent=1 // pred_region
      _
    $region25: #{tgcn_forward.1} parent=1 // pred_fallthru
      _
    // Predicated region
    $region26: #{tgcn_forward.1} parent=1 // pred_check
      _
    $region27: #{tgcn_forward.1} parent=1 // pred_check_branch
      %32 = sbr.rel (0) target = $region29
    $region28: #{tgcn_forward.1} parent=1 // pred_region
      _
    $region29: #{tgcn_forward.1} parent=1 // pred_fallthru
      _
    // Predicated region
    $region30: #{tgcn_forward.1} parent=1 // pred_check
      _
    $region31: #{tgcn_forward.1} parent=1 // pred_check_branch
      %34 = sbr.rel (0) target = $region33
    $region32: #{tgcn_forward.1} parent=1 // pred_region
      _
    $region33: #{tgcn_forward.1} parent=1 // pred_fallthru
      _
    // Predicated region
    $region34: #{tgcn_forward.1} parent=1 // pred_check
      _
    $region35: #{tgcn_forward.1} parent=1 // pred_check_branch
      %36 = sbr.rel (0) target = $region37
    $region36: #{tgcn_forward.1} parent=1 // pred_region
      _
    $region37: #{tgcn_forward.1} parent=1 // pred_fallthru
      _
    // Predicated region
    $region38: #{tgcn_forward.1} parent=1 // pred_check
      _
    $region39: #{tgcn_forward.1} parent=1 // pred_check_branch
      %38 = sbr.rel (0) target = $region41
    $region40: #{tgcn_forward.1} parent=1 // pred_region
      _
    $region41: #{tgcn_forward.1} parent=1 // pred_fallthru
      _
    // Predicated region
    $region42: #{tgcn_forward.1} parent=1 // pred_check
      _
    $region43: #{tgcn_forward.1} parent=1 // pred_check_branch
      %40 = sbr.rel (0) target = $region45
    $region44: #{tgcn_forward.1} parent=1 // pred_region
      _
    $region45: #{tgcn_forward.1} parent=1 // pred_fallthru
      _
    // Predicated region
    $region46: #{tgcn_forward.1} parent=1 // pred_check
      _
    $region47: #{tgcn_forward.1} parent=1 // pred_check_branch
      %42 = sbr.rel (0) target = $region49
    $region48: #{tgcn_forward.1} parent=1 // pred_region
      _
    $region49: #{tgcn_forward.1} parent=1 // pred_fallthru
      _
    // Predicated region
    $region50: #{tgcn_forward.1} parent=1 // pred_check
      _
    $region51: #{tgcn_forward.1} parent=1 // pred_check_branch
      %44 = sbr.rel (0) target = $region53
    $region52: #{tgcn_forward.1} parent=1 // pred_region
      _
    $region53: #{tgcn_forward.1} parent=1 // pred_fallthru
      _
    %v45 = vld [vmem:[%s0] sm:$0xff]
    %v46 = vld [vmem:[%s0 + $0x8] sm:$0xff]
    %v47 = vld [vmem:[%s0 + $0x10] sm:$0xff]
    %v48 = vld [vmem:[%s0 + $0x18] sm:$0xff]
    %v49 = vld [vmem:[%s0 + $0x20] sm:$0xff]
    %v50 = vld [vmem:[%s0 + $0x28] sm:$0xff]
    %v51 = vld [vmem:[%s0 + $0x30] sm:$0xff]
    %v52 = vld [vmem:[%s0 + $0x38] sm:$0xff]
    %v53 = vld [vmem:[%s1] sm:$0xff]
    %v54 = vld [vmem:[%s1 + $0x8] sm:$0xff]
    %v55 = vld [vmem:[%s1 + $0x10] sm:$0xff]
    %v56 = vld [vmem:[%s1 + $0x18] sm:$0xff]
    %v57 = vld [vmem:[%s1 + $0x20] sm:$0xff]
    %v58 = vld [vmem:[%s1 + $0x28] sm:$0xff]
    %v59 = vld [vmem:[%s1 + $0x30] sm:$0xff]
    %v60 = vld [vmem:[%s1 + $0x38] sm:$0xff]
    %v61 = vadd.f32 %v53, %v53
    %v62 = vadd.f32 %v54, %v54
    %v63 = vadd.f32 %v55, %v55
    %v64 = vadd.f32 %v56, %v56
    %v65 = vadd.f32 %v57, %v57
    %v66 = vadd.f32 %v58, %v58
    %v67 = vadd.f32 %v59, %v59
    %v68 = vadd.f32 %v60, %v60
    %vm69 = vcmask 523264
    %v71 = vsel %vm69, %v53, 0
    %v74 = vsel %vm69, %v54, 0
    %v77 = vsel %vm69, %v55, 0
    %v80 = vsel %vm69, %v56, 0
    %v83 = vsel %vm69, %v57, 0
    %v86 = vsel %vm69, %v58, 0
    %v89 = vsel %vm69, %v59, 0
    %v92 = vsel %vm69, %v60, 0
    %94 = vmatprep.subr.mxu0 0.0
    %95 = vmatpush1.msra.mxu0 %v45
    %96 = vmatprep.subr.mxu0 0.0
    %97 = vmatpush1.msra.mxu0 %v46
    %98 = vmatprep.subr.mxu0 0.0
    %99 = vmatpush1.msra.mxu0 %v47
    %100 = vmatprep.subr.mxu0 0.0
    %101 = vmatpush1.msra.mxu0 %v48
    %102 = vmatprep.subr.mxu0 0.0
    %103 = vmatpush1.msra.mxu0 %v49
    %104 = vmatprep.subr.mxu0 0.0
    %105 = vmatpush1.msra.mxu0 %v50
    %106 = vmatprep.subr.mxu0 0.0
    %107 = vmatpush1.msra.mxu0 %v51
    %108 = vmatprep.subr.mxu0 0.0
    %109 = vmatpush1.msra.mxu0 %v52
    %110 = vmatprep.subr.mxu0 0.0
    %111 = vmatpush1.msra.mxu0 0.0
    %112 = vmatprep.subr.mxu0 0.0
    %113 = vmatpush1.msra.mxu0 0.0
    %114 = vmatprep.subr.mxu0 0.0
    %115 = vmatpush1.msra.mxu0 0.0
    %116 = vmatprep.subr.mxu0 0.0
    %117 = vmatpush1.msra.mxu0 0.0
    %118 = vmatprep.subr.mxu0 0.0
    %119 = vmatpush1.msra.mxu0 0.0
    %120 = vmatprep.subr.mxu0 0.0
    %121 = vmatpush1.msra.mxu0 0.0
    %122 = vmatprep.subr.mxu0 0.0
    %123 = vmatpush1.msra.mxu0 0.0
    %124 = vmatprep.subr.mxu0 0.0
    %125 = vmatpush1.msra.mxu0 0.0
    %126 = vmatprep.subr.mxu0 0.0
    %127 = vmatpush1.msra.mxu0 0.0
    %128 = vmatprep.subr.mxu0 0.0
    %129 = vmatpush1.msra.mxu0 0.0
    %130 = vmatprep.subr.mxu0 0.0
    %131 = vmatpush1.msra.mxu0 0.0
    %132 = vmatprep.subr.mxu0 0.0
    %133 = vmatpush1.msra.mxu0 0.0
    %134 = vmatprep.subr.mxu0 0.0
    %135 = vmatpush1.msra.mxu0 0.0
    %136 = vmatprep.subr.mxu0 0.0
    %137 = vmatpush1.msra.mxu0 0.0
    %138 = vmatprep.subr.mxu0 0.0
    %139 = vmatpush1.msra.mxu0 0.0
    %140 = vmatprep.subr.mxu0 0.0
    %141 = vmatpush1.msra.mxu0 0.0
    %142 = vmatprep.subr.mxu0 0.0
    %143 = vmatpush1.msra.mxu0 0.0
    %144 = vmatprep.subr.mxu0 0.0
    %145 = vmatpush1.msra.mxu0 0.0
    %146 = vmatprep.subr.mxu0 0.0
    %147 = vmatpush1.msra.mxu0 0.0
    %148 = vmatprep.subr.mxu0 0.0
    %149 = vmatpush1.msra.mxu0 0.0
    %150 = vmatprep.subr.mxu0 0.0
    %151 = vmatpush1.msra.mxu0 0.0
    %152 = vmatprep.subr.mxu0 0.0
    %153 = vmatpush1.msra.mxu0 0.0
    %154 = vmatprep.subr.mxu0 0.0
    %155 = vmatpush1.msra.mxu0 0.0
    %156 = vmatprep.subr.mxu0 0.0
    %157 = vmatpush1.msra.mxu0 0.0
    %158 = vmatprep.mubr.f32.mxu0 0.0
    %159 = vmatmul.mubr.f32.gmra.mrb[0].mxu0 %v71
    %v160 = vpop.f32.mrb[0].mxu0
    %v161 = vadd.f32 0.0, %v160
    %v162 = vpop.f32.mrb[0].mxu0
    %163 = vmatprep.mubr.f32.mxu0 0.0
    %164 = vmatmul.mubr.f32.gmra.mrb[0].mxu0 %v74
    %v165 = vpop.f32.mrb[0].mxu0
    %v166 = vadd.f32 0.0, %v165
    %v167 = vpop.f32.mrb[0].mxu0
    %168 = vmatprep.mubr.f32.mxu0 0.0
    %169 = vmatmul.mubr.f32.gmra.mrb[0].mxu0 %v77
    %v170 = vpop.f32.mrb[0].mxu0
    %v171 = vadd.f32 0.0, %v170
    %v172 = vpop.f32.mrb[0].mxu0
    %173 = vmatprep.mubr.f32.mxu0 0.0
    %174 = vmatmul.mubr.f32.gmra.mrb[0].mxu0 %v80
    %v175 = vpop.f32.mrb[0].mxu0
    %v176 = vadd.f32 0.0, %v175
    %v177 = vpop.f32.mrb[0].mxu0
    %178 = vmatprep.mubr.f32.mxu0 0.0
    %179 = vmatmul.mubr.f32.gmra.mrb[0].mxu0 %v83
    %v180 = vpop.f32.mrb[0].mxu0
    %v181 = vadd.f32 0.0, %v180
    %v182 = vpop.f32.mrb[0].mxu0
    %183 = vmatprep.mubr.f32.mxu0 0.0
    %184 = vmatmul.mubr.f32.gmra.mrb[0].mxu0 %v86
    %v185 = vpop.f32.mrb[0].mxu0
    %v186 = vadd.f32 0.0, %v185
    %v187 = vpop.f32.mrb[0].mxu0
    %188 = vmatprep.mubr.f32.mxu0 0.0
    %189 = vmatmul.mubr.f32.gmra.mrb[0].mxu0 %v89
    %v190 = vpop.f32.mrb[0].mxu0
    %v191 = vadd.f32 0.0, %v190
    %v192 = vpop.f32.mrb[0].mxu0
    %193 = vmatprep.mubr.f32.mxu0 0.0
    %194 = vmatmul.mubr.f32.gmra.mrb[0].mxu0 %v92
    %v195 = vpop.f32.mrb[0].mxu0
    %v196 = vadd.f32 0.0, %v195
    %v197 = vpop.f32.mrb[0].mxu0
    %198 = vdwg.mxu0
    %v199 = vld [vmem:[%s4] sm:$0xff]
    %v200 = vld [vmem:[%s4 + $0x8] sm:$0x7f]
    %s201 = scalar_lea.vmem %s4, 16
    %v202 = vld [vmem:[%s201] sm:$0xff]
    %v203 = vld [vmem:[%s201 + $0x8] sm:$0x7f]
    %vm204 = vcmask 121856
    %v206 = vsel %vm204, %v161, 0
    %v209 = vsel %vm204, %v166, 0
    %v212 = vsel %vm204, %v171, 0
    %v215 = vsel %vm204, %v176, 0
    %v218 = vsel %vm204, %v181, 0
    %v221 = vsel %vm204, %v186, 0
    %v224 = vsel %vm204, %v191, 0
    %v227 = vsel %vm204, %v196, 0
    %vm229 = vcmask 1046528
    %v231 = vsel %vm229, %v203, 0
    %233 = vmatprep.subr.mxu0 0.0
    %234 = vmatpush1.msra.mxu0 %v202
    %235 = vmatprep.subr.mxu0 0.0
    %236 = vmatpush1.msra.mxu0 %v231
    %237 = vmatprep.subr.mxu0 0.0
    %238 = vmatpush1.msra.mxu0 0.0
    %239 = vmatprep.subr.mxu0 0.0
    %240 = vmatpush1.msra.mxu0 0.0
    %241 = vmatprep.subr.mxu0 0.0
    %242 = vmatpush1.msra.mxu0 0.0
    %243 = vmatprep.subr.mxu0 0.0
    %244 = vmatpush1.msra.mxu0 0.0
    %245 = vmatprep.subr.mxu0 0.0
    %246 = vmatpush1.msra.mxu0 0.0
    %247 = vmatprep.subr.mxu0 0.0
    %248 = vmatpush1.msra.mxu0 0.0
    %249 = vmatprep.subr.mxu0 0.0
    %250 = vmatpush1.msra.mxu0 0.0
    %251 = vmatprep.subr.mxu0 0.0
    %252 = vmatpush1.msra.mxu0 0.0
    %253 = vmatprep.subr.mxu0 0.0
    %254 = vmatpush1.msra.mxu0 0.0
    %255 = vmatprep.subr.mxu0 0.0
    %256 = vmatpush1.msra.mxu0 0.0
    %257 = vmatprep.subr.mxu0 0.0
    %258 = vmatpush1.msra.mxu0 0.0
    %259 = vmatprep.subr.mxu0 0.0
    %260 = vmatpush1.msra.mxu0 0.0
    %261 = vmatprep.subr.mxu0 0.0
    %262 = vmatpush1.msra.mxu0 0.0
    %263 = vmatprep.subr.mxu0 0.0
    %264 = vmatpush1.msra.mxu0 0.0
    %265 = vmatprep.subr.mxu0 0.0
    %266 = vmatpush1.msra.mxu0 0.0
    %267 = vmatprep.subr.mxu0 0.0
    %268 = vmatpush1.msra.mxu0 0.0
    %269 = vmatprep.subr.mxu0 0.0
    %270 = vmatpush1.msra.mxu0 0.0
    %271 = vmatprep.subr.mxu0 0.0
    %272 = vmatpush1.msra.mxu0 0.0
    %273 = vmatprep.subr.mxu0 0.0
    %274 = vmatpush1.msra.mxu0 0.0
    %275 = vmatprep.subr.mxu0 0.0
    %276 = vmatpush1.msra.mxu0 0.0
    %277 = vmatprep.subr.mxu0 0.0
    %278 = vmatpush1.msra.mxu0 0.0
    %279 = vmatprep.subr.mxu0 0.0
    %280 = vmatpush1.msra.mxu0 0.0
    %281 = vmatprep.subr.mxu0 0.0
    %282 = vmatpush1.msra.mxu0 0.0
    %283 = vmatprep.subr.mxu0 0.0
    %284 = vmatpush1.msra.mxu0 0.0
    %285 = vmatprep.subr.mxu0 0.0
    %286 = vmatpush1.msra.mxu0 0.0
    %287 = vmatprep.subr.mxu0 0.0
    %288 = vmatpush1.msra.mxu0 0.0
    %289 = vmatprep.subr.mxu0 0.0
    %290 = vmatpush1.msra.mxu0 0.0
    %291 = vmatprep.subr.mxu0 0.0
    %292 = vmatpush1.msra.mxu0 0.0
    %293 = vmatprep.subr.mxu0 0.0
    %294 = vmatpush1.msra.mxu0 0.0
    %295 = vmatprep.subr.mxu0 0.0
    %296 = vmatpush1.msra.mxu0 0.0
    %297 = vmatprep.mubr.f32.mxu0 0.0
    %298 = vmatmul.mubr.f32.gmra.mrb[0].mxu0 %v206
    %v299 = vpop.f32.mrb[0].mxu0
    %v300 = vadd.f32 0.0, %v299
    %v301 = vpop.f32.mrb[0].mxu0
    %302 = vmatprep.mubr.f32.mxu0 0.0
    %303 = vmatmul.mubr.f32.gmra.mrb[0].mxu0 %v209
    %v304 = vpop.f32.mrb[0].mxu0
    %v305 = vadd.f32 0.0, %v304
    %v306 = vpop.f32.mrb[0].mxu0
    %307 = vmatprep.mubr.f32.mxu0 0.0
    %308 = vmatmul.mubr.f32.gmra.mrb[0].mxu0 %v212
    %v309 = vpop.f32.mrb[0].mxu0
    %v310 = vadd.f32 0.0, %v309
    %v311 = vpop.f32.mrb[0].mxu0
    %312 = vmatprep.mubr.f32.mxu0 0.0
    %313 = vmatmul.mubr.f32.gmra.mrb[0].mxu0 %v215
    %v314 = vpop.f32.mrb[0].mxu0
    %v315 = vadd.f32 0.0, %v314
    %v316 = vpop.f32.mrb[0].mxu0
    %317 = vmatprep.mubr.f32.mxu0 0.0
    %318 = vmatmul.mubr.f32.gmra.mrb[0].mxu0 %v218
    %v319 = vpop.f32.mrb[0].mxu0
    %v320 = vadd.f32 0.0, %v319
    %v321 = vpop.f32.mrb[0].mxu0
    %322 = vmatprep.mubr.f32.mxu0 0.0
    %323 = vmatmul.mubr.f32.gmra.mrb[0].mxu0 %v221
    %v324 = vpop.f32.mrb[0].mxu0
    %v325 = vadd.f32 0.0, %v324
    %v326 = vpop.f32.mrb[0].mxu0
    %327 = vmatprep.mubr.f32.mxu0 0.0
    %328 = vmatmul.mubr.f32.gmra.mrb[0].mxu0 %v224
    %v329 = vpop.f32.mrb[0].mxu0
    %v330 = vadd.f32 0.0, %v329
    %v331 = vpop.f32.mrb[0].mxu0
    %332 = vmatprep.mubr.f32.mxu0 0.0
    %333 = vmatmul.mubr.f32.gmra.mrb[0].mxu0 %v227
    %v334 = vpop.f32.mrb[0].mxu0
    %v335 = vadd.f32 0.0, %v334
    %v336 = vpop.f32.mrb[0].mxu0
    %337 = vdwg.mxu0
    %v339 = vsel %vm204, %v45, 0
    %v342 = vsel %vm204, %v46, 0
    %v345 = vsel %vm204, %v47, 0
    %v348 = vsel %vm204, %v48, 0
    %v351 = vsel %vm204, %v49, 0
    %v354 = vsel %vm204, %v50, 0
    %v357 = vsel %vm204, %v51, 0
    %v360 = vsel %vm204, %v52, 0
    %v363 = vsel %vm229, %v200, 0
    %365 = vmatprep.subr.mxu0 0.0
    %366 = vmatpush1.msra.mxu0 %v199
    %367 = vmatprep.subr.mxu0 0.0
    %368 = vmatpush1.msra.mxu0 %v363
    %369 = vmatprep.subr.mxu0 0.0
    %370 = vmatpush1.msra.mxu0 0.0
    %371 = vmatprep.subr.mxu0 0.0
    %372 = vmatpush1.msra.mxu0 0.0
    %373 = vmatprep.subr.mxu0 0.0
    %374 = vmatpush1.msra.mxu0 0.0
    %375 = vmatprep.subr.mxu0 0.0
    %376 = vmatpush1.msra.mxu0 0.0
    %377 = vmatprep.subr.mxu0 0.0
    %378 = vmatpush1.msra.mxu0 0.0
    %379 = vmatprep.subr.mxu0 0.0
    %380 = vmatpush1.msra.mxu0 0.0
    %381 = vmatprep.subr.mxu0 0.0
    %382 = vmatpush1.msra.mxu0 0.0
    %383 = vmatprep.subr.mxu0 0.0
    %384 = vmatpush1.msra.mxu0 0.0
    %385 = vmatprep.subr.mxu0 0.0
    %386 = vmatpush1.msra.mxu0 0.0
    %387 = vmatprep.subr.mxu0 0.0
    %388 = vmatpush1.msra.mxu0 0.0
    %389 = vmatprep.subr.mxu0 0.0
    %390 = vmatpush1.msra.mxu0 0.0
    %391 = vmatprep.subr.mxu0 0.0
    %392 = vmatpush1.msra.mxu0 0.0
    %393 = vmatprep.subr.mxu0 0.0
    %394 = vmatpush1.msra.mxu0 0.0
    %395 = vmatprep.subr.mxu0 0.0
    %396 = vmatpush1.msra.mxu0 0.0
    %397 = vmatprep.subr.mxu0 0.0
    %398 = vmatpush1.msra.mxu0 0.0
    %399 = vmatprep.subr.mxu0 0.0
    %400 = vmatpush1.msra.mxu0 0.0
    %401 = vmatprep.subr.mxu0 0.0
    %402 = vmatpush1.msra.mxu0 0.0
    %403 = vmatprep.subr.mxu0 0.0
    %404 = vmatpush1.msra.mxu0 0.0
    %405 = vmatprep.subr.mxu0 0.0
    %406 = vmatpush1.msra.mxu0 0.0
    %407 = vmatprep.subr.mxu0 0.0
    %408 = vmatpush1.msra.mxu0 0.0
    %409 = vmatprep.subr.mxu0 0.0
    %410 = vmatpush1.msra.mxu0 0.0
    %411 = vmatprep.subr.mxu0 0.0
    %412 = vmatpush1.msra.mxu0 0.0
    %413 = vmatprep.subr.mxu0 0.0
    %414 = vmatpush1.msra.mxu0 0.0
    %415 = vmatprep.subr.mxu0 0.0
    %416 = vmatpush1.msra.mxu0 0.0
    %417 = vmatprep.subr.mxu0 0.0
    %418 = vmatpush1.msra.mxu0 0.0
    %419 = vmatprep.subr.mxu0 0.0
    %420 = vmatpush1.msra.mxu0 0.0
    %421 = vmatprep.subr.mxu0 0.0
    %422 = vmatpush1.msra.mxu0 0.0
    %423 = vmatprep.subr.mxu0 0.0
    %424 = vmatpush1.msra.mxu0 0.0
    %425 = vmatprep.subr.mxu0 0.0
    %426 = vmatpush1.msra.mxu0 0.0
    %427 = vmatprep.subr.mxu0 0.0
    %428 = vmatpush1.msra.mxu0 0.0
    %429 = vmatprep.mubr.f32.mxu0 0.0
    %430 = vmatmul.mubr.f32.gmra.mrb[0].mxu0 %v339
    %v431 = vpop.f32.mrb[0].mxu0
    %v432 = vadd.f32 %v300, %v431
    %v433 = vpop.f32.mrb[0].mxu0
    %434 = vmatprep.mubr.f32.mxu0 0.0
    %435 = vmatmul.mubr.f32.gmra.mrb[0].mxu0 %v342
    %v436 = vpop.f32.mrb[0].mxu0
    %v437 = vadd.f32 %v305, %v436
    %v438 = vpop.f32.mrb[0].mxu0
    %439 = vmatprep.mubr.f32.mxu0 0.0
    %440 = vmatmul.mubr.f32.gmra.mrb[0].mxu0 %v345
    %v441 = vpop.f32.mrb[0].mxu0
    %v442 = vadd.f32 %v310, %v441
    %v443 = vpop.f32.mrb[0].mxu0
    %444 = vmatprep.mubr.f32.mxu0 0.0
    %445 = vmatmul.mubr.f32.gmra.mrb[0].mxu0 %v348
    %v446 = vpop.f32.mrb[0].mxu0
    %v447 = vadd.f32 %v315, %v446
    %v448 = vpop.f32.mrb[0].mxu0
    %449 = vmatprep.mubr.f32.mxu0 0.0
    %450 = vmatmul.mubr.f32.gmra.mrb[0].mxu0 %v351
    %v451 = vpop.f32.mrb[0].mxu0
    %v452 = vadd.f32 %v320, %v451
    %v453 = vpop.f32.mrb[0].mxu0
    %454 = vmatprep.mubr.f32.mxu0 0.0
    %455 = vmatmul.mubr.f32.gmra.mrb[0].mxu0 %v354
    %v456 = vpop.f32.mrb[0].mxu0
    %v457 = vadd.f32 %v325, %v456
    %v458 = vpop.f32.mrb[0].mxu0
    %459 = vmatprep.mubr.f32.mxu0 0.0
    %460 = vmatmul.mubr.f32.gmra.mrb[0].mxu0 %v357
    %v461 = vpop.f32.mrb[0].mxu0
    %v462 = vadd.f32 %v330, %v461
    %v463 = vpop.f32.mrb[0].mxu0
    %464 = vmatprep.mubr.f32.mxu0 0.0
    %465 = vmatmul.mubr.f32.gmra.mrb[0].mxu0 %v360
    %v466 = vpop.f32.mrb[0].mxu0
    %v467 = vadd.f32 %v335, %v466
    %v468 = vpop.f32.mrb[0].mxu0
    %469 = vdwg.mxu0
    %v471 = vsel %vm69, %v61, 0
    %v474 = vsel %vm69, %v62, 0
    %v477 = vsel %vm69, %v63, 0
    %v480 = vsel %vm69, %v64, 0
    %v483 = vsel %vm69, %v65, 0
    %v486 = vsel %vm69, %v66, 0
    %v489 = vsel %vm69, %v67, 0
    %v492 = vsel %vm69, %v68, 0
    %494 = vmatprep.subr.mxu0 0.0
    %495 = vmatpush1.msra.mxu0 %v161
    %496 = vmatprep.subr.mxu0 0.0
    %497 = vmatpush1.msra.mxu0 %v166
    %498 = vmatprep.subr.mxu0 0.0
    %499 = vmatpush1.msra.mxu0 %v171
    %500 = vmatprep.subr.mxu0 0.0
    %501 = vmatpush1.msra.mxu0 %v176
    %502 = vmatprep.subr.mxu0 0.0
    %503 = vmatpush1.msra.mxu0 %v181
    %504 = vmatprep.subr.mxu0 0.0
    %505 = vmatpush1.msra.mxu0 %v186
    %506 = vmatprep.subr.mxu0 0.0
    %507 = vmatpush1.msra.mxu0 %v191
    %508 = vmatprep.subr.mxu0 0.0
    %509 = vmatpush1.msra.mxu0 %v196
    %510 = vmatprep.subr.mxu0 0.0
    %511 = vmatpush1.msra.mxu0 0.0
    %512 = vmatprep.subr.mxu0 0.0
    %513 = vmatpush1.msra.mxu0 0.0
    %514 = vmatprep.subr.mxu0 0.0
    %515 = vmatpush1.msra.mxu0 0.0
    %516 = vmatprep.subr.mxu0 0.0
    %517 = vmatpush1.msra.mxu0 0.0
    %518 = vmatprep.subr.mxu0 0.0
    %519 = vmatpush1.msra.mxu0 0.0
    %520 = vmatprep.subr.mxu0 0.0
    %521 = vmatpush1.msra.mxu0 0.0
    %522 = vmatprep.subr.mxu0 0.0
    %523 = vmatpush1.msra.mxu0 0.0
    %524 = vmatprep.subr.mxu0 0.0
    %525 = vmatpush1.msra.mxu0 0.0
    %526 = vmatprep.subr.mxu0 0.0
    %527 = vmatpush1.msra.mxu0 0.0
    %528 = vmatprep.subr.mxu0 0.0
    %529 = vmatpush1.msra.mxu0 0.0
    %530 = vmatprep.subr.mxu0 0.0
    %531 = vmatpush1.msra.mxu0 0.0
    %532 = vmatprep.subr.mxu0 0.0
    %533 = vmatpush1.msra.mxu0 0.0
    %534 = vmatprep.subr.mxu0 0.0
    %535 = vmatpush1.msra.mxu0 0.0
    %536 = vmatprep.subr.mxu0 0.0
    %537 = vmatpush1.msra.mxu0 0.0
    %538 = vmatprep.subr.mxu0 0.0
    %539 = vmatpush1.msra.mxu0 0.0
    %540 = vmatprep.subr.mxu0 0.0
    %541 = vmatpush1.msra.mxu0 0.0
    %542 = vmatprep.subr.mxu0 0.0
    %543 = vmatpush1.msra.mxu0 0.0
    %544 = vmatprep.subr.mxu0 0.0
    %545 = vmatpush1.msra.mxu0 0.0
    %546 = vmatprep.subr.mxu0 0.0
    %547 = vmatpush1.msra.mxu0 0.0
    %548 = vmatprep.subr.mxu0 0.0
    %549 = vmatpush1.msra.mxu0 0.0
    %550 = vmatprep.subr.mxu0 0.0
    %551 = vmatpush1.msra.mxu0 0.0
    %552 = vmatprep.subr.mxu0 0.0
    %553 = vmatpush1.msra.mxu0 0.0
    %554 = vmatprep.subr.mxu0 0.0
    %555 = vmatpush1.msra.mxu0 0.0
    %556 = vmatprep.subr.mxu0 0.0
    %557 = vmatpush1.msra.mxu0 0.0
    %558 = vmatprep.mubr.f32.mxu0 0.0
    %559 = vmatmul.mubr.f32.gmra.mrb[0].mxu0 %v471
    %v560 = vpop.f32.mrb[0].mxu0
    %v561 = vadd.f32 0.0, %v560
    %v562 = vpop.f32.mrb[0].mxu0
    %563 = vmatprep.mubr.f32.mxu0 0.0
    %564 = vmatmul.mubr.f32.gmra.mrb[0].mxu0 %v474
    %v565 = vpop.f32.mrb[0].mxu0
    %v566 = vadd.f32 0.0, %v565
    %v567 = vpop.f32.mrb[0].mxu0
    %568 = vmatprep.mubr.f32.mxu0 0.0
    %569 = vmatmul.mubr.f32.gmra.mrb[0].mxu0 %v477
    %v570 = vpop.f32.mrb[0].mxu0
    %v571 = vadd.f32 0.0, %v570
    %v572 = vpop.f32.mrb[0].mxu0
    %573 = vmatprep.mubr.f32.mxu0 0.0
    %574 = vmatmul.mubr.f32.gmra.mrb[0].mxu0 %v480
    %v575 = vpop.f32.mrb[0].mxu0
    %v576 = vadd.f32 0.0, %v575
    %v577 = vpop.f32.mrb[0].mxu0
    %578 = vmatprep.mubr.f32.mxu0 0.0
    %579 = vmatmul.mubr.f32.gmra.mrb[0].mxu0 %v483
    %v580 = vpop.f32.mrb[0].mxu0
    %v581 = vadd.f32 0.0, %v580
    %v582 = vpop.f32.mrb[0].mxu0
    %583 = vmatprep.mubr.f32.mxu0 0.0
    %584 = vmatmul.mubr.f32.gmra.mrb[0].mxu0 %v486
    %v585 = vpop.f32.mrb[0].mxu0
    %v586 = vadd.f32 0.0, %v585
    %v587 = vpop.f32.mrb[0].mxu0
    %588 = vmatprep.mubr.f32.mxu0 0.0
    %589 = vmatmul.mubr.f32.gmra.mrb[0].mxu0 %v489
    %v590 = vpop.f32.mrb[0].mxu0
    %v591 = vadd.f32 0.0, %v590
    %v592 = vpop.f32.mrb[0].mxu0
    %593 = vmatprep.mubr.f32.mxu0 0.0
    %594 = vmatmul.mubr.f32.gmra.mrb[0].mxu0 %v492
    %v595 = vpop.f32.mrb[0].mxu0
    %v596 = vadd.f32 0.0, %v595
    %v597 = vpop.f32.mrb[0].mxu0
    %598 = vdwg.mxu0
    %v599 = vsub.f32 %v561, %v45
    %v600 = vsub.f32 %v566, %v46
    %v601 = vsub.f32 %v571, %v47
    %v602 = vsub.f32 %v576, %v48
    %v603 = vsub.f32 %v581, %v49
    %v604 = vsub.f32 %v586, %v50
    %v605 = vsub.f32 %v591, %v51
    %v606 = vsub.f32 %v596, %v52
    %s607 = scalar_lea.vmem %s4, 32
    %v608 = vld [vmem:[%s607] sm:$0xff]
    %v609 = vld [vmem:[%s607 + $0x8] sm:$0x7f]
    %v611 = vsel %vm204, %v599, 0
    %v614 = vsel %vm204, %v600, 0
    %v617 = vsel %vm204, %v601, 0
    %v620 = vsel %vm204, %v602, 0
    %v623 = vsel %vm204, %v603, 0
    %v626 = vsel %vm204, %v604, 0
    %v629 = vsel %vm204, %v605, 0
    %v632 = vsel %vm204, %v606, 0
    %v635 = vsel %vm229, %v609, 0
    %637 = vmatprep.subr.mxu0 0.0
    %638 = vmatpush1.msra.mxu0 %v608
    %639 = vmatprep.subr.mxu0 0.0
    %640 = vmatpush1.msra.mxu0 %v635
    %641 = vmatprep.subr.mxu0 0.0
    %642 = vmatpush1.msra.mxu0 0.0
    %643 = vmatprep.subr.mxu0 0.0
    %644 = vmatpush1.msra.mxu0 0.0
    %645 = vmatprep.subr.mxu0 0.0
    %646 = vmatpush1.msra.mxu0 0.0
    %647 = vmatprep.subr.mxu0 0.0
    %648 = vmatpush1.msra.mxu0 0.0
    %649 = vmatprep.subr.mxu0 0.0
    %650 = vmatpush1.msra.mxu0 0.0
    %651 = vmatprep.subr.mxu0 0.0
    %652 = vmatpush1.msra.mxu0 0.0
    %653 = vmatprep.subr.mxu0 0.0
    %654 = vmatpush1.msra.mxu0 0.0
    %655 = vmatprep.subr.mxu0 0.0
    %656 = vmatpush1.msra.mxu0 0.0
    %657 = vmatprep.subr.mxu0 0.0
    %658 = vmatpush1.msra.mxu0 0.0
    %659 = vmatprep.subr.mxu0 0.0
    %660 = vmatpush1.msra.mxu0 0.0
    %661 = vmatprep.subr.mxu0 0.0
    %662 = vmatpush1.msra.mxu0 0.0
    %663 = vmatprep.subr.mxu0 0.0
    %664 = vmatpush1.msra.mxu0 0.0
    %665 = vmatprep.subr.mxu0 0.0
    %666 = vmatpush1.msra.mxu0 0.0
    %667 = vmatprep.subr.mxu0 0.0
    %668 = vmatpush1.msra.mxu0 0.0
    %669 = vmatprep.subr.mxu0 0.0
    %670 = vmatpush1.msra.mxu0 0.0
    %671 = vmatprep.subr.mxu0 0.0
    %672 = vmatpush1.msra.mxu0 0.0
    %673 = vmatprep.subr.mxu0 0.0
    %674 = vmatpush1.msra.mxu0 0.0
    %675 = vmatprep.subr.mxu0 0.0
    %676 = vmatpush1.msra.mxu0 0.0
    %677 = vmatprep.subr.mxu0 0.0
    %678 = vmatpush1.msra.mxu0 0.0
    %679 = vmatprep.subr.mxu0 0.0
    %680 = vmatpush1.msra.mxu0 0.0
    %681 = vmatprep.subr.mxu0 0.0
    %682 = vmatpush1.msra.mxu0 0.0
    %683 = vmatprep.subr.mxu0 0.0
    %684 = vmatpush1.msra.mxu0 0.0
    %685 = vmatprep.subr.mxu0 0.0
    %686 = vmatpush1.msra.mxu0 0.0
    %687 = vmatprep.subr.mxu0 0.0
    %688 = vmatpush1.msra.mxu0 0.0
    %689 = vmatprep.subr.mxu0 0.0
    %690 = vmatpush1.msra.mxu0 0.0
    %691 = vmatprep.subr.mxu0 0.0
    %692 = vmatpush1.msra.mxu0 0.0
    %693 = vmatprep.subr.mxu0 0.0
    %694 = vmatpush1.msra.mxu0 0.0
    %695 = vmatprep.subr.mxu0 0.0
    %696 = vmatpush1.msra.mxu0 0.0
    %697 = vmatprep.subr.mxu0 0.0
    %698 = vmatpush1.msra.mxu0 0.0
    %699 = vmatprep.subr.mxu0 0.0
    %700 = vmatpush1.msra.mxu0 0.0
    %701 = vmatprep.mubr.f32.mxu0 0.0
    %702 = vmatmul.mubr.f32.gmra.mrb[0].mxu0 %v611
    %v703 = vpop.f32.mrb[0].mxu0
    %v704 = vadd.f32 0.0, %v703
    %v705 = vpop.f32.mrb[0].mxu0
    %706 = vmatprep.mubr.f32.mxu0 0.0
    %707 = vmatmul.mubr.f32.gmra.mrb[0].mxu0 %v614
    %v708 = vpop.f32.mrb[0].mxu0
    %v709 = vadd.f32 0.0, %v708
    %v710 = vpop.f32.mrb[0].mxu0
    %711 = vmatprep.mubr.f32.mxu0 0.0
    %712 = vmatmul.mubr.f32.gmra.mrb[0].mxu0 %v617
    %v713 = vpop.f32.mrb[0].mxu0
    %v714 = vadd.f32 0.0, %v713
    %v715 = vpop.f32.mrb[0].mxu0
    %716 = vmatprep.mubr.f32.mxu0 0.0
    %717 = vmatmul.mubr.f32.gmra.mrb[0].mxu0 %v620
    %v718 = vpop.f32.mrb[0].mxu0
    %v719 = vadd.f32 0.0, %v718
    %v720 = vpop.f32.mrb[0].mxu0
    %721 = vmatprep.mubr.f32.mxu0 0.0
    %722 = vmatmul.mubr.f32.gmra.mrb[0].mxu0 %v623
    %v723 = vpop.f32.mrb[0].mxu0
    %v724 = vadd.f32 0.0, %v723
    %v725 = vpop.f32.mrb[0].mxu0
    %726 = vmatprep.mubr.f32.mxu0 0.0
    %727 = vmatmul.mubr.f32.gmra.mrb[0].mxu0 %v626
    %v728 = vpop.f32.mrb[0].mxu0
    %v729 = vadd.f32 0.0, %v728
    %v730 = vpop.f32.mrb[0].mxu0
    %731 = vmatprep.mubr.f32.mxu0 0.0
    %732 = vmatmul.mubr.f32.gmra.mrb[0].mxu0 %v629
    %v733 = vpop.f32.mrb[0].mxu0
    %v734 = vadd.f32 0.0, %v733
    %v735 = vpop.f32.mrb[0].mxu0
    %736 = vmatprep.mubr.f32.mxu0 0.0
    %737 = vmatmul.mubr.f32.gmra.mrb[0].mxu0 %v632
    %v738 = vpop.f32.mrb[0].mxu0
    %v739 = vadd.f32 0.0, %v738
    %v740 = vpop.f32.mrb[0].mxu0
    %741 = vdwg.mxu0
    %v742 = vadd.f32 %v432, %v704
    %v743 = vadd.f32 %v437, %v709
    %v744 = vadd.f32 %v442, %v714
    %v745 = vadd.f32 %v447, %v719
    %v746 = vadd.f32 %v452, %v724
    %v747 = vadd.f32 %v457, %v729
    %v748 = vadd.f32 %v462, %v734
    %v749 = vadd.f32 %v467, %v739
    %750 = vmatprep.subr.mxu0 0.0
    %751 = vmatpush1.msra.mxu0 %v599
    %752 = vmatprep.subr.mxu0 0.0
    %753 = vmatpush1.msra.mxu0 %v600
    %754 = vmatprep.subr.mxu0 0.0
    %755 = vmatpush1.msra.mxu0 %v601
    %756 = vmatprep.subr.mxu0 0.0
    %757 = vmatpush1.msra.mxu0 %v602
    %758 = vmatprep.subr.mxu0 0.0
    %759 = vmatpush1.msra.mxu0 %v603
    %760 = vmatprep.subr.mxu0 0.0
    %761 = vmatpush1.msra.mxu0 %v604
    %762 = vmatprep.subr.mxu0 0.0
    %763 = vmatpush1.msra.mxu0 %v605
    %764 = vmatprep.subr.mxu0 0.0
    %765 = vmatpush1.msra.mxu0 %v606
    %766 = vmatprep.subr.mxu0 0.0
    %767 = vmatpush1.msra.mxu0 0.0
    %768 = vmatprep.subr.mxu0 0.0
    %769 = vmatpush1.msra.mxu0 0.0
    %770 = vmatprep.subr.mxu0 0.0
    %771 = vmatpush1.msra.mxu0 0.0
    %772 = vmatprep.subr.mxu0 0.0
    %773 = vmatpush1.msra.mxu0 0.0
    %774 = vmatprep.subr.mxu0 0.0
    %775 = vmatpush1.msra.mxu0 0.0
    %776 = vmatprep.subr.mxu0 0.0
    %777 = vmatpush1.msra.mxu0 0.0
    %778 = vmatprep.subr.mxu0 0.0
    %779 = vmatpush1.msra.mxu0 0.0
    %780 = vmatprep.subr.mxu0 0.0
    %781 = vmatpush1.msra.mxu0 0.0
    %782 = vmatprep.subr.mxu0 0.0
    %783 = vmatpush1.msra.mxu0 0.0
    %784 = vmatprep.subr.mxu0 0.0
    %785 = vmatpush1.msra.mxu0 0.0
    %786 = vmatprep.subr.mxu0 0.0
    %787 = vmatpush1.msra.mxu0 0.0
    %788 = vmatprep.subr.mxu0 0.0
    %789 = vmatpush1.msra.mxu0 0.0
    %790 = vmatprep.subr.mxu0 0.0
    %791 = vmatpush1.msra.mxu0 0.0
    %792 = vmatprep.subr.mxu0 0.0
    %793 = vmatpush1.msra.mxu0 0.0
    %794 = vmatprep.subr.mxu0 0.0
    %795 = vmatpush1.msra.mxu0 0.0
    %796 = vmatprep.subr.mxu0 0.0
    %797 = vmatpush1.msra.mxu0 0.0
    %798 = vmatprep.subr.mxu0 0.0
    %799 = vmatpush1.msra.mxu0 0.0
    %800 = vmatprep.subr.mxu0 0.0
    %801 = vmatpush1.msra.mxu0 0.0
    %802 = vmatprep.subr.mxu0 0.0
    %803 = vmatpush1.msra.mxu0 0.0
    %804 = vmatprep.subr.mxu0 0.0
    %805 = vmatpush1.msra.mxu0 0.0
    %806 = vmatprep.subr.mxu0 0.0
    %807 = vmatpush1.msra.mxu0 0.0
    %808 = vmatprep.subr.mxu0 0.0
    %809 = vmatpush1.msra.mxu0 0.0
    %810 = vmatprep.subr.mxu0 0.0
    %811 = vmatpush1.msra.mxu0 0.0
    %812 = vmatprep.subr.mxu0 0.0
    %813 = vmatpush1.msra.mxu0 0.0
    %814 = vmatprep.mubr.f32.mxu0 0.0
    %815 = vmatmul.mubr.f32.gmra.mrb[0].mxu0 %v471
    %v816 = vpop.f32.mrb[0].mxu0
    %v817 = vadd.f32 0.0, %v816
    %v818 = vpop.f32.mrb[0].mxu0
    %819 = vmatprep.mubr.f32.mxu0 0.0
    %820 = vmatmul.mubr.f32.gmra.mrb[0].mxu0 %v474
    %v821 = vpop.f32.mrb[0].mxu0
    %v822 = vadd.f32 0.0, %v821
    %v823 = vpop.f32.mrb[0].mxu0
    %824 = vmatprep.mubr.f32.mxu0 0.0
    %825 = vmatmul.mubr.f32.gmra.mrb[0].mxu0 %v477
    %v826 = vpop.f32.mrb[0].mxu0
    %v827 = vadd.f32 0.0, %v826
    %v828 = vpop.f32.mrb[0].mxu0
    %829 = vmatprep.mubr.f32.mxu0 0.0
    %830 = vmatmul.mubr.f32.gmra.mrb[0].mxu0 %v480
    %v831 = vpop.f32.mrb[0].mxu0
    %v832 = vadd.f32 0.0, %v831
    %v833 = vpop.f32.mrb[0].mxu0
    %834 = vmatprep.mubr.f32.mxu0 0.0
    %835 = vmatmul.mubr.f32.gmra.mrb[0].mxu0 %v483
    %v836 = vpop.f32.mrb[0].mxu0
    %v837 = vadd.f32 0.0, %v836
    %v838 = vpop.f32.mrb[0].mxu0
    %839 = vmatprep.mubr.f32.mxu0 0.0
    %840 = vmatmul.mubr.f32.gmra.mrb[0].mxu0 %v486
    %v841 = vpop.f32.mrb[0].mxu0
    %v842 = vadd.f32 0.0, %v841
    %v843 = vpop.f32.mrb[0].mxu0
    %844 = vmatprep.mubr.f32.mxu0 0.0
    %845 = vmatmul.mubr.f32.gmra.mrb[0].mxu0 %v489
    %v846 = vpop.f32.mrb[0].mxu0
    %v847 = vadd.f32 0.0, %v846
    %v848 = vpop.f32.mrb[0].mxu0
    %849 = vmatprep.mubr.f32.mxu0 0.0
    %850 = vmatmul.mubr.f32.gmra.mrb[0].mxu0 %v492
    %v851 = vpop.f32.mrb[0].mxu0
    %v852 = vadd.f32 0.0, %v851
    %v853 = vpop.f32.mrb[0].mxu0
    %854 = vdwg.mxu0
    %v855 = vsub.f32 %v817, %v161
    %v856 = vsub.f32 %v822, %v166
    %v857 = vsub.f32 %v827, %v171
    %v858 = vsub.f32 %v832, %v176
    %v859 = vsub.f32 %v837, %v181
    %v860 = vsub.f32 %v842, %v186
    %v861 = vsub.f32 %v847, %v191
    %v862 = vsub.f32 %v852, %v196
    %s863 = scalar_lea.vmem %s4, 48
    %v864 = vld [vmem:[%s863] sm:$0xff]
    %v865 = vld [vmem:[%s863 + $0x8] sm:$0x7f]
    %v867 = vsel %vm204, %v855, 0
    %v870 = vsel %vm204, %v856, 0
    %v873 = vsel %vm204, %v857, 0
    %v876 = vsel %vm204, %v858, 0
    %v879 = vsel %vm204, %v859, 0
    %v882 = vsel %vm204, %v860, 0
    %v885 = vsel %vm204, %v861, 0
    %v888 = vsel %vm204, %v862, 0
    %v891 = vsel %vm229, %v865, 0
    %893 = vmatprep.subr.mxu0 0.0
    %894 = vmatpush1.msra.mxu0 %v864
    %895 = vmatprep.subr.mxu0 0.0
    %896 = vmatpush1.msra.mxu0 %v891
    %897 = vmatprep.subr.mxu0 0.0
    %898 = vmatpush1.msra.mxu0 0.0
    %899 = vmatprep.subr.mxu0 0.0
    %900 = vmatpush1.msra.mxu0 0.0
    %901 = vmatprep.subr.mxu0 0.0
    %902 = vmatpush1.msra.mxu0 0.0
    %903 = vmatprep.subr.mxu0 0.0
    %904 = vmatpush1.msra.mxu0 0.0
    %905 = vmatprep.subr.mxu0 0.0
    %906 = vmatpush1.msra.mxu0 0.0
    %907 = vmatprep.subr.mxu0 0.0
    %908 = vmatpush1.msra.mxu0 0.0
    %909 = vmatprep.subr.mxu0 0.0
    %910 = vmatpush1.msra.mxu0 0.0
    %911 = vmatprep.subr.mxu0 0.0
    %912 = vmatpush1.msra.mxu0 0.0
    %913 = vmatprep.subr.mxu0 0.0
    %914 = vmatpush1.msra.mxu0 0.0
    %915 = vmatprep.subr.mxu0 0.0
    %916 = vmatpush1.msra.mxu0 0.0
    %917 = vmatprep.subr.mxu0 0.0
    %918 = vmatpush1.msra.mxu0 0.0
    %919 = vmatprep.subr.mxu0 0.0
    %920 = vmatpush1.msra.mxu0 0.0
    %921 = vmatprep.subr.mxu0 0.0
    %922 = vmatpush1.msra.mxu0 0.0
    %923 = vmatprep.subr.mxu0 0.0
    %924 = vmatpush1.msra.mxu0 0.0
    %925 = vmatprep.subr.mxu0 0.0
    %926 = vmatpush1.msra.mxu0 0.0
    %927 = vmatprep.subr.mxu0 0.0
    %928 = vmatpush1.msra.mxu0 0.0
    %929 = vmatprep.subr.mxu0 0.0
    %930 = vmatpush1.msra.mxu0 0.0
    %931 = vmatprep.subr.mxu0 0.0
    %932 = vmatpush1.msra.mxu0 0.0
    %933 = vmatprep.subr.mxu0 0.0
    %934 = vmatpush1.msra.mxu0 0.0
    %935 = vmatprep.subr.mxu0 0.0
    %936 = vmatpush1.msra.mxu0 0.0
    %937 = vmatprep.subr.mxu0 0.0
    %938 = vmatpush1.msra.mxu0 0.0
    %939 = vmatprep.subr.mxu0 0.0
    %940 = vmatpush1.msra.mxu0 0.0
    %941 = vmatprep.subr.mxu0 0.0
    %942 = vmatpush1.msra.mxu0 0.0
    %943 = vmatprep.subr.mxu0 0.0
    %944 = vmatpush1.msra.mxu0 0.0
    %945 = vmatprep.subr.mxu0 0.0
    %946 = vmatpush1.msra.mxu0 0.0
    %947 = vmatprep.subr.mxu0 0.0
    %948 = vmatpush1.msra.mxu0 0.0
    %949 = vmatprep.subr.mxu0 0.0
    %950 = vmatpush1.msra.mxu0 0.0
    %951 = vmatprep.subr.mxu0 0.0
    %952 = vmatpush1.msra.mxu0 0.0
    %953 = vmatprep.subr.mxu0 0.0
    %954 = vmatpush1.msra.mxu0 0.0
    %955 = vmatprep.subr.mxu0 0.0
    %956 = vmatpush1.msra.mxu0 0.0
    %957 = vmatprep.mubr.f32.mxu0 0.0
    %958 = vmatmul.mubr.f32.gmra.mrb[0].mxu0 %v867
    %v959 = vpop.f32.mrb[0].mxu0
    %v960 = vadd.f32 0.0, %v959
    %v961 = vpop.f32.mrb[0].mxu0
    %962 = vmatprep.mubr.f32.mxu0 0.0
    %963 = vmatmul.mubr.f32.gmra.mrb[0].mxu0 %v870
    %v964 = vpop.f32.mrb[0].mxu0
    %v965 = vadd.f32 0.0, %v964
    %v966 = vpop.f32.mrb[0].mxu0
    %967 = vmatprep.mubr.f32.mxu0 0.0
    %968 = vmatmul.mubr.f32.gmra.mrb[0].mxu0 %v873
    %v969 = vpop.f32.mrb[0].mxu0
    %v970 = vadd.f32 0.0, %v969
    %v971 = vpop.f32.mrb[0].mxu0
    %972 = vmatprep.mubr.f32.mxu0 0.0
    %973 = vmatmul.mubr.f32.gmra.mrb[0].mxu0 %v876
    %v974 = vpop.f32.mrb[0].mxu0
    %v975 = vadd.f32 0.0, %v974
    %v976 = vpop.f32.mrb[0].mxu0
    %977 = vmatprep.mubr.f32.mxu0 0.0
    %978 = vmatmul.mubr.f32.gmra.mrb[0].mxu0 %v879
    %v979 = vpop.f32.mrb[0].mxu0
    %v980 = vadd.f32 0.0, %v979
    %v981 = vpop.f32.mrb[0].mxu0
    %982 = vmatprep.mubr.f32.mxu0 0.0
    %983 = vmatmul.mubr.f32.gmra.mrb[0].mxu0 %v882
    %v984 = vpop.f32.mrb[0].mxu0
    %v985 = vadd.f32 0.0, %v984
    %v986 = vpop.f32.mrb[0].mxu0
    %987 = vmatprep.mubr.f32.mxu0 0.0
    %988 = vmatmul.mubr.f32.gmra.mrb[0].mxu0 %v885
    %v989 = vpop.f32.mrb[0].mxu0
    %v990 = vadd.f32 0.0, %v989
    %v991 = vpop.f32.mrb[0].mxu0
    %992 = vmatprep.mubr.f32.mxu0 0.0
    %993 = vmatmul.mubr.f32.gmra.mrb[0].mxu0 %v888
    %v994 = vpop.f32.mrb[0].mxu0
    %v995 = vadd.f32 0.0, %v994
    %v996 = vpop.f32.mrb[0].mxu0
    %997 = vdwg.mxu0
    %v998 = vadd.f32 %v742, %v960
    %v999 = vadd.f32 %v743, %v965
    %v1000 = vadd.f32 %v744, %v970
    %v1001 = vadd.f32 %v745, %v975
    %v1002 = vadd.f32 %v746, %v980
    %v1003 = vadd.f32 %v747, %v985
    %v1004 = vadd.f32 %v748, %v990
    %v1005 = vadd.f32 %v749, %v995
    %1006 = vmatprep.subr.mxu0 0.0
    %1007 = vmatpush1.msra.mxu0 %v855
    %1008 = vmatprep.subr.mxu0 0.0
    %1009 = vmatpush1.msra.mxu0 %v856
    %1010 = vmatprep.subr.mxu0 0.0
    %1011 = vmatpush1.msra.mxu0 %v857
    %1012 = vmatprep.subr.mxu0 0.0
    %1013 = vmatpush1.msra.mxu0 %v858
    %1014 = vmatprep.subr.mxu0 0.0
    %1015 = vmatpush1.msra.mxu0 %v859
    %1016 = vmatprep.subr.mxu0 0.0
    %1017 = vmatpush1.msra.mxu0 %v860
    %1018 = vmatprep.subr.mxu0 0.0
    %1019 = vmatpush1.msra.mxu0 %v861
    %1020 = vmatprep.subr.mxu0 0.0
    %1021 = vmatpush1.msra.mxu0 %v862
    %1022 = vmatprep.subr.mxu0 0.0
    %1023 = vmatpush1.msra.mxu0 0.0
    %1024 = vmatprep.subr.mxu0 0.0
    %1025 = vmatpush1.msra.mxu0 0.0
    %1026 = vmatprep.subr.mxu0 0.0
    %1027 = vmatpush1.msra.mxu0 0.0
    %1028 = vmatprep.subr.mxu0 0.0
    %1029 = vmatpush1.msra.mxu0 0.0
    %1030 = vmatprep.subr.mxu0 0.0
    %1031 = vmatpush1.msra.mxu0 0.0
    %1032 = vmatprep.subr.mxu0 0.0
    %1033 = vmatpush1.msra.mxu0 0.0
    %1034 = vmatprep.subr.mxu0 0.0
    %1035 = vmatpush1.msra.mxu0 0.0
    %1036 = vmatprep.subr.mxu0 0.0
    %1037 = vmatpush1.msra.mxu0 0.0
    %1038 = vmatprep.subr.mxu0 0.0
    %1039 = vmatpush1.msra.mxu0 0.0
    %1040 = vmatprep.subr.mxu0 0.0
    %1041 = vmatpush1.msra.mxu0 0.0
    %1042 = vmatprep.subr.mxu0 0.0
    %1043 = vmatpush1.msra.mxu0 0.0
    %1044 = vmatprep.subr.mxu0 0.0
    %1045 = vmatpush1.msra.mxu0 0.0
    %1046 = vmatprep.subr.mxu0 0.0
    %1047 = vmatpush1.msra.mxu0 0.0
    %1048 = vmatprep.subr.mxu0 0.0
    %1049 = vmatpush1.msra.mxu0 0.0
    %1050 = vmatprep.subr.mxu0 0.0
    %1051 = vmatpush1.msra.mxu0 0.0
    %1052 = vmatprep.subr.mxu0 0.0
    %1053 = vmatpush1.msra.mxu0 0.0
    %1054 = vmatprep.subr.mxu0 0.0
    %1055 = vmatpush1.msra.mxu0 0.0
    %1056 = vmatprep.subr.mxu0 0.0
    %1057 = vmatpush1.msra.mxu0 0.0
    %1058 = vmatprep.subr.mxu0 0.0
    %1059 = vmatpush1.msra.mxu0 0.0
    %1060 = vmatprep.subr.mxu0 0.0
    %1061 = vmatpush1.msra.mxu0 0.0
    %1062 = vmatprep.subr.mxu0 0.0
    %1063 = vmatpush1.msra.mxu0 0.0
    %1064 = vmatprep.subr.mxu0 0.0
    %1065 = vmatpush1.msra.mxu0 0.0
    %1066 = vmatprep.subr.mxu0 0.0
    %1067 = vmatpush1.msra.mxu0 0.0
    %1068 = vmatprep.subr.mxu0 0.0
    %1069 = vmatpush1.msra.mxu0 0.0
    %1070 = vmatprep.mubr.f32.mxu0 0.0
    %1071 = vmatmul.mubr.f32.gmra.mrb[0].mxu0 %v471
    %v1072 = vpop.f32.mrb[0].mxu0
    %v1073 = vadd.f32 0.0, %v1072
    %v1074 = vpop.f32.mrb[0].mxu0
    %1075 = vmatprep.mubr.f32.mxu0 0.0
    %1076 = vmatmul.mubr.f32.gmra.mrb[0].mxu0 %v474
    %v1077 = vpop.f32.mrb[0].mxu0
    %v1078 = vadd.f32 0.0, %v1077
    %v1079 = vpop.f32.mrb[0].mxu0
    %1080 = vmatprep.mubr.f32.mxu0 0.0
    %1081 = vmatmul.mubr.f32.gmra.mrb[0].mxu0 %v477
    %v1082 = vpop.f32.mrb[0].mxu0
    %v1083 = vadd.f32 0.0, %v1082
    %v1084 = vpop.f32.mrb[0].mxu0
    %1085 = vmatprep.mubr.f32.mxu0 0.0
    %1086 = vmatmul.mubr.f32.gmra.mrb[0].mxu0 %v480
    %v1087 = vpop.f32.mrb[0].mxu0
    %v1088 = vadd.f32 0.0, %v1087
    %v1089 = vpop.f32.mrb[0].mxu0
    %1090 = vmatprep.mubr.f32.mxu0 0.0
    %1091 = vmatmul.mubr.f32.gmra.mrb[0].mxu0 %v483
    %v1092 = vpop.f32.mrb[0].mxu0
    %v1093 = vadd.f32 0.0, %v1092
    %v1094 = vpop.f32.mrb[0].mxu0
    %1095 = vmatprep.mubr.f32.mxu0 0.0
    %1096 = vmatmul.mubr.f32.gmra.mrb[0].mxu0 %v486
    %v1097 = vpop.f32.mrb[0].mxu0
    %v1098 = vadd.f32 0.0, %v1097
    %v1099 = vpop.f32.mrb[0].mxu0
    %1100 = vmatprep.mubr.f32.mxu0 0.0
    %1101 = vmatmul.mubr.f32.gmra.mrb[0].mxu0 %v489
    %v1102 = vpop.f32.mrb[0].mxu0
    %v1103 = vadd.f32 0.0, %v1102
    %v1104 = vpop.f32.mrb[0].mxu0
    %1105 = vmatprep.mubr.f32.mxu0 0.0
    %1106 = vmatmul.mubr.f32.gmra.mrb[0].mxu0 %v492
    %v1107 = vpop.f32.mrb[0].mxu0
    %v1108 = vadd.f32 0.0, %v1107
    %v1109 = vpop.f32.mrb[0].mxu0
    %1110 = vdwg.mxu0
    %v1111 = vsub.f32 %v1073, %v599
    %v1112 = vsub.f32 %v1078, %v600
    %v1113 = vsub.f32 %v1083, %v601
    %v1114 = vsub.f32 %v1088, %v602
    %v1115 = vsub.f32 %v1093, %v603
    %v1116 = vsub.f32 %v1098, %v604
    %v1117 = vsub.f32 %v1103, %v605
    %v1118 = vsub.f32 %v1108, %v606
    %s1119 = scalar_lea.vmem %s4, 64
    %v1120 = vld [vmem:[%s1119] sm:$0xff]
    %v1121 = vld [vmem:[%s1119 + $0x8] sm:$0x7f]
    %v1123 = vsel %vm204, %v1111, 0
    %v1126 = vsel %vm204, %v1112, 0
    %v1129 = vsel %vm204, %v1113, 0
    %v1132 = vsel %vm204, %v1114, 0
    %v1135 = vsel %vm204, %v1115, 0
    %v1138 = vsel %vm204, %v1116, 0
    %v1141 = vsel %vm204, %v1117, 0
    %v1144 = vsel %vm204, %v1118, 0
    %v1147 = vsel %vm229, %v1121, 0
    %1149 = vmatprep.subr.mxu0 0.0
    %1150 = vmatpush1.msra.mxu0 %v1120
    %1151 = vmatprep.subr.mxu0 0.0
    %1152 = vmatpush1.msra.mxu0 %v1147
    %1153 = vmatprep.subr.mxu0 0.0
    %1154 = vmatpush1.msra.mxu0 0.0
    %1155 = vmatprep.subr.mxu0 0.0
    %1156 = vmatpush1.msra.mxu0 0.0
    %1157 = vmatprep.subr.mxu0 0.0
    %1158 = vmatpush1.msra.mxu0 0.0
    %1159 = vmatprep.subr.mxu0 0.0
    %1160 = vmatpush1.msra.mxu0 0.0
    %1161 = vmatprep.subr.mxu0 0.0
    %1162 = vmatpush1.msra.mxu0 0.0
    %1163 = vmatprep.subr.mxu0 0.0
    %1164 = vmatpush1.msra.mxu0 0.0
    %1165 = vmatprep.subr.mxu0 0.0
    %1166 = vmatpush1.msra.mxu0 0.0
    %1167 = vmatprep.subr.mxu0 0.0
    %1168 = vmatpush1.msra.mxu0 0.0
    %1169 = vmatprep.subr.mxu0 0.0
    %1170 = vmatpush1.msra.mxu0 0.0
    %1171 = vmatprep.subr.mxu0 0.0
    %1172 = vmatpush1.msra.mxu0 0.0
    %1173 = vmatprep.subr.mxu0 0.0
    %1174 = vmatpush1.msra.mxu0 0.0
    %1175 = vmatprep.subr.mxu0 0.0
    %1176 = vmatpush1.msra.mxu0 0.0
    %1177 = vmatprep.subr.mxu0 0.0
    %1178 = vmatpush1.msra.mxu0 0.0
    %1179 = vmatprep.subr.mxu0 0.0
    %1180 = vmatpush1.msra.mxu0 0.0
    %1181 = vmatprep.subr.mxu0 0.0
    %1182 = vmatpush1.msra.mxu0 0.0
    %1183 = vmatprep.subr.mxu0 0.0
    %1184 = vmatpush1.msra.mxu0 0.0
    %1185 = vmatprep.subr.mxu0 0.0
    %1186 = vmatpush1.msra.mxu0 0.0
    %1187 = vmatprep.subr.mxu0 0.0
    %1188 = vmatpush1.msra.mxu0 0.0
    %1189 = vmatprep.subr.mxu0 0.0
    %1190 = vmatpush1.msra.mxu0 0.0
    %1191 = vmatprep.subr.mxu0 0.0
    %1192 = vmatpush1.msra.mxu0 0.0
    %1193 = vmatprep.subr.mxu0 0.0
    %1194 = vmatpush1.msra.mxu0 0.0
    %1195 = vmatprep.subr.mxu0 0.0
    %1196 = vmatpush1.msra.mxu0 0.0
    %1197 = vmatprep.subr.mxu0 0.0
    %1198 = vmatpush1.msra.mxu0 0.0
    %1199 = vmatprep.subr.mxu0 0.0
    %1200 = vmatpush1.msra.mxu0 0.0
    %1201 = vmatprep.subr.mxu0 0.0
    %1202 = vmatpush1.msra.mxu0 0.0
    %1203 = vmatprep.subr.mxu0 0.0
    %1204 = vmatpush1.msra.mxu0 0.0
    %1205 = vmatprep.subr.mxu0 0.0
    %1206 = vmatpush1.msra.mxu0 0.0
    %1207 = vmatprep.subr.mxu0 0.0
    %1208 = vmatpush1.msra.mxu0 0.0
    %1209 = vmatprep.subr.mxu0 0.0
    %1210 = vmatpush1.msra.mxu0 0.0
    %1211 = vmatprep.subr.mxu0 0.0
    %1212 = vmatpush1.msra.mxu0 0.0
    %1213 = vmatprep.mubr.f32.mxu0 0.0
    %1214 = vmatmul.mubr.f32.gmra.mrb[0].mxu0 %v1123
    %v1215 = vpop.f32.mrb[0].mxu0
    %v1216 = vadd.f32 0.0, %v1215
    %v1217 = vpop.f32.mrb[0].mxu0
    %1218 = vmatprep.mubr.f32.mxu0 0.0
    %1219 = vmatmul.mubr.f32.gmra.mrb[0].mxu0 %v1126
    %v1220 = vpop.f32.mrb[0].mxu0
    %v1221 = vadd.f32 0.0, %v1220
    %v1222 = vpop.f32.mrb[0].mxu0
    %1223 = vmatprep.mubr.f32.mxu0 0.0
    %1224 = vmatmul.mubr.f32.gmra.mrb[0].mxu0 %v1129
    %v1225 = vpop.f32.mrb[0].mxu0
    %v1226 = vadd.f32 0.0, %v1225
    %v1227 = vpop.f32.mrb[0].mxu0
    %1228 = vmatprep.mubr.f32.mxu0 0.0
    %1229 = vmatmul.mubr.f32.gmra.mrb[0].mxu0 %v1132
    %v1230 = vpop.f32.mrb[0].mxu0
    %v1231 = vadd.f32 0.0, %v1230
    %v1232 = vpop.f32.mrb[0].mxu0
    %1233 = vmatprep.mubr.f32.mxu0 0.0
    %1234 = vmatmul.mubr.f32.gmra.mrb[0].mxu0 %v1135
    %v1235 = vpop.f32.mrb[0].mxu0
    %v1236 = vadd.f32 0.0, %v1235
    %v1237 = vpop.f32.mrb[0].mxu0
    %1238 = vmatprep.mubr.f32.mxu0 0.0
    %1239 = vmatmul.mubr.f32.gmra.mrb[0].mxu0 %v1138
    %v1240 = vpop.f32.mrb[0].mxu0
    %v1241 = vadd.f32 0.0, %v1240
    %v1242 = vpop.f32.mrb[0].mxu0
    %1243 = vmatprep.mubr.f32.mxu0 0.0
    %1244 = vmatmul.mubr.f32.gmra.mrb[0].mxu0 %v1141
    %v1245 = vpop.f32.mrb[0].mxu0
    %v1246 = vadd.f32 0.0, %v1245
    %v1247 = vpop.f32.mrb[0].mxu0
    %1248 = vmatprep.mubr.f32.mxu0 0.0
    %1249 = vmatmul.mubr.f32.gmra.mrb[0].mxu0 %v1144
    %v1250 = vpop.f32.mrb[0].mxu0
    %v1251 = vadd.f32 0.0, %v1250
    %v1252 = vpop.f32.mrb[0].mxu0
    %1253 = vdwg.mxu0
    %v1254 = vadd.f32 %v998, %v1216
    %v1255 = vadd.f32 %v999, %v1221
    %v1256 = vadd.f32 %v1000, %v1226
    %v1257 = vadd.f32 %v1001, %v1231
    %v1258 = vadd.f32 %v1002, %v1236
    %v1259 = vadd.f32 %v1003, %v1241
    %v1260 = vadd.f32 %v1004, %v1246
    %v1261 = vadd.f32 %v1005, %v1251
    %1262 = vmatprep.subr.mxu0 0.0
    %1263 = vmatpush1.msra.mxu0 %v1111
    %1264 = vmatprep.subr.mxu0 0.0
    %1265 = vmatpush1.msra.mxu0 %v1112
    %1266 = vmatprep.subr.mxu0 0.0
    %1267 = vmatpush1.msra.mxu0 %v1113
    %1268 = vmatprep.subr.mxu0 0.0
    %1269 = vmatpush1.msra.mxu0 %v1114
    %1270 = vmatprep.subr.mxu0 0.0
    %1271 = vmatpush1.msra.mxu0 %v1115
    %1272 = vmatprep.subr.mxu0 0.0
    %1273 = vmatpush1.msra.mxu0 %v1116
    %1274 = vmatprep.subr.mxu0 0.0
    %1275 = vmatpush1.msra.mxu0 %v1117
    %1276 = vmatprep.subr.mxu0 0.0
    %1277 = vmatpush1.msra.mxu0 %v1118
    %1278 = vmatprep.subr.mxu0 0.0
    %1279 = vmatpush1.msra.mxu0 0.0
    %1280 = vmatprep.subr.mxu0 0.0
    %1281 = vmatpush1.msra.mxu0 0.0
    %1282 = vmatprep.subr.mxu0 0.0
    %1283 = vmatpush1.msra.mxu0 0.0
    %1284 = vmatprep.subr.mxu0 0.0
    %1285 = vmatpush1.msra.mxu0 0.0
    %1286 = vmatprep.subr.mxu0 0.0
    %1287 = vmatpush1.msra.mxu0 0.0
    %1288 = vmatprep.subr.mxu0 0.0
    %1289 = vmatpush1.msra.mxu0 0.0
    %1290 = vmatprep.subr.mxu0 0.0
    %1291 = vmatpush1.msra.mxu0 0.0
    %1292 = vmatprep.subr.mxu0 0.0
    %1293 = vmatpush1.msra.mxu0 0.0
    %1294 = vmatprep.subr.mxu0 0.0
    %1295 = vmatpush1.msra.mxu0 0.0
    %1296 = vmatprep.subr.mxu0 0.0
    %1297 = vmatpush1.msra.mxu0 0.0
    %1298 = vmatprep.subr.mxu0 0.0
    %1299 = vmatpush1.msra.mxu0 0.0
    %1300 = vmatprep.subr.mxu0 0.0
    %1301 = vmatpush1.msra.mxu0 0.0
    %1302 = vmatprep.subr.mxu0 0.0
    %1303 = vmatpush1.msra.mxu0 0.0
    %1304 = vmatprep.subr.mxu0 0.0
    %1305 = vmatpush1.msra.mxu0 0.0
    %1306 = vmatprep.subr.mxu0 0.0
    %1307 = vmatpush1.msra.mxu0 0.0
    %1308 = vmatprep.subr.mxu0 0.0
    %1309 = vmatpush1.msra.mxu0 0.0
    %1310 = vmatprep.subr.mxu0 0.0
    %1311 = vmatpush1.msra.mxu0 0.0
    %1312 = vmatprep.subr.mxu0 0.0
    %1313 = vmatpush1.msra.mxu0 0.0
    %1314 = vmatprep.subr.mxu0 0.0
    %1315 = vmatpush1.msra.mxu0 0.0
    %1316 = vmatprep.subr.mxu0 0.0
    %1317 = vmatpush1.msra.mxu0 0.0
    %1318 = vmatprep.subr.mxu0 0.0
    %1319 = vmatpush1.msra.mxu0 0.0
    %1320 = vmatprep.subr.mxu0 0.0
    %1321 = vmatpush1.msra.mxu0 0.0
    %1322 = vmatprep.subr.mxu0 0.0
    %1323 = vmatpush1.msra.mxu0 0.0
    %1324 = vmatprep.subr.mxu0 0.0
    %1325 = vmatpush1.msra.mxu0 0.0
    %1326 = vmatprep.mubr.f32.mxu0 0.0
    %1327 = vmatmul.mubr.f32.gmra.mrb[0].mxu0 %v471
    %v1328 = vpop.f32.mrb[0].mxu0
    %v1329 = vadd.f32 0.0, %v1328
    %v1330 = vpop.f32.mrb[0].mxu0
    %1331 = vmatprep.mubr.f32.mxu0 0.0
    %1332 = vmatmul.mubr.f32.gmra.mrb[0].mxu0 %v474
    %v1333 = vpop.f32.mrb[0].mxu0
    %v1334 = vadd.f32 0.0, %v1333
    %v1335 = vpop.f32.mrb[0].mxu0
    %1336 = vmatprep.mubr.f32.mxu0 0.0
    %1337 = vmatmul.mubr.f32.gmra.mrb[0].mxu0 %v477
    %v1338 = vpop.f32.mrb[0].mxu0
    %v1339 = vadd.f32 0.0, %v1338
    %v1340 = vpop.f32.mrb[0].mxu0
    %1341 = vmatprep.mubr.f32.mxu0 0.0
    %1342 = vmatmul.mubr.f32.gmra.mrb[0].mxu0 %v480
    %v1343 = vpop.f32.mrb[0].mxu0
    %v1344 = vadd.f32 0.0, %v1343
    %v1345 = vpop.f32.mrb[0].mxu0
    %1346 = vmatprep.mubr.f32.mxu0 0.0
    %1347 = vmatmul.mubr.f32.gmra.mrb[0].mxu0 %v483
    %v1348 = vpop.f32.mrb[0].mxu0
    %v1349 = vadd.f32 0.0, %v1348
    %v1350 = vpop.f32.mrb[0].mxu0
    %1351 = vmatprep.mubr.f32.mxu0 0.0
    %1352 = vmatmul.mubr.f32.gmra.mrb[0].mxu0 %v486
    %v1353 = vpop.f32.mrb[0].mxu0
    %v1354 = vadd.f32 0.0, %v1353
    %v1355 = vpop.f32.mrb[0].mxu0
    %1356 = vmatprep.mubr.f32.mxu0 0.0
    %1357 = vmatmul.mubr.f32.gmra.mrb[0].mxu0 %v489
    %v1358 = vpop.f32.mrb[0].mxu0
    %v1359 = vadd.f32 0.0, %v1358
    %v1360 = vpop.f32.mrb[0].mxu0
    %1361 = vmatprep.mubr.f32.mxu0 0.0
    %1362 = vmatmul.mubr.f32.gmra.mrb[0].mxu0 %v492
    %v1363 = vpop.f32.mrb[0].mxu0
    %v1364 = vadd.f32 0.0, %v1363
    %v1365 = vpop.f32.mrb[0].mxu0
    %1366 = vdwg.mxu0
    %v1367 = vsub.f32 %v1329, %v855
    %v1368 = vsub.f32 %v1334, %v856
    %v1369 = vsub.f32 %v1339, %v857
    %v1370 = vsub.f32 %v1344, %v858
    %v1371 = vsub.f32 %v1349, %v859
    %v1372 = vsub.f32 %v1354, %v860
    %v1373 = vsub.f32 %v1359, %v861
    %v1374 = vsub.f32 %v1364, %v862
    %s1375 = scalar_lea.vmem %s4, 80
    %v1376 = vld [vmem:[%s1375] sm:$0xff]
    %v1377 = vld [vmem:[%s1375 + $0x8] sm:$0x7f]
    %v1379 = vsel %vm204, %v1367, 0
    %v1382 = vsel %vm204, %v1368, 0
    %v1385 = vsel %vm204, %v1369, 0
    %v1388 = vsel %vm204, %v1370, 0
    %v1391 = vsel %vm204, %v1371, 0
    %v1394 = vsel %vm204, %v1372, 0
    %v1397 = vsel %vm204, %v1373, 0
    %v1400 = vsel %vm204, %v1374, 0
    %v1403 = vsel %vm229, %v1377, 0
    %1405 = vmatprep.subr.mxu0 0.0
    %1406 = vmatpush1.msra.mxu0 %v1376
    %1407 = vmatprep.subr.mxu0 0.0
    %1408 = vmatpush1.msra.mxu0 %v1403
    %1409 = vmatprep.subr.mxu0 0.0
    %1410 = vmatpush1.msra.mxu0 0.0
    %1411 = vmatprep.subr.mxu0 0.0
    %1412 = vmatpush1.msra.mxu0 0.0
    %1413 = vmatprep.subr.mxu0 0.0
    %1414 = vmatpush1.msra.mxu0 0.0
    %1415 = vmatprep.subr.mxu0 0.0
    %1416 = vmatpush1.msra.mxu0 0.0
    %1417 = vmatprep.subr.mxu0 0.0
    %1418 = vmatpush1.msra.mxu0 0.0
    %1419 = vmatprep.subr.mxu0 0.0
    %1420 = vmatpush1.msra.mxu0 0.0
    %1421 = vmatprep.subr.mxu0 0.0
    %1422 = vmatpush1.msra.mxu0 0.0
    %1423 = vmatprep.subr.mxu0 0.0
    %1424 = vmatpush1.msra.mxu0 0.0
    %1425 = vmatprep.subr.mxu0 0.0
    %1426 = vmatpush1.msra.mxu0 0.0
    %1427 = vmatprep.subr.mxu0 0.0
    %1428 = vmatpush1.msra.mxu0 0.0
    %1429 = vmatprep.subr.mxu0 0.0
    %1430 = vmatpush1.msra.mxu0 0.0
    %1431 = vmatprep.subr.mxu0 0.0
    %1432 = vmatpush1.msra.mxu0 0.0
    %1433 = vmatprep.subr.mxu0 0.0
    %1434 = vmatpush1.msra.mxu0 0.0
    %1435 = vmatprep.subr.mxu0 0.0
    %1436 = vmatpush1.msra.mxu0 0.0
    %1437 = vmatprep.subr.mxu0 0.0
    %1438 = vmatpush1.msra.mxu0 0.0
    %1439 = vmatprep.subr.mxu0 0.0
    %1440 = vmatpush1.msra.mxu0 0.0
    %1441 = vmatprep.subr.mxu0 0.0
    %1442 = vmatpush1.msra.mxu0 0.0
    %1443 = vmatprep.subr.mxu0 0.0
    %1444 = vmatpush1.msra.mxu0 0.0
    %1445 = vmatprep.subr.mxu0 0.0
    %1446 = vmatpush1.msra.mxu0 0.0
    %1447 = vmatprep.subr.mxu0 0.0
    %1448 = vmatpush1.msra.mxu0 0.0
    %1449 = vmatprep.subr.mxu0 0.0
    %1450 = vmatpush1.msra.mxu0 0.0
    %1451 = vmatprep.subr.mxu0 0.0
    %1452 = vmatpush1.msra.mxu0 0.0
    %1453 = vmatprep.subr.mxu0 0.0
    %1454 = vmatpush1.msra.mxu0 0.0
    %1455 = vmatprep.subr.mxu0 0.0
    %1456 = vmatpush1.msra.mxu0 0.0
    %1457 = vmatprep.subr.mxu0 0.0
    %1458 = vmatpush1.msra.mxu0 0.0
    %1459 = vmatprep.subr.mxu0 0.0
    %1460 = vmatpush1.msra.mxu0 0.0
    %1461 = vmatprep.subr.mxu0 0.0
    %1462 = vmatpush1.msra.mxu0 0.0
    %1463 = vmatprep.subr.mxu0 0.0
    %1464 = vmatpush1.msra.mxu0 0.0
    %1465 = vmatprep.subr.mxu0 0.0
    %1466 = vmatpush1.msra.mxu0 0.0
    %1467 = vmatprep.subr.mxu0 0.0
    %1468 = vmatpush1.msra.mxu0 0.0
    %1469 = vmatprep.mubr.f32.mxu0 0.0
    %1470 = vmatmul.mubr.f32.gmra.mrb[0].mxu0 %v1379
    %v1471 = vpop.f32.mrb[0].mxu0
    %v1472 = vadd.f32 0.0, %v1471
    %v1473 = vpop.f32.mrb[0].mxu0
    %1474 = vmatprep.mubr.f32.mxu0 0.0
    %1475 = vmatmul.mubr.f32.gmra.mrb[0].mxu0 %v1382
    %v1476 = vpop.f32.mrb[0].mxu0
    %v1477 = vadd.f32 0.0, %v1476
    %v1478 = vpop.f32.mrb[0].mxu0
    %1479 = vmatprep.mubr.f32.mxu0 0.0
    %1480 = vmatmul.mubr.f32.gmra.mrb[0].mxu0 %v1385
    %v1481 = vpop.f32.mrb[0].mxu0
    %v1482 = vadd.f32 0.0, %v1481
    %v1483 = vpop.f32.mrb[0].mxu0
    %1484 = vmatprep.mubr.f32.mxu0 0.0
    %1485 = vmatmul.mubr.f32.gmra.mrb[0].mxu0 %v1388
    %v1486 = vpop.f32.mrb[0].mxu0
    %v1487 = vadd.f32 0.0, %v1486
    %v1488 = vpop.f32.mrb[0].mxu0
    %1489 = vmatprep.mubr.f32.mxu0 0.0
    %1490 = vmatmul.mubr.f32.gmra.mrb[0].mxu0 %v1391
    %v1491 = vpop.f32.mrb[0].mxu0
    %v1492 = vadd.f32 0.0, %v1491
    %v1493 = vpop.f32.mrb[0].mxu0
    %1494 = vmatprep.mubr.f32.mxu0 0.0
    %1495 = vmatmul.mubr.f32.gmra.mrb[0].mxu0 %v1394
    %v1496 = vpop.f32.mrb[0].mxu0
    %v1497 = vadd.f32 0.0, %v1496
    %v1498 = vpop.f32.mrb[0].mxu0
    %1499 = vmatprep.mubr.f32.mxu0 0.0
    %1500 = vmatmul.mubr.f32.gmra.mrb[0].mxu0 %v1397
    %v1501 = vpop.f32.mrb[0].mxu0
    %v1502 = vadd.f32 0.0, %v1501
    %v1503 = vpop.f32.mrb[0].mxu0
    %1504 = vmatprep.mubr.f32.mxu0 0.0
    %1505 = vmatmul.mubr.f32.gmra.mrb[0].mxu0 %v1400
    %v1506 = vpop.f32.mrb[0].mxu0
    %v1507 = vadd.f32 0.0, %v1506
    %v1508 = vpop.f32.mrb[0].mxu0
    %1509 = vdwg.mxu0
    %v1510 = vadd.f32 %v1254, %v1472
    %v1511 = vadd.f32 %v1255, %v1477
    %v1512 = vadd.f32 %v1256, %v1482
    %v1513 = vadd.f32 %v1257, %v1487
    %v1514 = vadd.f32 %v1258, %v1492
    %v1515 = vadd.f32 %v1259, %v1497
    %v1516 = vadd.f32 %v1260, %v1502
    %v1517 = vadd.f32 %v1261, %v1507
    %1518 = vmatprep.subr.mxu0 0.0
    %1519 = vmatpush1.msra.mxu0 %v1367
    %1520 = vmatprep.subr.mxu0 0.0
    %1521 = vmatpush1.msra.mxu0 %v1368
    %1522 = vmatprep.subr.mxu0 0.0
    %1523 = vmatpush1.msra.mxu0 %v1369
    %1524 = vmatprep.subr.mxu0 0.0
    %1525 = vmatpush1.msra.mxu0 %v1370
    %1526 = vmatprep.subr.mxu0 0.0
    %1527 = vmatpush1.msra.mxu0 %v1371
    %1528 = vmatprep.subr.mxu0 0.0
    %1529 = vmatpush1.msra.mxu0 %v1372
    %1530 = vmatprep.subr.mxu0 0.0
    %1531 = vmatpush1.msra.mxu0 %v1373
    %1532 = vmatprep.subr.mxu0 0.0
    %1533 = vmatpush1.msra.mxu0 %v1374
    %1534 = vmatprep.subr.mxu0 0.0
    %1535 = vmatpush1.msra.mxu0 0.0
    %1536 = vmatprep.subr.mxu0 0.0
    %1537 = vmatpush1.msra.mxu0 0.0
    %1538 = vmatprep.subr.mxu0 0.0
    %1539 = vmatpush1.msra.mxu0 0.0
    %1540 = vmatprep.subr.mxu0 0.0
    %1541 = vmatpush1.msra.mxu0 0.0
    %1542 = vmatprep.subr.mxu0 0.0
    %1543 = vmatpush1.msra.mxu0 0.0
    %1544 = vmatprep.subr.mxu0 0.0
    %1545 = vmatpush1.msra.mxu0 0.0
    %1546 = vmatprep.subr.mxu0 0.0
    %1547 = vmatpush1.msra.mxu0 0.0
    %1548 = vmatprep.subr.mxu0 0.0
    %1549 = vmatpush1.msra.mxu0 0.0
    %1550 = vmatprep.subr.mxu0 0.0
    %1551 = vmatpush1.msra.mxu0 0.0
    %1552 = vmatprep.subr.mxu0 0.0
    %1553 = vmatpush1.msra.mxu0 0.0
    %1554 = vmatprep.subr.mxu0 0.0
    %1555 = vmatpush1.msra.mxu0 0.0
    %1556 = vmatprep.subr.mxu0 0.0
    %1557 = vmatpush1.msra.mxu0 0.0
    %1558 = vmatprep.subr.mxu0 0.0
    %1559 = vmatpush1.msra.mxu0 0.0
    %1560 = vmatprep.subr.mxu0 0.0
    %1561 = vmatpush1.msra.mxu0 0.0
    %1562 = vmatprep.subr.mxu0 0.0
    %1563 = vmatpush1.msra.mxu0 0.0
    %1564 = vmatprep.subr.mxu0 0.0
    %1565 = vmatpush1.msra.mxu0 0.0
    %1566 = vmatprep.subr.mxu0 0.0
    %1567 = vmatpush1.msra.mxu0 0.0
    %1568 = vmatprep.subr.mxu0 0.0
    %1569 = vmatpush1.msra.mxu0 0.0
    %1570 = vmatprep.subr.mxu0 0.0
    %1571 = vmatpush1.msra.mxu0 0.0
    %1572 = vmatprep.subr.mxu0 0.0
    %1573 = vmatpush1.msra.mxu0 0.0
    %1574 = vmatprep.subr.mxu0 0.0
    %1575 = vmatpush1.msra.mxu0 0.0
    %1576 = vmatprep.subr.mxu0 0.0
    %1577 = vmatpush1.msra.mxu0 0.0
    %1578 = vmatprep.subr.mxu0 0.0
    %1579 = vmatpush1.msra.mxu0 0.0
    %1580 = vmatprep.subr.mxu0 0.0
    %1581 = vmatpush1.msra.mxu0 0.0
    %1582 = vmatprep.mubr.f32.mxu0 0.0
    %1583 = vmatmul.mubr.f32.gmra.mrb[0].mxu0 %v471
    %v1584 = vpop.f32.mrb[0].mxu0
    %v1585 = vadd.f32 0.0, %v1584
    %v1586 = vpop.f32.mrb[0].mxu0
    %1587 = vmatprep.mubr.f32.mxu0 0.0
    %1588 = vmatmul.mubr.f32.gmra.mrb[0].mxu0 %v474
    %v1589 = vpop.f32.mrb[0].mxu0
    %v1590 = vadd.f32 0.0, %v1589
    %v1591 = vpop.f32.mrb[0].mxu0
    %1592 = vmatprep.mubr.f32.mxu0 0.0
    %1593 = vmatmul.mubr.f32.gmra.mrb[0].mxu0 %v477
    %v1594 = vpop.f32.mrb[0].mxu0
    %v1595 = vadd.f32 0.0, %v1594
    %v1596 = vpop.f32.mrb[0].mxu0
    %1597 = vmatprep.mubr.f32.mxu0 0.0
    %1598 = vmatmul.mubr.f32.gmra.mrb[0].mxu0 %v480
    %v1599 = vpop.f32.mrb[0].mxu0
    %v1600 = vadd.f32 0.0, %v1599
    %v1601 = vpop.f32.mrb[0].mxu0
    %1602 = vmatprep.mubr.f32.mxu0 0.0
    %1603 = vmatmul.mubr.f32.gmra.mrb[0].mxu0 %v483
    %v1604 = vpop.f32.mrb[0].mxu0
    %v1605 = vadd.f32 0.0, %v1604
    %v1606 = vpop.f32.mrb[0].mxu0
    %1607 = vmatprep.mubr.f32.mxu0 0.0
    %1608 = vmatmul.mubr.f32.gmra.mrb[0].mxu0 %v486
    %v1609 = vpop.f32.mrb[0].mxu0
    %v1610 = vadd.f32 0.0, %v1609
    %v1611 = vpop.f32.mrb[0].mxu0
    %1612 = vmatprep.mubr.f32.mxu0 0.0
    %1613 = vmatmul.mubr.f32.gmra.mrb[0].mxu0 %v489
    %v1614 = vpop.f32.mrb[0].mxu0
    %v1615 = vadd.f32 0.0, %v1614
    %v1616 = vpop.f32.mrb[0].mxu0
    %1617 = vmatprep.mubr.f32.mxu0 0.0
    %1618 = vmatmul.mubr.f32.gmra.mrb[0].mxu0 %v492
    %v1619 = vpop.f32.mrb[0].mxu0
    %v1620 = vadd.f32 0.0, %v1619
    %v1621 = vpop.f32.mrb[0].mxu0
    %1622 = vdwg.mxu0
    %v1623 = vsub.f32 %v1585, %v1111
    %v1624 = vsub.f32 %v1590, %v1112
    %v1625 = vsub.f32 %v1595, %v1113
    %v1626 = vsub.f32 %v1600, %v1114
    %v1627 = vsub.f32 %v1605, %v1115
    %v1628 = vsub.f32 %v1610, %v1116
    %v1629 = vsub.f32 %v1615, %v1117
    %v1630 = vsub.f32 %v1620, %v1118
    %s1631 = scalar_lea.vmem %s4, 96
    %v1632 = vld [vmem:[%s1631] sm:$0xff]
    %v1633 = vld [vmem:[%s1631 + $0x8] sm:$0x7f]
    %v1635 = vsel %vm204, %v1623, 0
    %v1638 = vsel %vm204, %v1624, 0
    %v1641 = vsel %vm204, %v1625, 0
    %v1644 = vsel %vm204, %v1626, 0
    %v1647 = vsel %vm204, %v1627, 0
    %v1650 = vsel %vm204, %v1628, 0
    %v1653 = vsel %vm204, %v1629, 0
    %v1656 = vsel %vm204, %v1630, 0
    %v1659 = vsel %vm229, %v1633, 0
    %1661 = vmatprep.subr.mxu0 0.0
    %1662 = vmatpush1.msra.mxu0 %v1632
    %1663 = vmatprep.subr.mxu0 0.0
    %1664 = vmatpush1.msra.mxu0 %v1659
    %1665 = vmatprep.subr.mxu0 0.0
    %1666 = vmatpush1.msra.mxu0 0.0
    %1667 = vmatprep.subr.mxu0 0.0
    %1668 = vmatpush1.msra.mxu0 0.0
    %1669 = vmatprep.subr.mxu0 0.0
    %1670 = vmatpush1.msra.mxu0 0.0
    %1671 = vmatprep.subr.mxu0 0.0
    %1672 = vmatpush1.msra.mxu0 0.0
    %1673 = vmatprep.subr.mxu0 0.0
    %1674 = vmatpush1.msra.mxu0 0.0
    %1675 = vmatprep.subr.mxu0 0.0
    %1676 = vmatpush1.msra.mxu0 0.0
    %1677 = vmatprep.subr.mxu0 0.0
    %1678 = vmatpush1.msra.mxu0 0.0
    %1679 = vmatprep.subr.mxu0 0.0
    %1680 = vmatpush1.msra.mxu0 0.0
    %1681 = vmatprep.subr.mxu0 0.0
    %1682 = vmatpush1.msra.mxu0 0.0
    %1683 = vmatprep.subr.mxu0 0.0
    %1684 = vmatpush1.msra.mxu0 0.0
    %1685 = vmatprep.subr.mxu0 0.0
    %1686 = vmatpush1.msra.mxu0 0.0
    %1687 = vmatprep.subr.mxu0 0.0
    %1688 = vmatpush1.msra.mxu0 0.0
    %1689 = vmatprep.subr.mxu0 0.0
    %1690 = vmatpush1.msra.mxu0 0.0
    %1691 = vmatprep.subr.mxu0 0.0
    %1692 = vmatpush1.msra.mxu0 0.0
    %1693 = vmatprep.subr.mxu0 0.0
    %1694 = vmatpush1.msra.mxu0 0.0
    %1695 = vmatprep.subr.mxu0 0.0
    %1696 = vmatpush1.msra.mxu0 0.0
    %1697 = vmatprep.subr.mxu0 0.0
    %1698 = vmatpush1.msra.mxu0 0.0
    %1699 = vmatprep.subr.mxu0 0.0
    %1700 = vmatpush1.msra.mxu0 0.0
    %1701 = vmatprep.subr.mxu0 0.0
    %1702 = vmatpush1.msra.mxu0 0.0
    %1703 = vmatprep.subr.mxu0 0.0
    %1704 = vmatpush1.msra.mxu0 0.0
    %1705 = vmatprep.subr.mxu0 0.0
    %1706 = vmatpush1.msra.mxu0 0.0
    %1707 = vmatprep.subr.mxu0 0.0
    %1708 = vmatpush1.msra.mxu0 0.0
    %1709 = vmatprep.subr.mxu0 0.0
    %1710 = vmatpush1.msra.mxu0 0.0
    %1711 = vmatprep.subr.mxu0 0.0
    %1712 = vmatpush1.msra.mxu0 0.0
    %1713 = vmatprep.subr.mxu0 0.0
    %1714 = vmatpush1.msra.mxu0 0.0
    %1715 = vmatprep.subr.mxu0 0.0
    %1716 = vmatpush1.msra.mxu0 0.0
    %1717 = vmatprep.subr.mxu0 0.0
    %1718 = vmatpush1.msra.mxu0 0.0
    %1719 = vmatprep.subr.mxu0 0.0
    %1720 = vmatpush1.msra.mxu0 0.0
    %1721 = vmatprep.subr.mxu0 0.0
    %1722 = vmatpush1.msra.mxu0 0.0
    %1723 = vmatprep.subr.mxu0 0.0
    %1724 = vmatpush1.msra.mxu0 0.0
    %1725 = vmatprep.mubr.f32.mxu0 0.0
    %1726 = vmatmul.mubr.f32.gmra.mrb[0].mxu0 %v1635
    %v1727 = vpop.f32.mrb[0].mxu0
    %v1728 = vadd.f32 0.0, %v1727
    %v1729 = vpop.f32.mrb[0].mxu0
    %1730 = vmatprep.mubr.f32.mxu0 0.0
    %1731 = vmatmul.mubr.f32.gmra.mrb[0].mxu0 %v1638
    %v1732 = vpop.f32.mrb[0].mxu0
    %v1733 = vadd.f32 0.0, %v1732
    %v1734 = vpop.f32.mrb[0].mxu0
    %1735 = vmatprep.mubr.f32.mxu0 0.0
    %1736 = vmatmul.mubr.f32.gmra.mrb[0].mxu0 %v1641
    %v1737 = vpop.f32.mrb[0].mxu0
    %v1738 = vadd.f32 0.0, %v1737
    %v1739 = vpop.f32.mrb[0].mxu0
    %1740 = vmatprep.mubr.f32.mxu0 0.0
    %1741 = vmatmul.mubr.f32.gmra.mrb[0].mxu0 %v1644
    %v1742 = vpop.f32.mrb[0].mxu0
    %v1743 = vadd.f32 0.0, %v1742
    %v1744 = vpop.f32.mrb[0].mxu0
    %1745 = vmatprep.mubr.f32.mxu0 0.0
    %1746 = vmatmul.mubr.f32.gmra.mrb[0].mxu0 %v1647
    %v1747 = vpop.f32.mrb[0].mxu0
    %v1748 = vadd.f32 0.0, %v1747
    %v1749 = vpop.f32.mrb[0].mxu0
    %1750 = vmatprep.mubr.f32.mxu0 0.0
    %1751 = vmatmul.mubr.f32.gmra.mrb[0].mxu0 %v1650
    %v1752 = vpop.f32.mrb[0].mxu0
    %v1753 = vadd.f32 0.0, %v1752
    %v1754 = vpop.f32.mrb[0].mxu0
    %1755 = vmatprep.mubr.f32.mxu0 0.0
    %1756 = vmatmul.mubr.f32.gmra.mrb[0].mxu0 %v1653
    %v1757 = vpop.f32.mrb[0].mxu0
    %v1758 = vadd.f32 0.0, %v1757
    %v1759 = vpop.f32.mrb[0].mxu0
    %1760 = vmatprep.mubr.f32.mxu0 0.0
    %1761 = vmatmul.mubr.f32.gmra.mrb[0].mxu0 %v1656
    %v1762 = vpop.f32.mrb[0].mxu0
    %v1763 = vadd.f32 0.0, %v1762
    %v1764 = vpop.f32.mrb[0].mxu0
    %1765 = vdwg.mxu0
    %v1766 = vadd.f32 %v1510, %v1728
    %v1767 = vadd.f32 %v1511, %v1733
    %v1768 = vadd.f32 %v1512, %v1738
    %v1769 = vadd.f32 %v1513, %v1743
    %v1770 = vadd.f32 %v1514, %v1748
    %v1771 = vadd.f32 %v1515, %v1753
    %v1772 = vadd.f32 %v1516, %v1758
    %v1773 = vadd.f32 %v1517, %v1763
    %1774 = vmatprep.subr.mxu0 0.0
    %1775 = vmatpush1.msra.mxu0 %v1623
    %1776 = vmatprep.subr.mxu0 0.0
    %1777 = vmatpush1.msra.mxu0 %v1624
    %1778 = vmatprep.subr.mxu0 0.0
    %1779 = vmatpush1.msra.mxu0 %v1625
    %1780 = vmatprep.subr.mxu0 0.0
    %1781 = vmatpush1.msra.mxu0 %v1626
    %1782 = vmatprep.subr.mxu0 0.0
    %1783 = vmatpush1.msra.mxu0 %v1627
    %1784 = vmatprep.subr.mxu0 0.0
    %1785 = vmatpush1.msra.mxu0 %v1628
    %1786 = vmatprep.subr.mxu0 0.0
    %1787 = vmatpush1.msra.mxu0 %v1629
    %1788 = vmatprep.subr.mxu0 0.0
    %1789 = vmatpush1.msra.mxu0 %v1630
    %1790 = vmatprep.subr.mxu0 0.0
    %1791 = vmatpush1.msra.mxu0 0.0
    %1792 = vmatprep.subr.mxu0 0.0
    %1793 = vmatpush1.msra.mxu0 0.0
    %1794 = vmatprep.subr.mxu0 0.0
    %1795 = vmatpush1.msra.mxu0 0.0
    %1796 = vmatprep.subr.mxu0 0.0
    %1797 = vmatpush1.msra.mxu0 0.0
    %1798 = vmatprep.subr.mxu0 0.0
    %1799 = vmatpush1.msra.mxu0 0.0
    %1800 = vmatprep.subr.mxu0 0.0
    %1801 = vmatpush1.msra.mxu0 0.0
    %1802 = vmatprep.subr.mxu0 0.0
    %1803 = vmatpush1.msra.mxu0 0.0
    %1804 = vmatprep.subr.mxu0 0.0
    %1805 = vmatpush1.msra.mxu0 0.0
    %1806 = vmatprep.subr.mxu0 0.0
    %1807 = vmatpush1.msra.mxu0 0.0
    %1808 = vmatprep.subr.mxu0 0.0
    %1809 = vmatpush1.msra.mxu0 0.0
    %1810 = vmatprep.subr.mxu0 0.0
    %1811 = vmatpush1.msra.mxu0 0.0
    %1812 = vmatprep.subr.mxu0 0.0
    %1813 = vmatpush1.msra.mxu0 0.0
    %1814 = vmatprep.subr.mxu0 0.0
    %1815 = vmatpush1.msra.mxu0 0.0
    %1816 = vmatprep.subr.mxu0 0.0
    %1817 = vmatpush1.msra.mxu0 0.0
    %1818 = vmatprep.subr.mxu0 0.0
    %1819 = vmatpush1.msra.mxu0 0.0
    %1820 = vmatprep.subr.mxu0 0.0
    %1821 = vmatpush1.msra.mxu0 0.0
    %1822 = vmatprep.subr.mxu0 0.0
    %1823 = vmatpush1.msra.mxu0 0.0
    %1824 = vmatprep.subr.mxu0 0.0
    %1825 = vmatpush1.msra.mxu0 0.0
    %1826 = vmatprep.subr.mxu0 0.0
    %1827 = vmatpush1.msra.mxu0 0.0
    %1828 = vmatprep.subr.mxu0 0.0
    %1829 = vmatpush1.msra.mxu0 0.0
    %1830 = vmatprep.subr.mxu0 0.0
    %1831 = vmatpush1.msra.mxu0 0.0
    %1832 = vmatprep.subr.mxu0 0.0
    %1833 = vmatpush1.msra.mxu0 0.0
    %1834 = vmatprep.subr.mxu0 0.0
    %1835 = vmatpush1.msra.mxu0 0.0
    %1836 = vmatprep.subr.mxu0 0.0
    %1837 = vmatpush1.msra.mxu0 0.0
    %1838 = vmatprep.mubr.f32.mxu0 0.0
    %1839 = vmatmul.mubr.f32.gmra.mrb[0].mxu0 %v471
    %v1840 = vpop.f32.mrb[0].mxu0
    %v1841 = vadd.f32 0.0, %v1840
    %v1842 = vpop.f32.mrb[0].mxu0
    %1843 = vmatprep.mubr.f32.mxu0 0.0
    %1844 = vmatmul.mubr.f32.gmra.mrb[0].mxu0 %v474
    %v1845 = vpop.f32.mrb[0].mxu0
    %v1846 = vadd.f32 0.0, %v1845
    %v1847 = vpop.f32.mrb[0].mxu0
    %1848 = vmatprep.mubr.f32.mxu0 0.0
    %1849 = vmatmul.mubr.f32.gmra.mrb[0].mxu0 %v477
    %v1850 = vpop.f32.mrb[0].mxu0
    %v1851 = vadd.f32 0.0, %v1850
    %v1852 = vpop.f32.mrb[0].mxu0
    %1853 = vmatprep.mubr.f32.mxu0 0.0
    %1854 = vmatmul.mubr.f32.gmra.mrb[0].mxu0 %v480
    %v1855 = vpop.f32.mrb[0].mxu0
    %v1856 = vadd.f32 0.0, %v1855
    %v1857 = vpop.f32.mrb[0].mxu0
    %1858 = vmatprep.mubr.f32.mxu0 0.0
    %1859 = vmatmul.mubr.f32.gmra.mrb[0].mxu0 %v483
    %v1860 = vpop.f32.mrb[0].mxu0
    %v1861 = vadd.f32 0.0, %v1860
    %v1862 = vpop.f32.mrb[0].mxu0
    %1863 = vmatprep.mubr.f32.mxu0 0.0
    %1864 = vmatmul.mubr.f32.gmra.mrb[0].mxu0 %v486
    %v1865 = vpop.f32.mrb[0].mxu0
    %v1866 = vadd.f32 0.0, %v1865
    %v1867 = vpop.f32.mrb[0].mxu0
    %1868 = vmatprep.mubr.f32.mxu0 0.0
    %1869 = vmatmul.mubr.f32.gmra.mrb[0].mxu0 %v489
    %v1870 = vpop.f32.mrb[0].mxu0
    %v1871 = vadd.f32 0.0, %v1870
    %v1872 = vpop.f32.mrb[0].mxu0
    %1873 = vmatprep.mubr.f32.mxu0 0.0
    %1874 = vmatmul.mubr.f32.gmra.mrb[0].mxu0 %v492
    %v1875 = vpop.f32.mrb[0].mxu0
    %v1876 = vadd.f32 0.0, %v1875
    %v1877 = vpop.f32.mrb[0].mxu0
    %1878 = vdwg.mxu0
    %v1879 = vsub.f32 %v1841, %v1367
    %v1880 = vsub.f32 %v1846, %v1368
    %v1881 = vsub.f32 %v1851, %v1369
    %v1882 = vsub.f32 %v1856, %v1370
    %v1883 = vsub.f32 %v1861, %v1371
    %v1884 = vsub.f32 %v1866, %v1372
    %v1885 = vsub.f32 %v1871, %v1373
    %v1886 = vsub.f32 %v1876, %v1374
    %s1887 = scalar_lea.vmem %s4, 112
    %v1888 = vld [vmem:[%s1887] sm:$0xff]
    %v1889 = vld [vmem:[%s1887 + $0x8] sm:$0x7f]
    %v1891 = vsel %vm204, %v1879, 0
    %v1894 = vsel %vm204, %v1880, 0
    %v1897 = vsel %vm204, %v1881, 0
    %v1900 = vsel %vm204, %v1882, 0
    %v1903 = vsel %vm204, %v1883, 0
    %v1906 = vsel %vm204, %v1884, 0
    %v1909 = vsel %vm204, %v1885, 0
    %v1912 = vsel %vm204, %v1886, 0
    %v1915 = vsel %vm229, %v1889, 0
    %1917 = vmatprep.subr.mxu0 0.0
    %1918 = vmatpush1.msra.mxu0 %v1888
    %1919 = vmatprep.subr.mxu0 0.0
    %1920 = vmatpush1.msra.mxu0 %v1915
    %1921 = vmatprep.subr.mxu0 0.0
    %1922 = vmatpush1.msra.mxu0 0.0
    %1923 = vmatprep.subr.mxu0 0.0
    %1924 = vmatpush1.msra.mxu0 0.0
    %1925 = vmatprep.subr.mxu0 0.0
    %1926 = vmatpush1.msra.mxu0 0.0
    %1927 = vmatprep.subr.mxu0 0.0
    %1928 = vmatpush1.msra.mxu0 0.0
    %1929 = vmatprep.subr.mxu0 0.0
    %1930 = vmatpush1.msra.mxu0 0.0
    %1931 = vmatprep.subr.mxu0 0.0
    %1932 = vmatpush1.msra.mxu0 0.0
    %1933 = vmatprep.subr.mxu0 0.0
    %1934 = vmatpush1.msra.mxu0 0.0
    %1935 = vmatprep.subr.mxu0 0.0
    %1936 = vmatpush1.msra.mxu0 0.0
    %1937 = vmatprep.subr.mxu0 0.0
    %1938 = vmatpush1.msra.mxu0 0.0
    %1939 = vmatprep.subr.mxu0 0.0
    %1940 = vmatpush1.msra.mxu0 0.0
    %1941 = vmatprep.subr.mxu0 0.0
    %1942 = vmatpush1.msra.mxu0 0.0
    %1943 = vmatprep.subr.mxu0 0.0
    %1944 = vmatpush1.msra.mxu0 0.0
    %1945 = vmatprep.subr.mxu0 0.0
    %1946 = vmatpush1.msra.mxu0 0.0
    %1947 = vmatprep.subr.mxu0 0.0
    %1948 = vmatpush1.msra.mxu0 0.0
    %1949 = vmatprep.subr.mxu0 0.0
    %1950 = vmatpush1.msra.mxu0 0.0
    %1951 = vmatprep.subr.mxu0 0.0
    %1952 = vmatpush1.msra.mxu0 0.0
    %1953 = vmatprep.subr.mxu0 0.0
    %1954 = vmatpush1.msra.mxu0 0.0
    %1955 = vmatprep.subr.mxu0 0.0
    %1956 = vmatpush1.msra.mxu0 0.0
    %1957 = vmatprep.subr.mxu0 0.0
    %1958 = vmatpush1.msra.mxu0 0.0
    %1959 = vmatprep.subr.mxu0 0.0
    %1960 = vmatpush1.msra.mxu0 0.0
    %1961 = vmatprep.subr.mxu0 0.0
    %1962 = vmatpush1.msra.mxu0 0.0
    %1963 = vmatprep.subr.mxu0 0.0
    %1964 = vmatpush1.msra.mxu0 0.0
    %1965 = vmatprep.subr.mxu0 0.0
    %1966 = vmatpush1.msra.mxu0 0.0
    %1967 = vmatprep.subr.mxu0 0.0
    %1968 = vmatpush1.msra.mxu0 0.0
    %1969 = vmatprep.subr.mxu0 0.0
    %1970 = vmatpush1.msra.mxu0 0.0
    %1971 = vmatprep.subr.mxu0 0.0
    %1972 = vmatpush1.msra.mxu0 0.0
    %1973 = vmatprep.subr.mxu0 0.0
    %1974 = vmatpush1.msra.mxu0 0.0
    %1975 = vmatprep.subr.mxu0 0.0
    %1976 = vmatpush1.msra.mxu0 0.0
    %1977 = vmatprep.subr.mxu0 0.0
    %1978 = vmatpush1.msra.mxu0 0.0
    %1979 = vmatprep.subr.mxu0 0.0
    %1980 = vmatpush1.msra.mxu0 0.0
    %1981 = vmatprep.mubr.f32.mxu0 0.0
    %1982 = vmatmul.mubr.f32.gmra.mrb[0].mxu0 %v1891
    %v1983 = vpop.f32.mrb[0].mxu0
    %v1984 = vadd.f32 0.0, %v1983
    %v1985 = vpop.f32.mrb[0].mxu0
    %1986 = vmatprep.mubr.f32.mxu0 0.0
    %1987 = vmatmul.mubr.f32.gmra.mrb[0].mxu0 %v1894
    %v1988 = vpop.f32.mrb[0].mxu0
    %v1989 = vadd.f32 0.0, %v1988
    %v1990 = vpop.f32.mrb[0].mxu0
    %1991 = vmatprep.mubr.f32.mxu0 0.0
    %1992 = vmatmul.mubr.f32.gmra.mrb[0].mxu0 %v1897
    %v1993 = vpop.f32.mrb[0].mxu0
    %v1994 = vadd.f32 0.0, %v1993
    %v1995 = vpop.f32.mrb[0].mxu0
    %1996 = vmatprep.mubr.f32.mxu0 0.0
    %1997 = vmatmul.mubr.f32.gmra.mrb[0].mxu0 %v1900
    %v1998 = vpop.f32.mrb[0].mxu0
    %v1999 = vadd.f32 0.0, %v1998
    %v2000 = vpop.f32.mrb[0].mxu0
    %2001 = vmatprep.mubr.f32.mxu0 0.0
    %2002 = vmatmul.mubr.f32.gmra.mrb[0].mxu0 %v1903
    %v2003 = vpop.f32.mrb[0].mxu0
    %v2004 = vadd.f32 0.0, %v2003
    %v2005 = vpop.f32.mrb[0].mxu0
    %2006 = vmatprep.mubr.f32.mxu0 0.0
    %2007 = vmatmul.mubr.f32.gmra.mrb[0].mxu0 %v1906
    %v2008 = vpop.f32.mrb[0].mxu0
    %v2009 = vadd.f32 0.0, %v2008
    %v2010 = vpop.f32.mrb[0].mxu0
    %2011 = vmatprep.mubr.f32.mxu0 0.0
    %2012 = vmatmul.mubr.f32.gmra.mrb[0].mxu0 %v1909
    %v2013 = vpop.f32.mrb[0].mxu0
    %v2014 = vadd.f32 0.0, %v2013
    %v2015 = vpop.f32.mrb[0].mxu0
    %2016 = vmatprep.mubr.f32.mxu0 0.0
    %2017 = vmatmul.mubr.f32.gmra.mrb[0].mxu0 %v1912
    %v2018 = vpop.f32.mrb[0].mxu0
    %v2019 = vadd.f32 0.0, %v2018
    %v2020 = vpop.f32.mrb[0].mxu0
    %2021 = vdwg.mxu0
    %v2022 = vadd.f32 %v1766, %v1984
    %v2023 = vadd.f32 %v1767, %v1989
    %v2024 = vadd.f32 %v1768, %v1994
    %v2025 = vadd.f32 %v1769, %v1999
    %v2026 = vadd.f32 %v1770, %v2004
    %v2027 = vadd.f32 %v1771, %v2009
    %v2028 = vadd.f32 %v1772, %v2014
    %v2029 = vadd.f32 %v1773, %v2019
    %2030 = vmatprep.subr.mxu0 0.0
    %2031 = vmatpush1.msra.mxu0 %v1879
    %2032 = vmatprep.subr.mxu0 0.0
    %2033 = vmatpush1.msra.mxu0 %v1880
    %2034 = vmatprep.subr.mxu0 0.0
    %2035 = vmatpush1.msra.mxu0 %v1881
    %2036 = vmatprep.subr.mxu0 0.0
    %2037 = vmatpush1.msra.mxu0 %v1882
    %2038 = vmatprep.subr.mxu0 0.0
    %2039 = vmatpush1.msra.mxu0 %v1883
    %2040 = vmatprep.subr.mxu0 0.0
    %2041 = vmatpush1.msra.mxu0 %v1884
    %2042 = vmatprep.subr.mxu0 0.0
    %2043 = vmatpush1.msra.mxu0 %v1885
    %2044 = vmatprep.subr.mxu0 0.0
    %2045 = vmatpush1.msra.mxu0 %v1886
    %2046 = vmatprep.subr.mxu0 0.0
    %2047 = vmatpush1.msra.mxu0 0.0
    %2048 = vmatprep.subr.mxu0 0.0
    %2049 = vmatpush1.msra.mxu0 0.0
    %2050 = vmatprep.subr.mxu0 0.0
    %2051 = vmatpush1.msra.mxu0 0.0
    %2052 = vmatprep.subr.mxu0 0.0
    %2053 = vmatpush1.msra.mxu0 0.0
    %2054 = vmatprep.subr.mxu0 0.0
    %2055 = vmatpush1.msra.mxu0 0.0
    %2056 = vmatprep.subr.mxu0 0.0
    %2057 = vmatpush1.msra.mxu0 0.0
    %2058 = vmatprep.subr.mxu0 0.0
    %2059 = vmatpush1.msra.mxu0 0.0
    %2060 = vmatprep.subr.mxu0 0.0
    %2061 = vmatpush1.msra.mxu0 0.0
    %2062 = vmatprep.subr.mxu0 0.0
    %2063 = vmatpush1.msra.mxu0 0.0
    %2064 = vmatprep.subr.mxu0 0.0
    %2065 = vmatpush1.msra.mxu0 0.0
    %2066 = vmatprep.subr.mxu0 0.0
    %2067 = vmatpush1.msra.mxu0 0.0
    %2068 = vmatprep.subr.mxu0 0.0
    %2069 = vmatpush1.msra.mxu0 0.0
    %2070 = vmatprep.subr.mxu0 0.0
    %2071 = vmatpush1.msra.mxu0 0.0
    %2072 = vmatprep.subr.mxu0 0.0
    %2073 = vmatpush1.msra.mxu0 0.0
    %2074 = vmatprep.subr.mxu0 0.0
    %2075 = vmatpush1.msra.mxu0 0.0
    %2076 = vmatprep.subr.mxu0 0.0
    %2077 = vmatpush1.msra.mxu0 0.0
    %2078 = vmatprep.subr.mxu0 0.0
    %2079 = vmatpush1.msra.mxu0 0.0
    %2080 = vmatprep.subr.mxu0 0.0
    %2081 = vmatpush1.msra.mxu0 0.0
    %2082 = vmatprep.subr.mxu0 0.0
    %2083 = vmatpush1.msra.mxu0 0.0
    %2084 = vmatprep.subr.mxu0 0.0
    %2085 = vmatpush1.msra.mxu0 0.0
    %2086 = vmatprep.subr.mxu0 0.0
    %2087 = vmatpush1.msra.mxu0 0.0
    %2088 = vmatprep.subr.mxu0 0.0
    %2089 = vmatpush1.msra.mxu0 0.0
    %2090 = vmatprep.subr.mxu0 0.0
    %2091 = vmatpush1.msra.mxu0 0.0
    %2092 = vmatprep.subr.mxu0 0.0
    %2093 = vmatpush1.msra.mxu0 0.0
    %2094 = vmatprep.mubr.f32.mxu0 0.0
    %2095 = vmatmul.mubr.f32.gmra.mrb[0].mxu0 %v471
    %v2096 = vpop.f32.mrb[0].mxu0
    %v2097 = vadd.f32 0.0, %v2096
    %v2098 = vpop.f32.mrb[0].mxu0
    %2099 = vmatprep.mubr.f32.mxu0 0.0
    %2100 = vmatmul.mubr.f32.gmra.mrb[0].mxu0 %v474
    %v2101 = vpop.f32.mrb[0].mxu0
    %v2102 = vadd.f32 0.0, %v2101
    %v2103 = vpop.f32.mrb[0].mxu0
    %2104 = vmatprep.mubr.f32.mxu0 0.0
    %2105 = vmatmul.mubr.f32.gmra.mrb[0].mxu0 %v477
    %v2106 = vpop.f32.mrb[0].mxu0
    %v2107 = vadd.f32 0.0, %v2106
    %v2108 = vpop.f32.mrb[0].mxu0
    %2109 = vmatprep.mubr.f32.mxu0 0.0
    %2110 = vmatmul.mubr.f32.gmra.mrb[0].mxu0 %v480
    %v2111 = vpop.f32.mrb[0].mxu0
    %v2112 = vadd.f32 0.0, %v2111
    %v2113 = vpop.f32.mrb[0].mxu0
    %2114 = vmatprep.mubr.f32.mxu0 0.0
    %2115 = vmatmul.mubr.f32.gmra.mrb[0].mxu0 %v483
    %v2116 = vpop.f32.mrb[0].mxu0
    %v2117 = vadd.f32 0.0, %v2116
    %v2118 = vpop.f32.mrb[0].mxu0
    %2119 = vmatprep.mubr.f32.mxu0 0.0
    %2120 = vmatmul.mubr.f32.gmra.mrb[0].mxu0 %v486
    %v2121 = vpop.f32.mrb[0].mxu0
    %v2122 = vadd.f32 0.0, %v2121
    %v2123 = vpop.f32.mrb[0].mxu0
    %2124 = vmatprep.mubr.f32.mxu0 0.0
    %2125 = vmatmul.mubr.f32.gmra.mrb[0].mxu0 %v489
    %v2126 = vpop.f32.mrb[0].mxu0
    %v2127 = vadd.f32 0.0, %v2126
    %v2128 = vpop.f32.mrb[0].mxu0
    %2129 = vmatprep.mubr.f32.mxu0 0.0
    %2130 = vmatmul.mubr.f32.gmra.mrb[0].mxu0 %v492
    %v2131 = vpop.f32.mrb[0].mxu0
    %v2132 = vadd.f32 0.0, %v2131
    %v2133 = vpop.f32.mrb[0].mxu0
    %2134 = vdwg.mxu0
    %v2135 = vsub.f32 %v2097, %v1623
    %v2136 = vsub.f32 %v2102, %v1624
    %v2137 = vsub.f32 %v2107, %v1625
    %v2138 = vsub.f32 %v2112, %v1626
    %v2139 = vsub.f32 %v2117, %v1627
    %v2140 = vsub.f32 %v2122, %v1628
    %v2141 = vsub.f32 %v2127, %v1629
    %v2142 = vsub.f32 %v2132, %v1630
    %s2143 = scalar_lea.vmem %s4, 128
    %v2144 = vld [vmem:[%s2143] sm:$0xff]
    %v2145 = vld [vmem:[%s2143 + $0x8] sm:$0x7f]
    %v2147 = vsel %vm204, %v2135, 0
    %v2150 = vsel %vm204, %v2136, 0
    %v2153 = vsel %vm204, %v2137, 0
    %v2156 = vsel %vm204, %v2138, 0
    %v2159 = vsel %vm204, %v2139, 0
    %v2162 = vsel %vm204, %v2140, 0
    %v2165 = vsel %vm204, %v2141, 0
    %v2168 = vsel %vm204, %v2142, 0
    %v2171 = vsel %vm229, %v2145, 0
    %2173 = vmatprep.subr.mxu0 0.0
    %2174 = vmatpush1.msra.mxu0 %v2144
    %2175 = vmatprep.subr.mxu0 0.0
    %2176 = vmatpush1.msra.mxu0 %v2171
    %2177 = vmatprep.subr.mxu0 0.0
    %2178 = vmatpush1.msra.mxu0 0.0
    %2179 = vmatprep.subr.mxu0 0.0
    %2180 = vmatpush1.msra.mxu0 0.0
    %2181 = vmatprep.subr.mxu0 0.0
    %2182 = vmatpush1.msra.mxu0 0.0
    %2183 = vmatprep.subr.mxu0 0.0
    %2184 = vmatpush1.msra.mxu0 0.0
    %2185 = vmatprep.subr.mxu0 0.0
    %2186 = vmatpush1.msra.mxu0 0.0
    %2187 = vmatprep.subr.mxu0 0.0
    %2188 = vmatpush1.msra.mxu0 0.0
    %2189 = vmatprep.subr.mxu0 0.0
    %2190 = vmatpush1.msra.mxu0 0.0
    %2191 = vmatprep.subr.mxu0 0.0
    %2192 = vmatpush1.msra.mxu0 0.0
    %2193 = vmatprep.subr.mxu0 0.0
    %2194 = vmatpush1.msra.mxu0 0.0
    %2195 = vmatprep.subr.mxu0 0.0
    %2196 = vmatpush1.msra.mxu0 0.0
    %2197 = vmatprep.subr.mxu0 0.0
    %2198 = vmatpush1.msra.mxu0 0.0
    %2199 = vmatprep.subr.mxu0 0.0
    %2200 = vmatpush1.msra.mxu0 0.0
    %2201 = vmatprep.subr.mxu0 0.0
    %2202 = vmatpush1.msra.mxu0 0.0
    %2203 = vmatprep.subr.mxu0 0.0
    %2204 = vmatpush1.msra.mxu0 0.0
    %2205 = vmatprep.subr.mxu0 0.0
    %2206 = vmatpush1.msra.mxu0 0.0
    %2207 = vmatprep.subr.mxu0 0.0
    %2208 = vmatpush1.msra.mxu0 0.0
    %2209 = vmatprep.subr.mxu0 0.0
    %2210 = vmatpush1.msra.mxu0 0.0
    %2211 = vmatprep.subr.mxu0 0.0
    %2212 = vmatpush1.msra.mxu0 0.0
    %2213 = vmatprep.subr.mxu0 0.0
    %2214 = vmatpush1.msra.mxu0 0.0
    %2215 = vmatprep.subr.mxu0 0.0
    %2216 = vmatpush1.msra.mxu0 0.0
    %2217 = vmatprep.subr.mxu0 0.0
    %2218 = vmatpush1.msra.mxu0 0.0
    %2219 = vmatprep.subr.mxu0 0.0
    %2220 = vmatpush1.msra.mxu0 0.0
    %2221 = vmatprep.subr.mxu0 0.0
    %2222 = vmatpush1.msra.mxu0 0.0
    %2223 = vmatprep.subr.mxu0 0.0
    %2224 = vmatpush1.msra.mxu0 0.0
    %2225 = vmatprep.subr.mxu0 0.0
    %2226 = vmatpush1.msra.mxu0 0.0
    %2227 = vmatprep.subr.mxu0 0.0
    %2228 = vmatpush1.msra.mxu0 0.0
    %2229 = vmatprep.subr.mxu0 0.0
    %2230 = vmatpush1.msra.mxu0 0.0
    %2231 = vmatprep.subr.mxu0 0.0
    %2232 = vmatpush1.msra.mxu0 0.0
    %2233 = vmatprep.subr.mxu0 0.0
    %2234 = vmatpush1.msra.mxu0 0.0
    %2235 = vmatprep.subr.mxu0 0.0
    %2236 = vmatpush1.msra.mxu0 0.0
    %2237 = vmatprep.mubr.f32.mxu0 0.0
    %2238 = vmatmul.mubr.f32.gmra.mrb[0].mxu0 %v2147
    %v2239 = vpop.f32.mrb[0].mxu0
    %v2240 = vadd.f32 0.0, %v2239
    %v2241 = vpop.f32.mrb[0].mxu0
    %2242 = vmatprep.mubr.f32.mxu0 0.0
    %2243 = vmatmul.mubr.f32.gmra.mrb[0].mxu0 %v2150
    %v2244 = vpop.f32.mrb[0].mxu0
    %v2245 = vadd.f32 0.0, %v2244
    %v2246 = vpop.f32.mrb[0].mxu0
    %2247 = vmatprep.mubr.f32.mxu0 0.0
    %2248 = vmatmul.mubr.f32.gmra.mrb[0].mxu0 %v2153
    %v2249 = vpop.f32.mrb[0].mxu0
    %v2250 = vadd.f32 0.0, %v2249
    %v2251 = vpop.f32.mrb[0].mxu0
    %2252 = vmatprep.mubr.f32.mxu0 0.0
    %2253 = vmatmul.mubr.f32.gmra.mrb[0].mxu0 %v2156
    %v2254 = vpop.f32.mrb[0].mxu0
    %v2255 = vadd.f32 0.0, %v2254
    %v2256 = vpop.f32.mrb[0].mxu0
    %2257 = vmatprep.mubr.f32.mxu0 0.0
    %2258 = vmatmul.mubr.f32.gmra.mrb[0].mxu0 %v2159
    %v2259 = vpop.f32.mrb[0].mxu0
    %v2260 = vadd.f32 0.0, %v2259
    %v2261 = vpop.f32.mrb[0].mxu0
    %2262 = vmatprep.mubr.f32.mxu0 0.0
    %2263 = vmatmul.mubr.f32.gmra.mrb[0].mxu0 %v2162
    %v2264 = vpop.f32.mrb[0].mxu0
    %v2265 = vadd.f32 0.0, %v2264
    %v2266 = vpop.f32.mrb[0].mxu0
    %2267 = vmatprep.mubr.f32.mxu0 0.0
    %2268 = vmatmul.mubr.f32.gmra.mrb[0].mxu0 %v2165
    %v2269 = vpop.f32.mrb[0].mxu0
    %v2270 = vadd.f32 0.0, %v2269
    %v2271 = vpop.f32.mrb[0].mxu0
    %2272 = vmatprep.mubr.f32.mxu0 0.0
    %2273 = vmatmul.mubr.f32.gmra.mrb[0].mxu0 %v2168
    %v2274 = vpop.f32.mrb[0].mxu0
    %v2275 = vadd.f32 0.0, %v2274
    %v2276 = vpop.f32.mrb[0].mxu0
    %2277 = vdwg.mxu0
    %v2278 = vadd.f32 %v2022, %v2240
    %v2279 = vadd.f32 %v2023, %v2245
    %v2280 = vadd.f32 %v2024, %v2250
    %v2281 = vadd.f32 %v2025, %v2255
    %v2282 = vadd.f32 %v2026, %v2260
    %v2283 = vadd.f32 %v2027, %v2265
    %v2284 = vadd.f32 %v2028, %v2270
    %v2285 = vadd.f32 %v2029, %v2275
    %2286 = vmatprep.subr.mxu0 0.0
    %2287 = vmatpush1.msra.mxu0 %v2135
    %2288 = vmatprep.subr.mxu0 0.0
    %2289 = vmatpush1.msra.mxu0 %v2136
    %2290 = vmatprep.subr.mxu0 0.0
    %2291 = vmatpush1.msra.mxu0 %v2137
    %2292 = vmatprep.subr.mxu0 0.0
    %2293 = vmatpush1.msra.mxu0 %v2138
    %2294 = vmatprep.subr.mxu0 0.0
    %2295 = vmatpush1.msra.mxu0 %v2139
    %2296 = vmatprep.subr.mxu0 0.0
    %2297 = vmatpush1.msra.mxu0 %v2140
    %2298 = vmatprep.subr.mxu0 0.0
    %2299 = vmatpush1.msra.mxu0 %v2141
    %2300 = vmatprep.subr.mxu0 0.0
    %2301 = vmatpush1.msra.mxu0 %v2142
    %2302 = vmatprep.subr.mxu0 0.0
    %2303 = vmatpush1.msra.mxu0 0.0
    %2304 = vmatprep.subr.mxu0 0.0
    %2305 = vmatpush1.msra.mxu0 0.0
    %2306 = vmatprep.subr.mxu0 0.0
    %2307 = vmatpush1.msra.mxu0 0.0
    %2308 = vmatprep.subr.mxu0 0.0
    %2309 = vmatpush1.msra.mxu0 0.0
    %2310 = vmatprep.subr.mxu0 0.0
    %2311 = vmatpush1.msra.mxu0 0.0
    %2312 = vmatprep.subr.mxu0 0.0
    %2313 = vmatpush1.msra.mxu0 0.0
    %2314 = vmatprep.subr.mxu0 0.0
    %2315 = vmatpush1.msra.mxu0 0.0
    %2316 = vmatprep.subr.mxu0 0.0
    %2317 = vmatpush1.msra.mxu0 0.0
    %2318 = vmatprep.subr.mxu0 0.0
    %2319 = vmatpush1.msra.mxu0 0.0
    %2320 = vmatprep.subr.mxu0 0.0
    %2321 = vmatpush1.msra.mxu0 0.0
    %2322 = vmatprep.subr.mxu0 0.0
    %2323 = vmatpush1.msra.mxu0 0.0
    %2324 = vmatprep.subr.mxu0 0.0
    %2325 = vmatpush1.msra.mxu0 0.0
    %2326 = vmatprep.subr.mxu0 0.0
    %2327 = vmatpush1.msra.mxu0 0.0
    %2328 = vmatprep.subr.mxu0 0.0
    %2329 = vmatpush1.msra.mxu0 0.0
    %2330 = vmatprep.subr.mxu0 0.0
    %2331 = vmatpush1.msra.mxu0 0.0
    %2332 = vmatprep.subr.mxu0 0.0
    %2333 = vmatpush1.msra.mxu0 0.0
    %2334 = vmatprep.subr.mxu0 0.0
    %2335 = vmatpush1.msra.mxu0 0.0
    %2336 = vmatprep.subr.mxu0 0.0
    %2337 = vmatpush1.msra.mxu0 0.0
    %2338 = vmatprep.subr.mxu0 0.0
    %2339 = vmatpush1.msra.mxu0 0.0
    %2340 = vmatprep.subr.mxu0 0.0
    %2341 = vmatpush1.msra.mxu0 0.0
    %2342 = vmatprep.subr.mxu0 0.0
    %2343 = vmatpush1.msra.mxu0 0.0
    %2344 = vmatprep.subr.mxu0 0.0
    %2345 = vmatpush1.msra.mxu0 0.0
    %2346 = vmatprep.subr.mxu0 0.0
    %2347 = vmatpush1.msra.mxu0 0.0
    %2348 = vmatprep.subr.mxu0 0.0
    %2349 = vmatpush1.msra.mxu0 0.0
    %2350 = vmatprep.mubr.f32.mxu0 0.0
    %2351 = vmatmul.mubr.f32.gmra.mrb[0].mxu0 %v471
    %v2352 = vpop.f32.mrb[0].mxu0
    %v2353 = vadd.f32 0.0, %v2352
    %v2354 = vpop.f32.mrb[0].mxu0
    %2355 = vmatprep.mubr.f32.mxu0 0.0
    %2356 = vmatmul.mubr.f32.gmra.mrb[0].mxu0 %v474
    %v2357 = vpop.f32.mrb[0].mxu0
    %v2358 = vadd.f32 0.0, %v2357
    %v2359 = vpop.f32.mrb[0].mxu0
    %2360 = vmatprep.mubr.f32.mxu0 0.0
    %2361 = vmatmul.mubr.f32.gmra.mrb[0].mxu0 %v477
    %v2362 = vpop.f32.mrb[0].mxu0
    %v2363 = vadd.f32 0.0, %v2362
    %v2364 = vpop.f32.mrb[0].mxu0
    %2365 = vmatprep.mubr.f32.mxu0 0.0
    %2366 = vmatmul.mubr.f32.gmra.mrb[0].mxu0 %v480
    %v2367 = vpop.f32.mrb[0].mxu0
    %v2368 = vadd.f32 0.0, %v2367
    %v2369 = vpop.f32.mrb[0].mxu0
    %2370 = vmatprep.mubr.f32.mxu0 0.0
    %2371 = vmatmul.mubr.f32.gmra.mrb[0].mxu0 %v483
    %v2372 = vpop.f32.mrb[0].mxu0
    %v2373 = vadd.f32 0.0, %v2372
    %v2374 = vpop.f32.mrb[0].mxu0
    %2375 = vmatprep.mubr.f32.mxu0 0.0
    %2376 = vmatmul.mubr.f32.gmra.mrb[0].mxu0 %v486
    %v2377 = vpop.f32.mrb[0].mxu0
    %v2378 = vadd.f32 0.0, %v2377
    %v2379 = vpop.f32.mrb[0].mxu0
    %2380 = vmatprep.mubr.f32.mxu0 0.0
    %2381 = vmatmul.mubr.f32.gmra.mrb[0].mxu0 %v489
    %v2382 = vpop.f32.mrb[0].mxu0
    %v2383 = vadd.f32 0.0, %v2382
    %v2384 = vpop.f32.mrb[0].mxu0
    %2385 = vmatprep.mubr.f32.mxu0 0.0
    %2386 = vmatmul.mubr.f32.gmra.mrb[0].mxu0 %v492
    %v2387 = vpop.f32.mrb[0].mxu0
    %v2388 = vadd.f32 0.0, %v2387
    %v2389 = vpop.f32.mrb[0].mxu0
    %2390 = vdwg.mxu0
    %v2391 = vsub.f32 %v2353, %v1879
    %v2392 = vsub.f32 %v2358, %v1880
    %v2393 = vsub.f32 %v2363, %v1881
    %v2394 = vsub.f32 %v2368, %v1882
    %v2395 = vsub.f32 %v2373, %v1883
    %v2396 = vsub.f32 %v2378, %v1884
    %v2397 = vsub.f32 %v2383, %v1885
    %v2398 = vsub.f32 %v2388, %v1886
    %s2399 = scalar_lea.vmem %s4, 144
    %v2400 = vld [vmem:[%s2399] sm:$0xff]
    %v2401 = vld [vmem:[%s2399 + $0x8] sm:$0x7f]
    %v2403 = vsel %vm204, %v2391, 0
    %v2406 = vsel %vm204, %v2392, 0
    %v2409 = vsel %vm204, %v2393, 0
    %v2412 = vsel %vm204, %v2394, 0
    %v2415 = vsel %vm204, %v2395, 0
    %v2418 = vsel %vm204, %v2396, 0
    %v2421 = vsel %vm204, %v2397, 0
    %v2424 = vsel %vm204, %v2398, 0
    %v2427 = vsel %vm229, %v2401, 0
    %2429 = vmatprep.subr.mxu0 0.0
    %2430 = vmatpush1.msra.mxu0 %v2400
    %2431 = vmatprep.subr.mxu0 0.0
    %2432 = vmatpush1.msra.mxu0 %v2427
    %2433 = vmatprep.subr.mxu0 0.0
    %2434 = vmatpush1.msra.mxu0 0.0
    %2435 = vmatprep.subr.mxu0 0.0
    %2436 = vmatpush1.msra.mxu0 0.0
    %2437 = vmatprep.subr.mxu0 0.0
    %2438 = vmatpush1.msra.mxu0 0.0
    %2439 = vmatprep.subr.mxu0 0.0
    %2440 = vmatpush1.msra.mxu0 0.0
    %2441 = vmatprep.subr.mxu0 0.0
    %2442 = vmatpush1.msra.mxu0 0.0
    %2443 = vmatprep.subr.mxu0 0.0
    %2444 = vmatpush1.msra.mxu0 0.0
    %2445 = vmatprep.subr.mxu0 0.0
    %2446 = vmatpush1.msra.mxu0 0.0
    %2447 = vmatprep.subr.mxu0 0.0
    %2448 = vmatpush1.msra.mxu0 0.0
    %2449 = vmatprep.subr.mxu0 0.0
    %2450 = vmatpush1.msra.mxu0 0.0
    %2451 = vmatprep.subr.mxu0 0.0
    %2452 = vmatpush1.msra.mxu0 0.0
    %2453 = vmatprep.subr.mxu0 0.0
    %2454 = vmatpush1.msra.mxu0 0.0
    %2455 = vmatprep.subr.mxu0 0.0
    %2456 = vmatpush1.msra.mxu0 0.0
    %2457 = vmatprep.subr.mxu0 0.0
    %2458 = vmatpush1.msra.mxu0 0.0
    %2459 = vmatprep.subr.mxu0 0.0
    %2460 = vmatpush1.msra.mxu0 0.0
    %2461 = vmatprep.subr.mxu0 0.0
    %2462 = vmatpush1.msra.mxu0 0.0
    %2463 = vmatprep.subr.mxu0 0.0
    %2464 = vmatpush1.msra.mxu0 0.0
    %2465 = vmatprep.subr.mxu0 0.0
    %2466 = vmatpush1.msra.mxu0 0.0
    %2467 = vmatprep.subr.mxu0 0.0
    %2468 = vmatpush1.msra.mxu0 0.0
    %2469 = vmatprep.subr.mxu0 0.0
    %2470 = vmatpush1.msra.mxu0 0.0
    %2471 = vmatprep.subr.mxu0 0.0
    %2472 = vmatpush1.msra.mxu0 0.0
    %2473 = vmatprep.subr.mxu0 0.0
    %2474 = vmatpush1.msra.mxu0 0.0
    %2475 = vmatprep.subr.mxu0 0.0
    %2476 = vmatpush1.msra.mxu0 0.0
    %2477 = vmatprep.subr.mxu0 0.0
    %2478 = vmatpush1.msra.mxu0 0.0
    %2479 = vmatprep.subr.mxu0 0.0
    %2480 = vmatpush1.msra.mxu0 0.0
    %2481 = vmatprep.subr.mxu0 0.0
    %2482 = vmatpush1.msra.mxu0 0.0
    %2483 = vmatprep.subr.mxu0 0.0
    %2484 = vmatpush1.msra.mxu0 0.0
    %2485 = vmatprep.subr.mxu0 0.0
    %2486 = vmatpush1.msra.mxu0 0.0
    %2487 = vmatprep.subr.mxu0 0.0
    %2488 = vmatpush1.msra.mxu0 0.0
    %2489 = vmatprep.subr.mxu0 0.0
    %2490 = vmatpush1.msra.mxu0 0.0
    %2491 = vmatprep.subr.mxu0 0.0
    %2492 = vmatpush1.msra.mxu0 0.0
    %2493 = vmatprep.mubr.f32.mxu0 0.0
    %2494 = vmatmul.mubr.f32.gmra.mrb[0].mxu0 %v2403
    %v2495 = vpop.f32.mrb[0].mxu0
    %v2496 = vadd.f32 0.0, %v2495
    %v2497 = vpop.f32.mrb[0].mxu0
    %2498 = vmatprep.mubr.f32.mxu0 0.0
    %2499 = vmatmul.mubr.f32.gmra.mrb[0].mxu0 %v2406
    %v2500 = vpop.f32.mrb[0].mxu0
    %v2501 = vadd.f32 0.0, %v2500
    %v2502 = vpop.f32.mrb[0].mxu0
    %2503 = vmatprep.mubr.f32.mxu0 0.0
    %2504 = vmatmul.mubr.f32.gmra.mrb[0].mxu0 %v2409
    %v2505 = vpop.f32.mrb[0].mxu0
    %v2506 = vadd.f32 0.0, %v2505
    %v2507 = vpop.f32.mrb[0].mxu0
    %2508 = vmatprep.mubr.f32.mxu0 0.0
    %2509 = vmatmul.mubr.f32.gmra.mrb[0].mxu0 %v2412
    %v2510 = vpop.f32.mrb[0].mxu0
    %v2511 = vadd.f32 0.0, %v2510
    %v2512 = vpop.f32.mrb[0].mxu0
    %2513 = vmatprep.mubr.f32.mxu0 0.0
    %2514 = vmatmul.mubr.f32.gmra.mrb[0].mxu0 %v2415
    %v2515 = vpop.f32.mrb[0].mxu0
    %v2516 = vadd.f32 0.0, %v2515
    %v2517 = vpop.f32.mrb[0].mxu0
    %2518 = vmatprep.mubr.f32.mxu0 0.0
    %2519 = vmatmul.mubr.f32.gmra.mrb[0].mxu0 %v2418
    %v2520 = vpop.f32.mrb[0].mxu0
    %v2521 = vadd.f32 0.0, %v2520
    %v2522 = vpop.f32.mrb[0].mxu0
    %2523 = vmatprep.mubr.f32.mxu0 0.0
    %2524 = vmatmul.mubr.f32.gmra.mrb[0].mxu0 %v2421
    %v2525 = vpop.f32.mrb[0].mxu0
    %v2526 = vadd.f32 0.0, %v2525
    %v2527 = vpop.f32.mrb[0].mxu0
    %2528 = vmatprep.mubr.f32.mxu0 0.0
    %2529 = vmatmul.mubr.f32.gmra.mrb[0].mxu0 %v2424
    %v2530 = vpop.f32.mrb[0].mxu0
    %v2531 = vadd.f32 0.0, %v2530
    %v2532 = vpop.f32.mrb[0].mxu0
    %2533 = vdwg.mxu0
    %v2534 = vadd.f32 %v2278, %v2496
    %v2535 = vadd.f32 %v2279, %v2501
    %v2536 = vadd.f32 %v2280, %v2506
    %v2537 = vadd.f32 %v2281, %v2511
    %v2538 = vadd.f32 %v2282, %v2516
    %v2539 = vadd.f32 %v2283, %v2521
    %v2540 = vadd.f32 %v2284, %v2526
    %v2541 = vadd.f32 %v2285, %v2531
    %2542 = vmatprep.subr.mxu0 0.0
    %2543 = vmatpush1.msra.mxu0 %v2391
    %2544 = vmatprep.subr.mxu0 0.0
    %2545 = vmatpush1.msra.mxu0 %v2392
    %2546 = vmatprep.subr.mxu0 0.0
    %2547 = vmatpush1.msra.mxu0 %v2393
    %2548 = vmatprep.subr.mxu0 0.0
    %2549 = vmatpush1.msra.mxu0 %v2394
    %2550 = vmatprep.subr.mxu0 0.0
    %2551 = vmatpush1.msra.mxu0 %v2395
    %2552 = vmatprep.subr.mxu0 0.0
    %2553 = vmatpush1.msra.mxu0 %v2396
    %2554 = vmatprep.subr.mxu0 0.0
    %2555 = vmatpush1.msra.mxu0 %v2397
    %2556 = vmatprep.subr.mxu0 0.0
    %2557 = vmatpush1.msra.mxu0 %v2398
    %2558 = vmatprep.subr.mxu0 0.0
    %2559 = vmatpush1.msra.mxu0 0.0
    %2560 = vmatprep.subr.mxu0 0.0
    %2561 = vmatpush1.msra.mxu0 0.0
    %2562 = vmatprep.subr.mxu0 0.0
    %2563 = vmatpush1.msra.mxu0 0.0
    %2564 = vmatprep.subr.mxu0 0.0
    %2565 = vmatpush1.msra.mxu0 0.0
    %2566 = vmatprep.subr.mxu0 0.0
    %2567 = vmatpush1.msra.mxu0 0.0
    %2568 = vmatprep.subr.mxu0 0.0
    %2569 = vmatpush1.msra.mxu0 0.0
    %2570 = vmatprep.subr.mxu0 0.0
    %2571 = vmatpush1.msra.mxu0 0.0
    %2572 = vmatprep.subr.mxu0 0.0
    %2573 = vmatpush1.msra.mxu0 0.0
    %2574 = vmatprep.subr.mxu0 0.0
    %2575 = vmatpush1.msra.mxu0 0.0
    %2576 = vmatprep.subr.mxu0 0.0
    %2577 = vmatpush1.msra.mxu0 0.0
    %2578 = vmatprep.subr.mxu0 0.0
    %2579 = vmatpush1.msra.mxu0 0.0
    %2580 = vmatprep.subr.mxu0 0.0
    %2581 = vmatpush1.msra.mxu0 0.0
    %2582 = vmatprep.subr.mxu0 0.0
    %2583 = vmatpush1.msra.mxu0 0.0
    %2584 = vmatprep.subr.mxu0 0.0
    %2585 = vmatpush1.msra.mxu0 0.0
    %2586 = vmatprep.subr.mxu0 0.0
    %2587 = vmatpush1.msra.mxu0 0.0
    %2588 = vmatprep.subr.mxu0 0.0
    %2589 = vmatpush1.msra.mxu0 0.0
    %2590 = vmatprep.subr.mxu0 0.0
    %2591 = vmatpush1.msra.mxu0 0.0
    %2592 = vmatprep.subr.mxu0 0.0
    %2593 = vmatpush1.msra.mxu0 0.0
    %2594 = vmatprep.subr.mxu0 0.0
    %2595 = vmatpush1.msra.mxu0 0.0
    %2596 = vmatprep.subr.mxu0 0.0
    %2597 = vmatpush1.msra.mxu0 0.0
    %2598 = vmatprep.subr.mxu0 0.0
    %2599 = vmatpush1.msra.mxu0 0.0
    %2600 = vmatprep.subr.mxu0 0.0
    %2601 = vmatpush1.msra.mxu0 0.0
    %2602 = vmatprep.subr.mxu0 0.0
    %2603 = vmatpush1.msra.mxu0 0.0
    %2604 = vmatprep.subr.mxu0 0.0
    %2605 = vmatpush1.msra.mxu0 0.0
    %2606 = vmatprep.mubr.f32.mxu0 0.0
    %2607 = vmatmul.mubr.f32.gmra.mrb[0].mxu0 %v471
    %v2608 = vpop.f32.mrb[0].mxu0
    %v2609 = vadd.f32 0.0, %v2608
    %v2610 = vpop.f32.mrb[0].mxu0
    %2611 = vmatprep.mubr.f32.mxu0 0.0
    %2612 = vmatmul.mubr.f32.gmra.mrb[0].mxu0 %v474
    %v2613 = vpop.f32.mrb[0].mxu0
    %v2614 = vadd.f32 0.0, %v2613
    %v2615 = vpop.f32.mrb[0].mxu0
    %2616 = vmatprep.mubr.f32.mxu0 0.0
    %2617 = vmatmul.mubr.f32.gmra.mrb[0].mxu0 %v477
    %v2618 = vpop.f32.mrb[0].mxu0
    %v2619 = vadd.f32 0.0, %v2618
    %v2620 = vpop.f32.mrb[0].mxu0
    %2621 = vmatprep.mubr.f32.mxu0 0.0
    %2622 = vmatmul.mubr.f32.gmra.mrb[0].mxu0 %v480
    %v2623 = vpop.f32.mrb[0].mxu0
    %v2624 = vadd.f32 0.0, %v2623
    %v2625 = vpop.f32.mrb[0].mxu0
    %2626 = vmatprep.mubr.f32.mxu0 0.0
    %2627 = vmatmul.mubr.f32.gmra.mrb[0].mxu0 %v483
    %v2628 = vpop.f32.mrb[0].mxu0
    %v2629 = vadd.f32 0.0, %v2628
    %v2630 = vpop.f32.mrb[0].mxu0
    %2631 = vmatprep.mubr.f32.mxu0 0.0
    %2632 = vmatmul.mubr.f32.gmra.mrb[0].mxu0 %v486
    %v2633 = vpop.f32.mrb[0].mxu0
    %v2634 = vadd.f32 0.0, %v2633
    %v2635 = vpop.f32.mrb[0].mxu0
    %2636 = vmatprep.mubr.f32.mxu0 0.0
    %2637 = vmatmul.mubr.f32.gmra.mrb[0].mxu0 %v489
    %v2638 = vpop.f32.mrb[0].mxu0
    %v2639 = vadd.f32 0.0, %v2638
    %v2640 = vpop.f32.mrb[0].mxu0
    %2641 = vmatprep.mubr.f32.mxu0 0.0
    %2642 = vmatmul.mubr.f32.gmra.mrb[0].mxu0 %v492
    %v2643 = vpop.f32.mrb[0].mxu0
    %v2644 = vadd.f32 0.0, %v2643
    %v2645 = vpop.f32.mrb[0].mxu0
    %2646 = vdwg.mxu0
    %v2647 = vsub.f32 %v2609, %v2135
    %v2648 = vsub.f32 %v2614, %v2136
    %v2649 = vsub.f32 %v2619, %v2137
    %v2650 = vsub.f32 %v2624, %v2138
    %v2651 = vsub.f32 %v2629, %v2139
    %v2652 = vsub.f32 %v2634, %v2140
    %v2653 = vsub.f32 %v2639, %v2141
    %v2654 = vsub.f32 %v2644, %v2142
    %s2655 = scalar_lea.vmem %s4, 160
    %v2656 = vld [vmem:[%s2655] sm:$0xff]
    %v2657 = vld [vmem:[%s2655 + $0x8] sm:$0x7f]
    %v2659 = vsel %vm204, %v2647, 0
    %v2662 = vsel %vm204, %v2648, 0
    %v2665 = vsel %vm204, %v2649, 0
    %v2668 = vsel %vm204, %v2650, 0
    %v2671 = vsel %vm204, %v2651, 0
    %v2674 = vsel %vm204, %v2652, 0
    %v2677 = vsel %vm204, %v2653, 0
    %v2680 = vsel %vm204, %v2654, 0
    %v2683 = vsel %vm229, %v2657, 0
    %2685 = vmatprep.subr.mxu0 0.0
    %2686 = vmatpush1.msra.mxu0 %v2656
    %2687 = vmatprep.subr.mxu0 0.0
    %2688 = vmatpush1.msra.mxu0 %v2683
    %2689 = vmatprep.subr.mxu0 0.0
    %2690 = vmatpush1.msra.mxu0 0.0
    %2691 = vmatprep.subr.mxu0 0.0
    %2692 = vmatpush1.msra.mxu0 0.0
    %2693 = vmatprep.subr.mxu0 0.0
    %2694 = vmatpush1.msra.mxu0 0.0
    %2695 = vmatprep.subr.mxu0 0.0
    %2696 = vmatpush1.msra.mxu0 0.0
    %2697 = vmatprep.subr.mxu0 0.0
    %2698 = vmatpush1.msra.mxu0 0.0
    %2699 = vmatprep.subr.mxu0 0.0
    %2700 = vmatpush1.msra.mxu0 0.0
    %2701 = vmatprep.subr.mxu0 0.0
    %2702 = vmatpush1.msra.mxu0 0.0
    %2703 = vmatprep.subr.mxu0 0.0
    %2704 = vmatpush1.msra.mxu0 0.0
    %2705 = vmatprep.subr.mxu0 0.0
    %2706 = vmatpush1.msra.mxu0 0.0
    %2707 = vmatprep.subr.mxu0 0.0
    %2708 = vmatpush1.msra.mxu0 0.0
    %2709 = vmatprep.subr.mxu0 0.0
    %2710 = vmatpush1.msra.mxu0 0.0
    %2711 = vmatprep.subr.mxu0 0.0
    %2712 = vmatpush1.msra.mxu0 0.0
    %2713 = vmatprep.subr.mxu0 0.0
    %2714 = vmatpush1.msra.mxu0 0.0
    %2715 = vmatprep.subr.mxu0 0.0
    %2716 = vmatpush1.msra.mxu0 0.0
    %2717 = vmatprep.subr.mxu0 0.0
    %2718 = vmatpush1.msra.mxu0 0.0
    %2719 = vmatprep.subr.mxu0 0.0
    %2720 = vmatpush1.msra.mxu0 0.0
    %2721 = vmatprep.subr.mxu0 0.0
    %2722 = vmatpush1.msra.mxu0 0.0
    %2723 = vmatprep.subr.mxu0 0.0
    %2724 = vmatpush1.msra.mxu0 0.0
    %2725 = vmatprep.subr.mxu0 0.0
    %2726 = vmatpush1.msra.mxu0 0.0
    %2727 = vmatprep.subr.mxu0 0.0
    %2728 = vmatpush1.msra.mxu0 0.0
    %2729 = vmatprep.subr.mxu0 0.0
    %2730 = vmatpush1.msra.mxu0 0.0
    %2731 = vmatprep.subr.mxu0 0.0
    %2732 = vmatpush1.msra.mxu0 0.0
    %2733 = vmatprep.subr.mxu0 0.0
    %2734 = vmatpush1.msra.mxu0 0.0
    %2735 = vmatprep.subr.mxu0 0.0
    %2736 = vmatpush1.msra.mxu0 0.0
    %2737 = vmatprep.subr.mxu0 0.0
    %2738 = vmatpush1.msra.mxu0 0.0
    %2739 = vmatprep.subr.mxu0 0.0
    %2740 = vmatpush1.msra.mxu0 0.0
    %2741 = vmatprep.subr.mxu0 0.0
    %2742 = vmatpush1.msra.mxu0 0.0
    %2743 = vmatprep.subr.mxu0 0.0
    %2744 = vmatpush1.msra.mxu0 0.0
    %2745 = vmatprep.subr.mxu0 0.0
    %2746 = vmatpush1.msra.mxu0 0.0
    %2747 = vmatprep.subr.mxu0 0.0
    %2748 = vmatpush1.msra.mxu0 0.0
    %2749 = vmatprep.mubr.f32.mxu0 0.0
    %2750 = vmatmul.mubr.f32.gmra.mrb[0].mxu0 %v2659
    %v2751 = vpop.f32.mrb[0].mxu0
    %v2752 = vadd.f32 0.0, %v2751
    %v2753 = vpop.f32.mrb[0].mxu0
    %2754 = vmatprep.mubr.f32.mxu0 0.0
    %2755 = vmatmul.mubr.f32.gmra.mrb[0].mxu0 %v2662
    %v2756 = vpop.f32.mrb[0].mxu0
    %v2757 = vadd.f32 0.0, %v2756
    %v2758 = vpop.f32.mrb[0].mxu0
    %2759 = vmatprep.mubr.f32.mxu0 0.0
    %2760 = vmatmul.mubr.f32.gmra.mrb[0].mxu0 %v2665
    %v2761 = vpop.f32.mrb[0].mxu0
    %v2762 = vadd.f32 0.0, %v2761
    %v2763 = vpop.f32.mrb[0].mxu0
    %2764 = vmatprep.mubr.f32.mxu0 0.0
    %2765 = vmatmul.mubr.f32.gmra.mrb[0].mxu0 %v2668
    %v2766 = vpop.f32.mrb[0].mxu0
    %v2767 = vadd.f32 0.0, %v2766
    %v2768 = vpop.f32.mrb[0].mxu0
    %2769 = vmatprep.mubr.f32.mxu0 0.0
    %2770 = vmatmul.mubr.f32.gmra.mrb[0].mxu0 %v2671
    %v2771 = vpop.f32.mrb[0].mxu0
    %v2772 = vadd.f32 0.0, %v2771
    %v2773 = vpop.f32.mrb[0].mxu0
    %2774 = vmatprep.mubr.f32.mxu0 0.0
    %2775 = vmatmul.mubr.f32.gmra.mrb[0].mxu0 %v2674
    %v2776 = vpop.f32.mrb[0].mxu0
    %v2777 = vadd.f32 0.0, %v2776
    %v2778 = vpop.f32.mrb[0].mxu0
    %2779 = vmatprep.mubr.f32.mxu0 0.0
    %2780 = vmatmul.mubr.f32.gmra.mrb[0].mxu0 %v2677
    %v2781 = vpop.f32.mrb[0].mxu0
    %v2782 = vadd.f32 0.0, %v2781
    %v2783 = vpop.f32.mrb[0].mxu0
    %2784 = vmatprep.mubr.f32.mxu0 0.0
    %2785 = vmatmul.mubr.f32.gmra.mrb[0].mxu0 %v2680
    %v2786 = vpop.f32.mrb[0].mxu0
    %v2787 = vadd.f32 0.0, %v2786
    %v2788 = vpop.f32.mrb[0].mxu0
    %2789 = vdwg.mxu0
    %v2790 = vadd.f32 %v2534, %v2752
    %v2791 = vadd.f32 %v2535, %v2757
    %v2792 = vadd.f32 %v2536, %v2762
    %v2793 = vadd.f32 %v2537, %v2767
    %v2794 = vadd.f32 %v2538, %v2772
    %v2795 = vadd.f32 %v2539, %v2777
    %v2796 = vadd.f32 %v2540, %v2782
    %v2797 = vadd.f32 %v2541, %v2787
    %2798 = vmatprep.subr.mxu0 0.0
    %2799 = vmatpush1.msra.mxu0 %v2647
    %2800 = vmatprep.subr.mxu0 0.0
    %2801 = vmatpush1.msra.mxu0 %v2648
    %2802 = vmatprep.subr.mxu0 0.0
    %2803 = vmatpush1.msra.mxu0 %v2649
    %2804 = vmatprep.subr.mxu0 0.0
    %2805 = vmatpush1.msra.mxu0 %v2650
    %2806 = vmatprep.subr.mxu0 0.0
    %2807 = vmatpush1.msra.mxu0 %v2651
    %2808 = vmatprep.subr.mxu0 0.0
    %2809 = vmatpush1.msra.mxu0 %v2652
    %2810 = vmatprep.subr.mxu0 0.0
    %2811 = vmatpush1.msra.mxu0 %v2653
    %2812 = vmatprep.subr.mxu0 0.0
    %2813 = vmatpush1.msra.mxu0 %v2654
    %2814 = vmatprep.subr.mxu0 0.0
    %2815 = vmatpush1.msra.mxu0 0.0
    %2816 = vmatprep.subr.mxu0 0.0
    %2817 = vmatpush1.msra.mxu0 0.0
    %2818 = vmatprep.subr.mxu0 0.0
    %2819 = vmatpush1.msra.mxu0 0.0
    %2820 = vmatprep.subr.mxu0 0.0
    %2821 = vmatpush1.msra.mxu0 0.0
    %2822 = vmatprep.subr.mxu0 0.0
    %2823 = vmatpush1.msra.mxu0 0.0
    %2824 = vmatprep.subr.mxu0 0.0
    %2825 = vmatpush1.msra.mxu0 0.0
    %2826 = vmatprep.subr.mxu0 0.0
    %2827 = vmatpush1.msra.mxu0 0.0
    %2828 = vmatprep.subr.mxu0 0.0
    %2829 = vmatpush1.msra.mxu0 0.0
    %2830 = vmatprep.subr.mxu0 0.0
    %2831 = vmatpush1.msra.mxu0 0.0
    %2832 = vmatprep.subr.mxu0 0.0
    %2833 = vmatpush1.msra.mxu0 0.0
    %2834 = vmatprep.subr.mxu0 0.0
    %2835 = vmatpush1.msra.mxu0 0.0
    %2836 = vmatprep.subr.mxu0 0.0
    %2837 = vmatpush1.msra.mxu0 0.0
    %2838 = vmatprep.subr.mxu0 0.0
    %2839 = vmatpush1.msra.mxu0 0.0
    %2840 = vmatprep.subr.mxu0 0.0
    %2841 = vmatpush1.msra.mxu0 0.0
    %2842 = vmatprep.subr.mxu0 0.0
    %2843 = vmatpush1.msra.mxu0 0.0
    %2844 = vmatprep.subr.mxu0 0.0
    %2845 = vmatpush1.msra.mxu0 0.0
    %2846 = vmatprep.subr.mxu0 0.0
    %2847 = vmatpush1.msra.mxu0 0.0
    %2848 = vmatprep.subr.mxu0 0.0
    %2849 = vmatpush1.msra.mxu0 0.0
    %2850 = vmatprep.subr.mxu0 0.0
    %2851 = vmatpush1.msra.mxu0 0.0
    %2852 = vmatprep.subr.mxu0 0.0
    %2853 = vmatpush1.msra.mxu0 0.0
    %2854 = vmatprep.subr.mxu0 0.0
    %2855 = vmatpush1.msra.mxu0 0.0
    %2856 = vmatprep.subr.mxu0 0.0
    %2857 = vmatpush1.msra.mxu0 0.0
    %2858 = vmatprep.subr.mxu0 0.0
    %2859 = vmatpush1.msra.mxu0 0.0
    %2860 = vmatprep.subr.mxu0 0.0
    %2861 = vmatpush1.msra.mxu0 0.0
    %2862 = vmatprep.mubr.f32.mxu0 0.0
    %2863 = vmatmul.mubr.f32.gmra.mrb[0].mxu0 %v471
    %v2864 = vpop.f32.mrb[0].mxu0
    %v2865 = vadd.f32 0.0, %v2864
    %v2866 = vpop.f32.mrb[0].mxu0
    %2867 = vmatprep.mubr.f32.mxu0 0.0
    %2868 = vmatmul.mubr.f32.gmra.mrb[0].mxu0 %v474
    %v2869 = vpop.f32.mrb[0].mxu0
    %v2870 = vadd.f32 0.0, %v2869
    %v2871 = vpop.f32.mrb[0].mxu0
    %2872 = vmatprep.mubr.f32.mxu0 0.0
    %2873 = vmatmul.mubr.f32.gmra.mrb[0].mxu0 %v477
    %v2874 = vpop.f32.mrb[0].mxu0
    %v2875 = vadd.f32 0.0, %v2874
    %v2876 = vpop.f32.mrb[0].mxu0
    %2877 = vmatprep.mubr.f32.mxu0 0.0
    %2878 = vmatmul.mubr.f32.gmra.mrb[0].mxu0 %v480
    %v2879 = vpop.f32.mrb[0].mxu0
    %v2880 = vadd.f32 0.0, %v2879
    %v2881 = vpop.f32.mrb[0].mxu0
    %2882 = vmatprep.mubr.f32.mxu0 0.0
    %2883 = vmatmul.mubr.f32.gmra.mrb[0].mxu0 %v483
    %v2884 = vpop.f32.mrb[0].mxu0
    %v2885 = vadd.f32 0.0, %v2884
    %v2886 = vpop.f32.mrb[0].mxu0
    %2887 = vmatprep.mubr.f32.mxu0 0.0
    %2888 = vmatmul.mubr.f32.gmra.mrb[0].mxu0 %v486
    %v2889 = vpop.f32.mrb[0].mxu0
    %v2890 = vadd.f32 0.0, %v2889
    %v2891 = vpop.f32.mrb[0].mxu0
    %2892 = vmatprep.mubr.f32.mxu0 0.0
    %2893 = vmatmul.mubr.f32.gmra.mrb[0].mxu0 %v489
    %v2894 = vpop.f32.mrb[0].mxu0
    %v2895 = vadd.f32 0.0, %v2894
    %v2896 = vpop.f32.mrb[0].mxu0
    %2897 = vmatprep.mubr.f32.mxu0 0.0
    %2898 = vmatmul.mubr.f32.gmra.mrb[0].mxu0 %v492
    %v2899 = vpop.f32.mrb[0].mxu0
    %v2900 = vadd.f32 0.0, %v2899
    %v2901 = vpop.f32.mrb[0].mxu0
    %2902 = vdwg.mxu0
    %v2903 = vsub.f32 %v2865, %v2391
    %v2904 = vsub.f32 %v2870, %v2392
    %v2905 = vsub.f32 %v2875, %v2393
    %v2906 = vsub.f32 %v2880, %v2394
    %v2907 = vsub.f32 %v2885, %v2395
    %v2908 = vsub.f32 %v2890, %v2396
    %v2909 = vsub.f32 %v2895, %v2397
    %v2910 = vsub.f32 %v2900, %v2398
    %s2911 = scalar_lea.vmem %s4, 176
    %v2912 = vld [vmem:[%s2911] sm:$0xff]
    %v2913 = vld [vmem:[%s2911 + $0x8] sm:$0x7f]
    %v2915 = vsel %vm204, %v2903, 0
    %v2918 = vsel %vm204, %v2904, 0
    %v2921 = vsel %vm204, %v2905, 0
    %v2924 = vsel %vm204, %v2906, 0
    %v2927 = vsel %vm204, %v2907, 0
    %v2930 = vsel %vm204, %v2908, 0
    %v2933 = vsel %vm204, %v2909, 0
    %v2936 = vsel %vm204, %v2910, 0
    %v2939 = vsel %vm229, %v2913, 0
    %2941 = vmatprep.subr.mxu0 0.0
    %2942 = vmatpush1.msra.mxu0 %v2912
    %2943 = vmatprep.subr.mxu0 0.0
    %2944 = vmatpush1.msra.mxu0 %v2939
    %2945 = vmatprep.subr.mxu0 0.0
    %2946 = vmatpush1.msra.mxu0 0.0
    %2947 = vmatprep.subr.mxu0 0.0
    %2948 = vmatpush1.msra.mxu0 0.0
    %2949 = vmatprep.subr.mxu0 0.0
    %2950 = vmatpush1.msra.mxu0 0.0
    %2951 = vmatprep.subr.mxu0 0.0
    %2952 = vmatpush1.msra.mxu0 0.0
    %2953 = vmatprep.subr.mxu0 0.0
    %2954 = vmatpush1.msra.mxu0 0.0
    %2955 = vmatprep.subr.mxu0 0.0
    %2956 = vmatpush1.msra.mxu0 0.0
    %2957 = vmatprep.subr.mxu0 0.0
    %2958 = vmatpush1.msra.mxu0 0.0
    %2959 = vmatprep.subr.mxu0 0.0
    %2960 = vmatpush1.msra.mxu0 0.0
    %2961 = vmatprep.subr.mxu0 0.0
    %2962 = vmatpush1.msra.mxu0 0.0
    %2963 = vmatprep.subr.mxu0 0.0
    %2964 = vmatpush1.msra.mxu0 0.0
    %2965 = vmatprep.subr.mxu0 0.0
    %2966 = vmatpush1.msra.mxu0 0.0
    %2967 = vmatprep.subr.mxu0 0.0
    %2968 = vmatpush1.msra.mxu0 0.0
    %2969 = vmatprep.subr.mxu0 0.0
    %2970 = vmatpush1.msra.mxu0 0.0
    %2971 = vmatprep.subr.mxu0 0.0
    %2972 = vmatpush1.msra.mxu0 0.0
    %2973 = vmatprep.subr.mxu0 0.0
    %2974 = vmatpush1.msra.mxu0 0.0
    %2975 = vmatprep.subr.mxu0 0.0
    %2976 = vmatpush1.msra.mxu0 0.0
    %2977 = vmatprep.subr.mxu0 0.0
    %2978 = vmatpush1.msra.mxu0 0.0
    %2979 = vmatprep.subr.mxu0 0.0
    %2980 = vmatpush1.msra.mxu0 0.0
    %2981 = vmatprep.subr.mxu0 0.0
    %2982 = vmatpush1.msra.mxu0 0.0
    %2983 = vmatprep.subr.mxu0 0.0
    %2984 = vmatpush1.msra.mxu0 0.0
    %2985 = vmatprep.subr.mxu0 0.0
    %2986 = vmatpush1.msra.mxu0 0.0
    %2987 = vmatprep.subr.mxu0 0.0
    %2988 = vmatpush1.msra.mxu0 0.0
    %2989 = vmatprep.subr.mxu0 0.0
    %2990 = vmatpush1.msra.mxu0 0.0
    %2991 = vmatprep.subr.mxu0 0.0
    %2992 = vmatpush1.msra.mxu0 0.0
    %2993 = vmatprep.subr.mxu0 0.0
    %2994 = vmatpush1.msra.mxu0 0.0
    %2995 = vmatprep.subr.mxu0 0.0
    %2996 = vmatpush1.msra.mxu0 0.0
    %2997 = vmatprep.subr.mxu0 0.0
    %2998 = vmatpush1.msra.mxu0 0.0
    %2999 = vmatprep.subr.mxu0 0.0
    %3000 = vmatpush1.msra.mxu0 0.0
    %3001 = vmatprep.subr.mxu0 0.0
    %3002 = vmatpush1.msra.mxu0 0.0
    %3003 = vmatprep.subr.mxu0 0.0
    %3004 = vmatpush1.msra.mxu0 0.0
    %3005 = vmatprep.mubr.f32.mxu0 0.0
    %3006 = vmatmul.mubr.f32.gmra.mrb[0].mxu0 %v2915
    %v3007 = vpop.f32.mrb[0].mxu0
    %v3008 = vadd.f32 0.0, %v3007
    %v3009 = vpop.f32.mrb[0].mxu0
    %3010 = vmatprep.mubr.f32.mxu0 0.0
    %3011 = vmatmul.mubr.f32.gmra.mrb[0].mxu0 %v2918
    %v3012 = vpop.f32.mrb[0].mxu0
    %v3013 = vadd.f32 0.0, %v3012
    %v3014 = vpop.f32.mrb[0].mxu0
    %3015 = vmatprep.mubr.f32.mxu0 0.0
    %3016 = vmatmul.mubr.f32.gmra.mrb[0].mxu0 %v2921
    %v3017 = vpop.f32.mrb[0].mxu0
    %v3018 = vadd.f32 0.0, %v3017
    %v3019 = vpop.f32.mrb[0].mxu0
    %3020 = vmatprep.mubr.f32.mxu0 0.0
    %3021 = vmatmul.mubr.f32.gmra.mrb[0].mxu0 %v2924
    %v3022 = vpop.f32.mrb[0].mxu0
    %v3023 = vadd.f32 0.0, %v3022
    %v3024 = vpop.f32.mrb[0].mxu0
    %3025 = vmatprep.mubr.f32.mxu0 0.0
    %3026 = vmatmul.mubr.f32.gmra.mrb[0].mxu0 %v2927
    %v3027 = vpop.f32.mrb[0].mxu0
    %v3028 = vadd.f32 0.0, %v3027
    %v3029 = vpop.f32.mrb[0].mxu0
    %3030 = vmatprep.mubr.f32.mxu0 0.0
    %3031 = vmatmul.mubr.f32.gmra.mrb[0].mxu0 %v2930
    %v3032 = vpop.f32.mrb[0].mxu0
    %v3033 = vadd.f32 0.0, %v3032
    %v3034 = vpop.f32.mrb[0].mxu0
    %3035 = vmatprep.mubr.f32.mxu0 0.0
    %3036 = vmatmul.mubr.f32.gmra.mrb[0].mxu0 %v2933
    %v3037 = vpop.f32.mrb[0].mxu0
    %v3038 = vadd.f32 0.0, %v3037
    %v3039 = vpop.f32.mrb[0].mxu0
    %3040 = vmatprep.mubr.f32.mxu0 0.0
    %3041 = vmatmul.mubr.f32.gmra.mrb[0].mxu0 %v2936
    %v3042 = vpop.f32.mrb[0].mxu0
    %v3043 = vadd.f32 0.0, %v3042
    %v3044 = vpop.f32.mrb[0].mxu0
    %3045 = vdwg.mxu0
    %v3046 = vadd.f32 %v2790, %v3008
    %v3047 = vadd.f32 %v2791, %v3013
    %v3048 = vadd.f32 %v2792, %v3018
    %v3049 = vadd.f32 %v2793, %v3023
    %v3050 = vadd.f32 %v2794, %v3028
    %v3051 = vadd.f32 %v2795, %v3033
    %v3052 = vadd.f32 %v2796, %v3038
    %v3053 = vadd.f32 %v2797, %v3043
    %v3054 = vld [vmem:[%s5] sm:$0x1]
    %v3056 = vlaneseq
    %v3057 = vshrl.u32 %v3056, 7
    %v3058 = vsub.s32 0, %v3057
    %v3059 = vrot.slane %v3054, %v3058
    %v3061 = vadd.f32 %v3046, %v3059
    %v3062 = vadd.f32 %v3047, %v3059
    %v3063 = vadd.f32 %v3048, %v3059
    %v3064 = vadd.f32 %v3049, %v3059
    %v3065 = vadd.f32 %v3050, %v3059
    %v3066 = vadd.f32 %v3051, %v3059
    %v3067 = vadd.f32 %v3052, %v3059
    %v3068 = vadd.f32 %v3053, %v3059
    %v3069 = vmax.f32 %v3061, 0.0
    %v3070 = vmax.f32 %v3062, 0.0
    %v3071 = vmax.f32 %v3063, 0.0
    %v3072 = vmax.f32 %v3064, 0.0
    %v3073 = vmax.f32 %v3065, 0.0
    %v3074 = vmax.f32 %v3066, 0.0
    %v3075 = vmax.f32 %v3067, 0.0
    %v3076 = vmax.f32 %v3068, 0.0
    %v3077 = vld [vmem:[%s3] sm:$0xff]
    %v3078 = vld [vmem:[%s3 + $0x8] sm:$0xff]
    %v3079 = vld [vmem:[%s3 + $0x10] sm:$0xff]
    %v3080 = vld [vmem:[%s3 + $0x18] sm:$0xff]
    %v3082 = vsel %vm69, %v3077, 0
    %v3085 = vsel %vm69, %v3078, 0
    %v3088 = vsel %vm69, %v3079, 0
    %v3091 = vsel %vm69, %v3080, 0
    %3093 = vmatprep.subr.mxu0 0.0
    %3094 = vmatpush1.msra.mxu0 %v3069
    %3095 = vmatprep.subr.mxu0 0.0
    %3096 = vmatpush1.msra.mxu0 %v3070
    %3097 = vmatprep.subr.mxu0 0.0
    %3098 = vmatpush1.msra.mxu0 %v3071
    %3099 = vmatprep.subr.mxu0 0.0
    %3100 = vmatpush1.msra.mxu0 %v3072
    %3101 = vmatprep.subr.mxu0 0.0
    %3102 = vmatpush1.msra.mxu0 %v3073
    %3103 = vmatprep.subr.mxu0 0.0
    %3104 = vmatpush1.msra.mxu0 %v3074
    %3105 = vmatprep.subr.mxu0 0.0
    %3106 = vmatpush1.msra.mxu0 %v3075
    %3107 = vmatprep.subr.mxu0 0.0
    %3108 = vmatpush1.msra.mxu0 %v3076
    %3109 = vmatprep.subr.mxu0 0.0
    %3110 = vmatpush1.msra.mxu0 0.0
    %3111 = vmatprep.subr.mxu0 0.0
    %3112 = vmatpush1.msra.mxu0 0.0
    %3113 = vmatprep.subr.mxu0 0.0
    %3114 = vmatpush1.msra.mxu0 0.0
    %3115 = vmatprep.subr.mxu0 0.0
    %3116 = vmatpush1.msra.mxu0 0.0
    %3117 = vmatprep.subr.mxu0 0.0
    %3118 = vmatpush1.msra.mxu0 0.0
    %3119 = vmatprep.subr.mxu0 0.0
    %3120 = vmatpush1.msra.mxu0 0.0
    %3121 = vmatprep.subr.mxu0 0.0
    %3122 = vmatpush1.msra.mxu0 0.0
    %3123 = vmatprep.subr.mxu0 0.0
    %3124 = vmatpush1.msra.mxu0 0.0
    %3125 = vmatprep.subr.mxu0 0.0
    %3126 = vmatpush1.msra.mxu0 0.0
    %3127 = vmatprep.subr.mxu0 0.0
    %3128 = vmatpush1.msra.mxu0 0.0
    %3129 = vmatprep.subr.mxu0 0.0
    %3130 = vmatpush1.msra.mxu0 0.0
    %3131 = vmatprep.subr.mxu0 0.0
    %3132 = vmatpush1.msra.mxu0 0.0
    %3133 = vmatprep.subr.mxu0 0.0
    %3134 = vmatpush1.msra.mxu0 0.0
    %3135 = vmatprep.subr.mxu0 0.0
    %3136 = vmatpush1.msra.mxu0 0.0
    %3137 = vmatprep.subr.mxu0 0.0
    %3138 = vmatpush1.msra.mxu0 0.0
    %3139 = vmatprep.subr.mxu0 0.0
    %3140 = vmatpush1.msra.mxu0 0.0
    %3141 = vmatprep.subr.mxu0 0.0
    %3142 = vmatpush1.msra.mxu0 0.0
    %3143 = vmatprep.subr.mxu0 0.0
    %3144 = vmatpush1.msra.mxu0 0.0
    %3145 = vmatprep.subr.mxu0 0.0
    %3146 = vmatpush1.msra.mxu0 0.0
    %3147 = vmatprep.subr.mxu0 0.0
    %3148 = vmatpush1.msra.mxu0 0.0
    %3149 = vmatprep.subr.mxu0 0.0
    %3150 = vmatpush1.msra.mxu0 0.0
    %3151 = vmatprep.subr.mxu0 0.0
    %3152 = vmatpush1.msra.mxu0 0.0
    %3153 = vmatprep.subr.mxu0 0.0
    %3154 = vmatpush1.msra.mxu0 0.0
    %3155 = vmatprep.subr.mxu0 0.0
    %3156 = vmatpush1.msra.mxu0 0.0
    %3157 = vmatprep.mubr.f32.mxu0 0.0
    %3158 = vmatmul.mubr.f32.gmra.mrb[0].mxu0 %v3082
    %v3159 = vpop.f32.mrb[0].mxu0
    %v3160 = vadd.f32 0.0, %v3159
    %v3161 = vpop.f32.mrb[0].mxu0
    %3162 = vmatprep.mubr.f32.mxu0 0.0
    %3163 = vmatmul.mubr.f32.gmra.mrb[0].mxu0 %v3085
    %v3164 = vpop.f32.mrb[0].mxu0
    %v3165 = vadd.f32 0.0, %v3164
    %v3166 = vpop.f32.mrb[0].mxu0
    %3167 = vmatprep.mubr.f32.mxu0 0.0
    %3168 = vmatmul.mubr.f32.gmra.mrb[0].mxu0 %v3088
    %v3169 = vpop.f32.mrb[0].mxu0
    %v3170 = vadd.f32 0.0, %v3169
    %v3171 = vpop.f32.mrb[0].mxu0
    %3172 = vmatprep.mubr.f32.mxu0 0.0
    %3173 = vmatmul.mubr.f32.gmra.mrb[0].mxu0 %v3091
    %v3174 = vpop.f32.mrb[0].mxu0
    %v3175 = vadd.f32 0.0, %v3174
    %v3176 = vpop.f32.mrb[0].mxu0
    %3177 = vdwg.mxu0
    %v3178 = vld [vmem:[%s2] sm:$0xff]
    %v3179 = vld [vmem:[%s2 + $0x8] sm:$0xff]
    %v3180 = vld [vmem:[%s2 + $0x10] sm:$0xff]
    %v3181 = vld [vmem:[%s2 + $0x18] sm:$0xff]
    %v3182 = vadd.f32 %v3178, %v3178
    %v3183 = vadd.f32 %v3179, %v3179
    %v3184 = vadd.f32 %v3180, %v3180
    %v3185 = vadd.f32 %v3181, %v3181
    %vm3186 = vcmask 261120
    %v3188 = vsel %vm3186, %v3178, 0
    %v3191 = vsel %vm3186, %v3179, 0
    %v3194 = vsel %vm3186, %v3180, 0
    %v3197 = vsel %vm3186, %v3181, 0
    %3199 = vmatprep.subr.mxu0 0.0
    %3200 = vmatpush1.msra.mxu0 %v3160
    %3201 = vmatprep.subr.mxu0 0.0
    %3202 = vmatpush1.msra.mxu0 %v3165
    %3203 = vmatprep.subr.mxu0 0.0
    %3204 = vmatpush1.msra.mxu0 %v3170
    %3205 = vmatprep.subr.mxu0 0.0
    %3206 = vmatpush1.msra.mxu0 %v3175
    %3207 = vmatprep.subr.mxu0 0.0
    %3208 = vmatpush1.msra.mxu0 0.0
    %3209 = vmatprep.subr.mxu0 0.0
    %3210 = vmatpush1.msra.mxu0 0.0
    %3211 = vmatprep.subr.mxu0 0.0
    %3212 = vmatpush1.msra.mxu0 0.0
    %3213 = vmatprep.subr.mxu0 0.0
    %3214 = vmatpush1.msra.mxu0 0.0
    %3215 = vmatprep.subr.mxu0 0.0
    %3216 = vmatpush1.msra.mxu0 0.0
    %3217 = vmatprep.subr.mxu0 0.0
    %3218 = vmatpush1.msra.mxu0 0.0
    %3219 = vmatprep.subr.mxu0 0.0
    %3220 = vmatpush1.msra.mxu0 0.0
    %3221 = vmatprep.subr.mxu0 0.0
    %3222 = vmatpush1.msra.mxu0 0.0
    %3223 = vmatprep.subr.mxu0 0.0
    %3224 = vmatpush1.msra.mxu0 0.0
    %3225 = vmatprep.subr.mxu0 0.0
    %3226 = vmatpush1.msra.mxu0 0.0
    %3227 = vmatprep.subr.mxu0 0.0
    %3228 = vmatpush1.msra.mxu0 0.0
    %3229 = vmatprep.subr.mxu0 0.0
    %3230 = vmatpush1.msra.mxu0 0.0
    %3231 = vmatprep.subr.mxu0 0.0
    %3232 = vmatpush1.msra.mxu0 0.0
    %3233 = vmatprep.subr.mxu0 0.0
    %3234 = vmatpush1.msra.mxu0 0.0
    %3235 = vmatprep.subr.mxu0 0.0
    %3236 = vmatpush1.msra.mxu0 0.0
    %3237 = vmatprep.subr.mxu0 0.0
    %3238 = vmatpush1.msra.mxu0 0.0
    %3239 = vmatprep.subr.mxu0 0.0
    %3240 = vmatpush1.msra.mxu0 0.0
    %3241 = vmatprep.subr.mxu0 0.0
    %3242 = vmatpush1.msra.mxu0 0.0
    %3243 = vmatprep.subr.mxu0 0.0
    %3244 = vmatpush1.msra.mxu0 0.0
    %3245 = vmatprep.subr.mxu0 0.0
    %3246 = vmatpush1.msra.mxu0 0.0
    %3247 = vmatprep.subr.mxu0 0.0
    %3248 = vmatpush1.msra.mxu0 0.0
    %3249 = vmatprep.subr.mxu0 0.0
    %3250 = vmatpush1.msra.mxu0 0.0
    %3251 = vmatprep.subr.mxu0 0.0
    %3252 = vmatpush1.msra.mxu0 0.0
    %3253 = vmatprep.subr.mxu0 0.0
    %3254 = vmatpush1.msra.mxu0 0.0
    %3255 = vmatprep.subr.mxu0 0.0
    %3256 = vmatpush1.msra.mxu0 0.0
    %3257 = vmatprep.subr.mxu0 0.0
    %3258 = vmatpush1.msra.mxu0 0.0
    %3259 = vmatprep.subr.mxu0 0.0
    %3260 = vmatpush1.msra.mxu0 0.0
    %3261 = vmatprep.subr.mxu0 0.0
    %3262 = vmatpush1.msra.mxu0 0.0
    %3263 = vmatprep.mubr.f32.mxu0 0.0
    %3264 = vmatmul.mubr.f32.gmra.mrb[0].mxu0 %v3188
    %v3265 = vpop.f32.mrb[0].mxu0
    %v3266 = vadd.f32 0.0, %v3265
    %v3267 = vpop.f32.mrb[0].mxu0
    %3268 = vmatprep.mubr.f32.mxu0 0.0
    %3269 = vmatmul.mubr.f32.gmra.mrb[0].mxu0 %v3191
    %v3270 = vpop.f32.mrb[0].mxu0
    %v3271 = vadd.f32 0.0, %v3270
    %v3272 = vpop.f32.mrb[0].mxu0
    %3273 = vmatprep.mubr.f32.mxu0 0.0
    %3274 = vmatmul.mubr.f32.gmra.mrb[0].mxu0 %v3194
    %v3275 = vpop.f32.mrb[0].mxu0
    %v3276 = vadd.f32 0.0, %v3275
    %v3277 = vpop.f32.mrb[0].mxu0
    %3278 = vmatprep.mubr.f32.mxu0 0.0
    %3279 = vmatmul.mubr.f32.gmra.mrb[0].mxu0 %v3197
    %v3280 = vpop.f32.mrb[0].mxu0
    %v3281 = vadd.f32 0.0, %v3280
    %v3282 = vpop.f32.mrb[0].mxu0
    %3283 = vdwg.mxu0
    %v3284 = vld [vmem:[%s6] sm:$0xff]
    %v3285 = vld [vmem:[%s6 + $0x8] sm:$0xff]
    %v3286 = vld [vmem:[%s6 + $0x10] sm:$0xff]
    %v3287 = vld [vmem:[%s6 + $0x18] sm:$0xff]
    %v3288 = vld [vmem:[%s6 + $0x20] sm:$0xff]
    %v3289 = vld [vmem:[%s6 + $0x28] sm:$0xff]
    %v3290 = vld [vmem:[%s6 + $0x30] sm:$0xff]
    %v3291 = vld [vmem:[%s6 + $0x38] sm:$0xff]
    %s3292 = scalar_lea.vmem %s6, 64
    %v3293 = vld [vmem:[%s3292] sm:$0xff]
    %v3294 = vld [vmem:[%s3292 + $0x8] sm:$0xff]
    %v3295 = vld [vmem:[%s3292 + $0x10] sm:$0xff]
    %v3296 = vld [vmem:[%s3292 + $0x18] sm:$0xff]
    %v3297 = vld [vmem:[%s3292 + $0x20] sm:$0xff]
    %v3298 = vld [vmem:[%s3292 + $0x28] sm:$0xff]
    %v3299 = vld [vmem:[%s3292 + $0x30] sm:$0xff]
    %v3300 = vld [vmem:[%s3292 + $0x38] sm:$0xff]
    %v3302 = vsel %vm69, %v3266, 0
    %v3305 = vsel %vm69, %v3271, 0
    %v3308 = vsel %vm69, %v3276, 0
    %v3311 = vsel %vm69, %v3281, 0
    %3313 = vmatprep.subr.mxu0 0.0
    %3314 = vmatpush1.msra.mxu0 %v3293
    %3315 = vmatprep.subr.mxu0 0.0
    %3316 = vmatpush1.msra.mxu0 %v3294
    %3317 = vmatprep.subr.mxu0 0.0
    %3318 = vmatpush1.msra.mxu0 %v3295
    %3319 = vmatprep.subr.mxu0 0.0
    %3320 = vmatpush1.msra.mxu0 %v3296
    %3321 = vmatprep.subr.mxu0 0.0
    %3322 = vmatpush1.msra.mxu0 %v3297
    %3323 = vmatprep.subr.mxu0 0.0
    %3324 = vmatpush1.msra.mxu0 %v3298
    %3325 = vmatprep.subr.mxu0 0.0
    %3326 = vmatpush1.msra.mxu0 %v3299
    %3327 = vmatprep.subr.mxu0 0.0
    %3328 = vmatpush1.msra.mxu0 %v3300
    %3329 = vmatprep.subr.mxu0 0.0
    %3330 = vmatpush1.msra.mxu0 0.0
    %3331 = vmatprep.subr.mxu0 0.0
    %3332 = vmatpush1.msra.mxu0 0.0
    %3333 = vmatprep.subr.mxu0 0.0
    %3334 = vmatpush1.msra.mxu0 0.0
    %3335 = vmatprep.subr.mxu0 0.0
    %3336 = vmatpush1.msra.mxu0 0.0
    %3337 = vmatprep.subr.mxu0 0.0
    %3338 = vmatpush1.msra.mxu0 0.0
    %3339 = vmatprep.subr.mxu0 0.0
    %3340 = vmatpush1.msra.mxu0 0.0
    %3341 = vmatprep.subr.mxu0 0.0
    %3342 = vmatpush1.msra.mxu0 0.0
    %3343 = vmatprep.subr.mxu0 0.0
    %3344 = vmatpush1.msra.mxu0 0.0
    %3345 = vmatprep.subr.mxu0 0.0
    %3346 = vmatpush1.msra.mxu0 0.0
    %3347 = vmatprep.subr.mxu0 0.0
    %3348 = vmatpush1.msra.mxu0 0.0
    %3349 = vmatprep.subr.mxu0 0.0
    %3350 = vmatpush1.msra.mxu0 0.0
    %3351 = vmatprep.subr.mxu0 0.0
    %3352 = vmatpush1.msra.mxu0 0.0
    %3353 = vmatprep.subr.mxu0 0.0
    %3354 = vmatpush1.msra.mxu0 0.0
    %3355 = vmatprep.subr.mxu0 0.0
    %3356 = vmatpush1.msra.mxu0 0.0
    %3357 = vmatprep.subr.mxu0 0.0
    %3358 = vmatpush1.msra.mxu0 0.0
    %3359 = vmatprep.subr.mxu0 0.0
    %3360 = vmatpush1.msra.mxu0 0.0
    %3361 = vmatprep.subr.mxu0 0.0
    %3362 = vmatpush1.msra.mxu0 0.0
    %3363 = vmatprep.subr.mxu0 0.0
    %3364 = vmatpush1.msra.mxu0 0.0
    %3365 = vmatprep.subr.mxu0 0.0
    %3366 = vmatpush1.msra.mxu0 0.0
    %3367 = vmatprep.subr.mxu0 0.0
    %3368 = vmatpush1.msra.mxu0 0.0
    %3369 = vmatprep.subr.mxu0 0.0
    %3370 = vmatpush1.msra.mxu0 0.0
    %3371 = vmatprep.subr.mxu0 0.0
    %3372 = vmatpush1.msra.mxu0 0.0
    %3373 = vmatprep.subr.mxu0 0.0
    %3374 = vmatpush1.msra.mxu0 0.0
    %3375 = vmatprep.subr.mxu0 0.0
    %3376 = vmatpush1.msra.mxu0 0.0
    %3377 = vmatprep.mubr.f32.mxu0 0.0
    %3378 = vmatmul.mubr.f32.gmra.mrb[0].mxu0 %v3302
    %v3379 = vpop.f32.mrb[0].mxu0
    %v3380 = vadd.f32 0.0, %v3379
    %v3381 = vpop.f32.mrb[0].mxu0
    %3382 = vmatprep.mubr.f32.mxu0 0.0
    %3383 = vmatmul.mubr.f32.gmra.mrb[0].mxu0 %v3305
    %v3384 = vpop.f32.mrb[0].mxu0
    %v3385 = vadd.f32 0.0, %v3384
    %v3386 = vpop.f32.mrb[0].mxu0
    %3387 = vmatprep.mubr.f32.mxu0 0.0
    %3388 = vmatmul.mubr.f32.gmra.mrb[0].mxu0 %v3308
    %v3389 = vpop.f32.mrb[0].mxu0
    %v3390 = vadd.f32 0.0, %v3389
    %v3391 = vpop.f32.mrb[0].mxu0
    %3392 = vmatprep.mubr.f32.mxu0 0.0
    %3393 = vmatmul.mubr.f32.gmra.mrb[0].mxu0 %v3311
    %v3394 = vpop.f32.mrb[0].mxu0
    %v3395 = vadd.f32 0.0, %v3394
    %v3396 = vpop.f32.mrb[0].mxu0
    %3397 = vdwg.mxu0
    %v3399 = vsel %vm69, %v3160, 0
    %v3402 = vsel %vm69, %v3165, 0
    %v3405 = vsel %vm69, %v3170, 0
    %v3408 = vsel %vm69, %v3175, 0
    %3410 = vmatprep.subr.mxu0 0.0
    %3411 = vmatpush1.msra.mxu0 %v3284
    %3412 = vmatprep.subr.mxu0 0.0
    %3413 = vmatpush1.msra.mxu0 %v3285
    %3414 = vmatprep.subr.mxu0 0.0
    %3415 = vmatpush1.msra.mxu0 %v3286
    %3416 = vmatprep.subr.mxu0 0.0
    %3417 = vmatpush1.msra.mxu0 %v3287
    %3418 = vmatprep.subr.mxu0 0.0
    %3419 = vmatpush1.msra.mxu0 %v3288
    %3420 = vmatprep.subr.mxu0 0.0
    %3421 = vmatpush1.msra.mxu0 %v3289
    %3422 = vmatprep.subr.mxu0 0.0
    %3423 = vmatpush1.msra.mxu0 %v3290
    %3424 = vmatprep.subr.mxu0 0.0
    %3425 = vmatpush1.msra.mxu0 %v3291
    %3426 = vmatprep.subr.mxu0 0.0
    %3427 = vmatpush1.msra.mxu0 0.0
    %3428 = vmatprep.subr.mxu0 0.0
    %3429 = vmatpush1.msra.mxu0 0.0
    %3430 = vmatprep.subr.mxu0 0.0
    %3431 = vmatpush1.msra.mxu0 0.0
    %3432 = vmatprep.subr.mxu0 0.0
    %3433 = vmatpush1.msra.mxu0 0.0
    %3434 = vmatprep.subr.mxu0 0.0
    %3435 = vmatpush1.msra.mxu0 0.0
    %3436 = vmatprep.subr.mxu0 0.0
    %3437 = vmatpush1.msra.mxu0 0.0
    %3438 = vmatprep.subr.mxu0 0.0
    %3439 = vmatpush1.msra.mxu0 0.0
    %3440 = vmatprep.subr.mxu0 0.0
    %3441 = vmatpush1.msra.mxu0 0.0
    %3442 = vmatprep.subr.mxu0 0.0
    %3443 = vmatpush1.msra.mxu0 0.0
    %3444 = vmatprep.subr.mxu0 0.0
    %3445 = vmatpush1.msra.mxu0 0.0
    %3446 = vmatprep.subr.mxu0 0.0
    %3447 = vmatpush1.msra.mxu0 0.0
    %3448 = vmatprep.subr.mxu0 0.0
    %3449 = vmatpush1.msra.mxu0 0.0
    %3450 = vmatprep.subr.mxu0 0.0
    %3451 = vmatpush1.msra.mxu0 0.0
    %3452 = vmatprep.subr.mxu0 0.0
    %3453 = vmatpush1.msra.mxu0 0.0
    %3454 = vmatprep.subr.mxu0 0.0
    %3455 = vmatpush1.msra.mxu0 0.0
    %3456 = vmatprep.subr.mxu0 0.0
    %3457 = vmatpush1.msra.mxu0 0.0
    %3458 = vmatprep.subr.mxu0 0.0
    %3459 = vmatpush1.msra.mxu0 0.0
    %3460 = vmatprep.subr.mxu0 0.0
    %3461 = vmatpush1.msra.mxu0 0.0
    %3462 = vmatprep.subr.mxu0 0.0
    %3463 = vmatpush1.msra.mxu0 0.0
    %3464 = vmatprep.subr.mxu0 0.0
    %3465 = vmatpush1.msra.mxu0 0.0
    %3466 = vmatprep.subr.mxu0 0.0
    %3467 = vmatpush1.msra.mxu0 0.0
    %3468 = vmatprep.subr.mxu0 0.0
    %3469 = vmatpush1.msra.mxu0 0.0
    %3470 = vmatprep.subr.mxu0 0.0
    %3471 = vmatpush1.msra.mxu0 0.0
    %3472 = vmatprep.subr.mxu0 0.0
    %3473 = vmatpush1.msra.mxu0 0.0
    %3474 = vmatprep.mubr.f32.mxu0 0.0
    %3475 = vmatmul.mubr.f32.gmra.mrb[0].mxu0 %v3399
    %v3476 = vpop.f32.mrb[0].mxu0
    %v3477 = vadd.f32 %v3380, %v3476
    %v3478 = vpop.f32.mrb[0].mxu0
    %3479 = vmatprep.mubr.f32.mxu0 0.0
    %3480 = vmatmul.mubr.f32.gmra.mrb[0].mxu0 %v3402
    %v3481 = vpop.f32.mrb[0].mxu0
    %v3482 = vadd.f32 %v3385, %v3481
    %v3483 = vpop.f32.mrb[0].mxu0
    %3484 = vmatprep.mubr.f32.mxu0 0.0
    %3485 = vmatmul.mubr.f32.gmra.mrb[0].mxu0 %v3405
    %v3486 = vpop.f32.mrb[0].mxu0
    %v3487 = vadd.f32 %v3390, %v3486
    %v3488 = vpop.f32.mrb[0].mxu0
    %3489 = vmatprep.mubr.f32.mxu0 0.0
    %3490 = vmatmul.mubr.f32.gmra.mrb[0].mxu0 %v3408
    %v3491 = vpop.f32.mrb[0].mxu0
    %v3492 = vadd.f32 %v3395, %v3491
    %v3493 = vpop.f32.mrb[0].mxu0
    %3494 = vdwg.mxu0
    %v3496 = vsel %vm3186, %v3182, 0
    %v3499 = vsel %vm3186, %v3183, 0
    %v3502 = vsel %vm3186, %v3184, 0
    %v3505 = vsel %vm3186, %v3185, 0
    %3507 = vmatprep.subr.mxu0 0.0
    %3508 = vmatpush1.msra.mxu0 %v3266
    %3509 = vmatprep.subr.mxu0 0.0
    %3510 = vmatpush1.msra.mxu0 %v3271
    %3511 = vmatprep.subr.mxu0 0.0
    %3512 = vmatpush1.msra.mxu0 %v3276
    %3513 = vmatprep.subr.mxu0 0.0
    %3514 = vmatpush1.msra.mxu0 %v3281
    %3515 = vmatprep.subr.mxu0 0.0
    %3516 = vmatpush1.msra.mxu0 0.0
    %3517 = vmatprep.subr.mxu0 0.0
    %3518 = vmatpush1.msra.mxu0 0.0
    %3519 = vmatprep.subr.mxu0 0.0
    %3520 = vmatpush1.msra.mxu0 0.0
    %3521 = vmatprep.subr.mxu0 0.0
    %3522 = vmatpush1.msra.mxu0 0.0
    %3523 = vmatprep.subr.mxu0 0.0
    %3524 = vmatpush1.msra.mxu0 0.0
    %3525 = vmatprep.subr.mxu0 0.0
    %3526 = vmatpush1.msra.mxu0 0.0
    %3527 = vmatprep.subr.mxu0 0.0
    %3528 = vmatpush1.msra.mxu0 0.0
    %3529 = vmatprep.subr.mxu0 0.0
    %3530 = vmatpush1.msra.mxu0 0.0
    %3531 = vmatprep.subr.mxu0 0.0
    %3532 = vmatpush1.msra.mxu0 0.0
    %3533 = vmatprep.subr.mxu0 0.0
    %3534 = vmatpush1.msra.mxu0 0.0
    %3535 = vmatprep.subr.mxu0 0.0
    %3536 = vmatpush1.msra.mxu0 0.0
    %3537 = vmatprep.subr.mxu0 0.0
    %3538 = vmatpush1.msra.mxu0 0.0
    %3539 = vmatprep.subr.mxu0 0.0
    %3540 = vmatpush1.msra.mxu0 0.0
    %3541 = vmatprep.subr.mxu0 0.0
    %3542 = vmatpush1.msra.mxu0 0.0
    %3543 = vmatprep.subr.mxu0 0.0
    %3544 = vmatpush1.msra.mxu0 0.0
    %3545 = vmatprep.subr.mxu0 0.0
    %3546 = vmatpush1.msra.mxu0 0.0
    %3547 = vmatprep.subr.mxu0 0.0
    %3548 = vmatpush1.msra.mxu0 0.0
    %3549 = vmatprep.subr.mxu0 0.0
    %3550 = vmatpush1.msra.mxu0 0.0
    %3551 = vmatprep.subr.mxu0 0.0
    %3552 = vmatpush1.msra.mxu0 0.0
    %3553 = vmatprep.subr.mxu0 0.0
    %3554 = vmatpush1.msra.mxu0 0.0
    %3555 = vmatprep.subr.mxu0 0.0
    %3556 = vmatpush1.msra.mxu0 0.0
    %3557 = vmatprep.subr.mxu0 0.0
    %3558 = vmatpush1.msra.mxu0 0.0
    %3559 = vmatprep.subr.mxu0 0.0
    %3560 = vmatpush1.msra.mxu0 0.0
    %3561 = vmatprep.subr.mxu0 0.0
    %3562 = vmatpush1.msra.mxu0 0.0
    %3563 = vmatprep.subr.mxu0 0.0
    %3564 = vmatpush1.msra.mxu0 0.0
    %3565 = vmatprep.subr.mxu0 0.0
    %3566 = vmatpush1.msra.mxu0 0.0
    %3567 = vmatprep.subr.mxu0 0.0
    %3568 = vmatpush1.msra.mxu0 0.0
    %3569 = vmatprep.subr.mxu0 0.0
    %3570 = vmatpush1.msra.mxu0 0.0
    %3571 = vmatprep.mubr.f32.mxu0 0.0
    %3572 = vmatmul.mubr.f32.gmra.mrb[0].mxu0 %v3496
    %v3573 = vpop.f32.mrb[0].mxu0
    %v3574 = vadd.f32 0.0, %v3573
    %v3575 = vpop.f32.mrb[0].mxu0
    %3576 = vmatprep.mubr.f32.mxu0 0.0
    %3577 = vmatmul.mubr.f32.gmra.mrb[0].mxu0 %v3499
    %v3578 = vpop.f32.mrb[0].mxu0
    %v3579 = vadd.f32 0.0, %v3578
    %v3580 = vpop.f32.mrb[0].mxu0
    %3581 = vmatprep.mubr.f32.mxu0 0.0
    %3582 = vmatmul.mubr.f32.gmra.mrb[0].mxu0 %v3502
    %v3583 = vpop.f32.mrb[0].mxu0
    %v3584 = vadd.f32 0.0, %v3583
    %v3585 = vpop.f32.mrb[0].mxu0
    %3586 = vmatprep.mubr.f32.mxu0 0.0
    %3587 = vmatmul.mubr.f32.gmra.mrb[0].mxu0 %v3505
    %v3588 = vpop.f32.mrb[0].mxu0
    %v3589 = vadd.f32 0.0, %v3588
    %v3590 = vpop.f32.mrb[0].mxu0
    %3591 = vdwg.mxu0
    %v3592 = vsub.f32 %v3574, %v3160
    %v3593 = vsub.f32 %v3579, %v3165
    %v3594 = vsub.f32 %v3584, %v3170
    %v3595 = vsub.f32 %v3589, %v3175
    %s3596 = scalar_lea.vmem %s6, 128
    %v3597 = vld [vmem:[%s3596] sm:$0xff]
    %v3598 = vld [vmem:[%s3596 + $0x8] sm:$0xff]
    %v3599 = vld [vmem:[%s3596 + $0x10] sm:$0xff]
    %v3600 = vld [vmem:[%s3596 + $0x18] sm:$0xff]
    %v3601 = vld [vmem:[%s3596 + $0x20] sm:$0xff]
    %v3602 = vld [vmem:[%s3596 + $0x28] sm:$0xff]
    %v3603 = vld [vmem:[%s3596 + $0x30] sm:$0xff]
    %v3604 = vld [vmem:[%s3596 + $0x38] sm:$0xff]
    %v3606 = vsel %vm69, %v3592, 0
    %v3609 = vsel %vm69, %v3593, 0
    %v3612 = vsel %vm69, %v3594, 0
    %v3615 = vsel %vm69, %v3595, 0
    %3617 = vmatprep.subr.mxu0 0.0
    %3618 = vmatpush1.msra.mxu0 %v3597
    %3619 = vmatprep.subr.mxu0 0.0
    %3620 = vmatpush1.msra.mxu0 %v3598
    %3621 = vmatprep.subr.mxu0 0.0
    %3622 = vmatpush1.msra.mxu0 %v3599
    %3623 = vmatprep.subr.mxu0 0.0
    %3624 = vmatpush1.msra.mxu0 %v3600
    %3625 = vmatprep.subr.mxu0 0.0
    %3626 = vmatpush1.msra.mxu0 %v3601
    %3627 = vmatprep.subr.mxu0 0.0
    %3628 = vmatpush1.msra.mxu0 %v3602
    %3629 = vmatprep.subr.mxu0 0.0
    %3630 = vmatpush1.msra.mxu0 %v3603
    %3631 = vmatprep.subr.mxu0 0.0
    %3632 = vmatpush1.msra.mxu0 %v3604
    %3633 = vmatprep.subr.mxu0 0.0
    %3634 = vmatpush1.msra.mxu0 0.0
    %3635 = vmatprep.subr.mxu0 0.0
    %3636 = vmatpush1.msra.mxu0 0.0
    %3637 = vmatprep.subr.mxu0 0.0
    %3638 = vmatpush1.msra.mxu0 0.0
    %3639 = vmatprep.subr.mxu0 0.0
    %3640 = vmatpush1.msra.mxu0 0.0
    %3641 = vmatprep.subr.mxu0 0.0
    %3642 = vmatpush1.msra.mxu0 0.0
    %3643 = vmatprep.subr.mxu0 0.0
    %3644 = vmatpush1.msra.mxu0 0.0
    %3645 = vmatprep.subr.mxu0 0.0
    %3646 = vmatpush1.msra.mxu0 0.0
    %3647 = vmatprep.subr.mxu0 0.0
    %3648 = vmatpush1.msra.mxu0 0.0
    %3649 = vmatprep.subr.mxu0 0.0
    %3650 = vmatpush1.msra.mxu0 0.0
    %3651 = vmatprep.subr.mxu0 0.0
    %3652 = vmatpush1.msra.mxu0 0.0
    %3653 = vmatprep.subr.mxu0 0.0
    %3654 = vmatpush1.msra.mxu0 0.0
    %3655 = vmatprep.subr.mxu0 0.0
    %3656 = vmatpush1.msra.mxu0 0.0
    %3657 = vmatprep.subr.mxu0 0.0
    %3658 = vmatpush1.msra.mxu0 0.0
    %3659 = vmatprep.subr.mxu0 0.0
    %3660 = vmatpush1.msra.mxu0 0.0
    %3661 = vmatprep.subr.mxu0 0.0
    %3662 = vmatpush1.msra.mxu0 0.0
    %3663 = vmatprep.subr.mxu0 0.0
    %3664 = vmatpush1.msra.mxu0 0.0
    %3665 = vmatprep.subr.mxu0 0.0
    %3666 = vmatpush1.msra.mxu0 0.0
    %3667 = vmatprep.subr.mxu0 0.0
    %3668 = vmatpush1.msra.mxu0 0.0
    %3669 = vmatprep.subr.mxu0 0.0
    %3670 = vmatpush1.msra.mxu0 0.0
    %3671 = vmatprep.subr.mxu0 0.0
    %3672 = vmatpush1.msra.mxu0 0.0
    %3673 = vmatprep.subr.mxu0 0.0
    %3674 = vmatpush1.msra.mxu0 0.0
    %3675 = vmatprep.subr.mxu0 0.0
    %3676 = vmatpush1.msra.mxu0 0.0
    %3677 = vmatprep.subr.mxu0 0.0
    %3678 = vmatpush1.msra.mxu0 0.0
    %3679 = vmatprep.subr.mxu0 0.0
    %3680 = vmatpush1.msra.mxu0 0.0
    %3681 = vmatprep.mubr.f32.mxu0 0.0
    %3682 = vmatmul.mubr.f32.gmra.mrb[0].mxu0 %v3606
    %v3683 = vpop.f32.mrb[0].mxu0
    %v3684 = vadd.f32 0.0, %v3683
    %v3685 = vpop.f32.mrb[0].mxu0
    %3686 = vmatprep.mubr.f32.mxu0 0.0
    %3687 = vmatmul.mubr.f32.gmra.mrb[0].mxu0 %v3609
    %v3688 = vpop.f32.mrb[0].mxu0
    %v3689 = vadd.f32 0.0, %v3688
    %v3690 = vpop.f32.mrb[0].mxu0
    %3691 = vmatprep.mubr.f32.mxu0 0.0
    %3692 = vmatmul.mubr.f32.gmra.mrb[0].mxu0 %v3612
    %v3693 = vpop.f32.mrb[0].mxu0
    %v3694 = vadd.f32 0.0, %v3693
    %v3695 = vpop.f32.mrb[0].mxu0
    %3696 = vmatprep.mubr.f32.mxu0 0.0
    %3697 = vmatmul.mubr.f32.gmra.mrb[0].mxu0 %v3615
    %v3698 = vpop.f32.mrb[0].mxu0
    %v3699 = vadd.f32 0.0, %v3698
    %v3700 = vpop.f32.mrb[0].mxu0
    %3701 = vdwg.mxu0
    %v3702 = vadd.f32 %v3477, %v3684
    %v3703 = vadd.f32 %v3482, %v3689
    %v3704 = vadd.f32 %v3487, %v3694
    %v3705 = vadd.f32 %v3492, %v3699
    %3706 = vmatprep.subr.mxu0 0.0
    %3707 = vmatpush1.msra.mxu0 %v3592
    %3708 = vmatprep.subr.mxu0 0.0
    %3709 = vmatpush1.msra.mxu0 %v3593
    %3710 = vmatprep.subr.mxu0 0.0
    %3711 = vmatpush1.msra.mxu0 %v3594
    %3712 = vmatprep.subr.mxu0 0.0
    %3713 = vmatpush1.msra.mxu0 %v3595
    %3714 = vmatprep.subr.mxu0 0.0
    %3715 = vmatpush1.msra.mxu0 0.0
    %3716 = vmatprep.subr.mxu0 0.0
    %3717 = vmatpush1.msra.mxu0 0.0
    %3718 = vmatprep.subr.mxu0 0.0
    %3719 = vmatpush1.msra.mxu0 0.0
    %3720 = vmatprep.subr.mxu0 0.0
    %3721 = vmatpush1.msra.mxu0 0.0
    %3722 = vmatprep.subr.mxu0 0.0
    %3723 = vmatpush1.msra.mxu0 0.0
    %3724 = vmatprep.subr.mxu0 0.0
    %3725 = vmatpush1.msra.mxu0 0.0
    %3726 = vmatprep.subr.mxu0 0.0
    %3727 = vmatpush1.msra.mxu0 0.0
    %3728 = vmatprep.subr.mxu0 0.0
    %3729 = vmatpush1.msra.mxu0 0.0
    %3730 = vmatprep.subr.mxu0 0.0
    %3731 = vmatpush1.msra.mxu0 0.0
    %3732 = vmatprep.subr.mxu0 0.0
    %3733 = vmatpush1.msra.mxu0 0.0
    %3734 = vmatprep.subr.mxu0 0.0
    %3735 = vmatpush1.msra.mxu0 0.0
    %3736 = vmatprep.subr.mxu0 0.0
    %3737 = vmatpush1.msra.mxu0 0.0
    %3738 = vmatprep.subr.mxu0 0.0
    %3739 = vmatpush1.msra.mxu0 0.0
    %3740 = vmatprep.subr.mxu0 0.0
    %3741 = vmatpush1.msra.mxu0 0.0
    %3742 = vmatprep.subr.mxu0 0.0
    %3743 = vmatpush1.msra.mxu0 0.0
    %3744 = vmatprep.subr.mxu0 0.0
    %3745 = vmatpush1.msra.mxu0 0.0
    %3746 = vmatprep.subr.mxu0 0.0
    %3747 = vmatpush1.msra.mxu0 0.0
    %3748 = vmatprep.subr.mxu0 0.0
    %3749 = vmatpush1.msra.mxu0 0.0
    %3750 = vmatprep.subr.mxu0 0.0
    %3751 = vmatpush1.msra.mxu0 0.0
    %3752 = vmatprep.subr.mxu0 0.0
    %3753 = vmatpush1.msra.mxu0 0.0
    %3754 = vmatprep.subr.mxu0 0.0
    %3755 = vmatpush1.msra.mxu0 0.0
    %3756 = vmatprep.subr.mxu0 0.0
    %3757 = vmatpush1.msra.mxu0 0.0
    %3758 = vmatprep.subr.mxu0 0.0
    %3759 = vmatpush1.msra.mxu0 0.0
    %3760 = vmatprep.subr.mxu0 0.0
    %3761 = vmatpush1.msra.mxu0 0.0
    %3762 = vmatprep.subr.mxu0 0.0
    %3763 = vmatpush1.msra.mxu0 0.0
    %3764 = vmatprep.subr.mxu0 0.0
    %3765 = vmatpush1.msra.mxu0 0.0
    %3766 = vmatprep.subr.mxu0 0.0
    %3767 = vmatpush1.msra.mxu0 0.0
    %3768 = vmatprep.subr.mxu0 0.0
    %3769 = vmatpush1.msra.mxu0 0.0
    %3770 = vmatprep.mubr.f32.mxu0 0.0
    %3771 = vmatmul.mubr.f32.gmra.mrb[0].mxu0 %v3496
    %v3772 = vpop.f32.mrb[0].mxu0
    %v3773 = vadd.f32 0.0, %v3772
    %v3774 = vpop.f32.mrb[0].mxu0
    %3775 = vmatprep.mubr.f32.mxu0 0.0
    %3776 = vmatmul.mubr.f32.gmra.mrb[0].mxu0 %v3499
    %v3777 = vpop.f32.mrb[0].mxu0
    %v3778 = vadd.f32 0.0, %v3777
    %v3779 = vpop.f32.mrb[0].mxu0
    %3780 = vmatprep.mubr.f32.mxu0 0.0
    %3781 = vmatmul.mubr.f32.gmra.mrb[0].mxu0 %v3502
    %v3782 = vpop.f32.mrb[0].mxu0
    %v3783 = vadd.f32 0.0, %v3782
    %v3784 = vpop.f32.mrb[0].mxu0
    %3785 = vmatprep.mubr.f32.mxu0 0.0
    %3786 = vmatmul.mubr.f32.gmra.mrb[0].mxu0 %v3505
    %v3787 = vpop.f32.mrb[0].mxu0
    %v3788 = vadd.f32 0.0, %v3787
    %v3789 = vpop.f32.mrb[0].mxu0
    %3790 = vdwg.mxu0
    %v3791 = vsub.f32 %v3773, %v3266
    %v3792 = vsub.f32 %v3778, %v3271
    %v3793 = vsub.f32 %v3783, %v3276
    %v3794 = vsub.f32 %v3788, %v3281
    %s3795 = scalar_lea.vmem %s6, 192
    %v3796 = vld [vmem:[%s3795] sm:$0xff]
    %v3797 = vld [vmem:[%s3795 + $0x8] sm:$0xff]
    %v3798 = vld [vmem:[%s3795 + $0x10] sm:$0xff]
    %v3799 = vld [vmem:[%s3795 + $0x18] sm:$0xff]
    %v3800 = vld [vmem:[%s3795 + $0x20] sm:$0xff]
    %v3801 = vld [vmem:[%s3795 + $0x28] sm:$0xff]
    %v3802 = vld [vmem:[%s3795 + $0x30] sm:$0xff]
    %v3803 = vld [vmem:[%s3795 + $0x38] sm:$0xff]
    %v3805 = vsel %vm69, %v3791, 0
    %v3808 = vsel %vm69, %v3792, 0
    %v3811 = vsel %vm69, %v3793, 0
    %v3814 = vsel %vm69, %v3794, 0
    %3816 = vmatprep.subr.mxu0 0.0
    %3817 = vmatpush1.msra.mxu0 %v3796
    %3818 = vmatprep.subr.mxu0 0.0
    %3819 = vmatpush1.msra.mxu0 %v3797
    %3820 = vmatprep.subr.mxu0 0.0
    %3821 = vmatpush1.msra.mxu0 %v3798
    %3822 = vmatprep.subr.mxu0 0.0
    %3823 = vmatpush1.msra.mxu0 %v3799
    %3824 = vmatprep.subr.mxu0 0.0
    %3825 = vmatpush1.msra.mxu0 %v3800
    %3826 = vmatprep.subr.mxu0 0.0
    %3827 = vmatpush1.msra.mxu0 %v3801
    %3828 = vmatprep.subr.mxu0 0.0
    %3829 = vmatpush1.msra.mxu0 %v3802
    %3830 = vmatprep.subr.mxu0 0.0
    %3831 = vmatpush1.msra.mxu0 %v3803
    %3832 = vmatprep.subr.mxu0 0.0
    %3833 = vmatpush1.msra.mxu0 0.0
    %3834 = vmatprep.subr.mxu0 0.0
    %3835 = vmatpush1.msra.mxu0 0.0
    %3836 = vmatprep.subr.mxu0 0.0
    %3837 = vmatpush1.msra.mxu0 0.0
    %3838 = vmatprep.subr.mxu0 0.0
    %3839 = vmatpush1.msra.mxu0 0.0
    %3840 = vmatprep.subr.mxu0 0.0
    %3841 = vmatpush1.msra.mxu0 0.0
    %3842 = vmatprep.subr.mxu0 0.0
    %3843 = vmatpush1.msra.mxu0 0.0
    %3844 = vmatprep.subr.mxu0 0.0
    %3845 = vmatpush1.msra.mxu0 0.0
    %3846 = vmatprep.subr.mxu0 0.0
    %3847 = vmatpush1.msra.mxu0 0.0
    %3848 = vmatprep.subr.mxu0 0.0
    %3849 = vmatpush1.msra.mxu0 0.0
    %3850 = vmatprep.subr.mxu0 0.0
    %3851 = vmatpush1.msra.mxu0 0.0
    %3852 = vmatprep.subr.mxu0 0.0
    %3853 = vmatpush1.msra.mxu0 0.0
    %3854 = vmatprep.subr.mxu0 0.0
    %3855 = vmatpush1.msra.mxu0 0.0
    %3856 = vmatprep.subr.mxu0 0.0
    %3857 = vmatpush1.msra.mxu0 0.0
    %3858 = vmatprep.subr.mxu0 0.0
    %3859 = vmatpush1.msra.mxu0 0.0
    %3860 = vmatprep.subr.mxu0 0.0
    %3861 = vmatpush1.msra.mxu0 0.0
    %3862 = vmatprep.subr.mxu0 0.0
    %3863 = vmatpush1.msra.mxu0 0.0
    %3864 = vmatprep.subr.mxu0 0.0
    %3865 = vmatpush1.msra.mxu0 0.0
    %3866 = vmatprep.subr.mxu0 0.0
    %3867 = vmatpush1.msra.mxu0 0.0
    %3868 = vmatprep.subr.mxu0 0.0
    %3869 = vmatpush1.msra.mxu0 0.0
    %3870 = vmatprep.subr.mxu0 0.0
    %3871 = vmatpush1.msra.mxu0 0.0
    %3872 = vmatprep.subr.mxu0 0.0
    %3873 = vmatpush1.msra.mxu0 0.0
    %3874 = vmatprep.subr.mxu0 0.0
    %3875 = vmatpush1.msra.mxu0 0.0
    %3876 = vmatprep.subr.mxu0 0.0
    %3877 = vmatpush1.msra.mxu0 0.0
    %3878 = vmatprep.subr.mxu0 0.0
    %3879 = vmatpush1.msra.mxu0 0.0
    %3880 = vmatprep.mubr.f32.mxu0 0.0
    %3881 = vmatmul.mubr.f32.gmra.mrb[0].mxu0 %v3805
    %v3882 = vpop.f32.mrb[0].mxu0
    %v3883 = vadd.f32 0.0, %v3882
    %v3884 = vpop.f32.mrb[0].mxu0
    %3885 = vmatprep.mubr.f32.mxu0 0.0
    %3886 = vmatmul.mubr.f32.gmra.mrb[0].mxu0 %v3808
    %v3887 = vpop.f32.mrb[0].mxu0
    %v3888 = vadd.f32 0.0, %v3887
    %v3889 = vpop.f32.mrb[0].mxu0
    %3890 = vmatprep.mubr.f32.mxu0 0.0
    %3891 = vmatmul.mubr.f32.gmra.mrb[0].mxu0 %v3811
    %v3892 = vpop.f32.mrb[0].mxu0
    %v3893 = vadd.f32 0.0, %v3892
    %v3894 = vpop.f32.mrb[0].mxu0
    %3895 = vmatprep.mubr.f32.mxu0 0.0
    %3896 = vmatmul.mubr.f32.gmra.mrb[0].mxu0 %v3814
    %v3897 = vpop.f32.mrb[0].mxu0
    %v3898 = vadd.f32 0.0, %v3897
    %v3899 = vpop.f32.mrb[0].mxu0
    %3900 = vdwg.mxu0
    %v3901 = vadd.f32 %v3702, %v3883
    %v3902 = vadd.f32 %v3703, %v3888
    %v3903 = vadd.f32 %v3704, %v3893
    %v3904 = vadd.f32 %v3705, %v3898
    %3905 = vmatprep.subr.mxu0 0.0
    %3906 = vmatpush1.msra.mxu0 %v3791
    %3907 = vmatprep.subr.mxu0 0.0
    %3908 = vmatpush1.msra.mxu0 %v3792
    %3909 = vmatprep.subr.mxu0 0.0
    %3910 = vmatpush1.msra.mxu0 %v3793
    %3911 = vmatprep.subr.mxu0 0.0
    %3912 = vmatpush1.msra.mxu0 %v3794
    %3913 = vmatprep.subr.mxu0 0.0
    %3914 = vmatpush1.msra.mxu0 0.0
    %3915 = vmatprep.subr.mxu0 0.0
    %3916 = vmatpush1.msra.mxu0 0.0
    %3917 = vmatprep.subr.mxu0 0.0
    %3918 = vmatpush1.msra.mxu0 0.0
    %3919 = vmatprep.subr.mxu0 0.0
    %3920 = vmatpush1.msra.mxu0 0.0
    %3921 = vmatprep.subr.mxu0 0.0
    %3922 = vmatpush1.msra.mxu0 0.0
    %3923 = vmatprep.subr.mxu0 0.0
    %3924 = vmatpush1.msra.mxu0 0.0
    %3925 = vmatprep.subr.mxu0 0.0
    %3926 = vmatpush1.msra.mxu0 0.0
    %3927 = vmatprep.subr.mxu0 0.0
    %3928 = vmatpush1.msra.mxu0 0.0
    %3929 = vmatprep.subr.mxu0 0.0
    %3930 = vmatpush1.msra.mxu0 0.0
    %3931 = vmatprep.subr.mxu0 0.0
    %3932 = vmatpush1.msra.mxu0 0.0
    %3933 = vmatprep.subr.mxu0 0.0
    %3934 = vmatpush1.msra.mxu0 0.0
    %3935 = vmatprep.subr.mxu0 0.0
    %3936 = vmatpush1.msra.mxu0 0.0
    %3937 = vmatprep.subr.mxu0 0.0
    %3938 = vmatpush1.msra.mxu0 0.0
    %3939 = vmatprep.subr.mxu0 0.0
    %3940 = vmatpush1.msra.mxu0 0.0
    %3941 = vmatprep.subr.mxu0 0.0
    %3942 = vmatpush1.msra.mxu0 0.0
    %3943 = vmatprep.subr.mxu0 0.0
    %3944 = vmatpush1.msra.mxu0 0.0
    %3945 = vmatprep.subr.mxu0 0.0
    %3946 = vmatpush1.msra.mxu0 0.0
    %3947 = vmatprep.subr.mxu0 0.0
    %3948 = vmatpush1.msra.mxu0 0.0
    %3949 = vmatprep.subr.mxu0 0.0
    %3950 = vmatpush1.msra.mxu0 0.0
    %3951 = vmatprep.subr.mxu0 0.0
    %3952 = vmatpush1.msra.mxu0 0.0
    %3953 = vmatprep.subr.mxu0 0.0
    %3954 = vmatpush1.msra.mxu0 0.0
    %3955 = vmatprep.subr.mxu0 0.0
    %3956 = vmatpush1.msra.mxu0 0.0
    %3957 = vmatprep.subr.mxu0 0.0
    %3958 = vmatpush1.msra.mxu0 0.0
    %3959 = vmatprep.subr.mxu0 0.0
    %3960 = vmatpush1.msra.mxu0 0.0
    %3961 = vmatprep.subr.mxu0 0.0
    %3962 = vmatpush1.msra.mxu0 0.0
    %3963 = vmatprep.subr.mxu0 0.0
    %3964 = vmatpush1.msra.mxu0 0.0
    %3965 = vmatprep.subr.mxu0 0.0
    %3966 = vmatpush1.msra.mxu0 0.0
    %3967 = vmatprep.subr.mxu0 0.0
    %3968 = vmatpush1.msra.mxu0 0.0
    %3969 = vmatprep.mubr.f32.mxu0 0.0
    %3970 = vmatmul.mubr.f32.gmra.mrb[0].mxu0 %v3496
    %v3971 = vpop.f32.mrb[0].mxu0
    %v3972 = vadd.f32 0.0, %v3971
    %v3973 = vpop.f32.mrb[0].mxu0
    %3974 = vmatprep.mubr.f32.mxu0 0.0
    %3975 = vmatmul.mubr.f32.gmra.mrb[0].mxu0 %v3499
    %v3976 = vpop.f32.mrb[0].mxu0
    %v3977 = vadd.f32 0.0, %v3976
    %v3978 = vpop.f32.mrb[0].mxu0
    %3979 = vmatprep.mubr.f32.mxu0 0.0
    %3980 = vmatmul.mubr.f32.gmra.mrb[0].mxu0 %v3502
    %v3981 = vpop.f32.mrb[0].mxu0
    %v3982 = vadd.f32 0.0, %v3981
    %v3983 = vpop.f32.mrb[0].mxu0
    %3984 = vmatprep.mubr.f32.mxu0 0.0
    %3985 = vmatmul.mubr.f32.gmra.mrb[0].mxu0 %v3505
    %v3986 = vpop.f32.mrb[0].mxu0
    %v3987 = vadd.f32 0.0, %v3986
    %v3988 = vpop.f32.mrb[0].mxu0
    %3989 = vdwg.mxu0
    %v3990 = vsub.f32 %v3972, %v3592
    %v3991 = vsub.f32 %v3977, %v3593
    %v3992 = vsub.f32 %v3982, %v3594
    %v3993 = vsub.f32 %v3987, %v3595
    %s3994 = scalar_lea.vmem %s6, 256
    %v3995 = vld [vmem:[%s3994] sm:$0xff]
    %v3996 = vld [vmem:[%s3994 + $0x8] sm:$0xff]
    %v3997 = vld [vmem:[%s3994 + $0x10] sm:$0xff]
    %v3998 = vld [vmem:[%s3994 + $0x18] sm:$0xff]
    %v3999 = vld [vmem:[%s3994 + $0x20] sm:$0xff]
    %v4000 = vld [vmem:[%s3994 + $0x28] sm:$0xff]
    %v4001 = vld [vmem:[%s3994 + $0x30] sm:$0xff]
    %v4002 = vld [vmem:[%s3994 + $0x38] sm:$0xff]
    %v4004 = vsel %vm69, %v3990, 0
    %v4007 = vsel %vm69, %v3991, 0
    %v4010 = vsel %vm69, %v3992, 0
    %v4013 = vsel %vm69, %v3993, 0
    %4015 = vmatprep.subr.mxu0 0.0
    %4016 = vmatpush1.msra.mxu0 %v3995
    %4017 = vmatprep.subr.mxu0 0.0
    %4018 = vmatpush1.msra.mxu0 %v3996
    %4019 = vmatprep.subr.mxu0 0.0
    %4020 = vmatpush1.msra.mxu0 %v3997
    %4021 = vmatprep.subr.mxu0 0.0
    %4022 = vmatpush1.msra.mxu0 %v3998
    %4023 = vmatprep.subr.mxu0 0.0
    %4024 = vmatpush1.msra.mxu0 %v3999
    %4025 = vmatprep.subr.mxu0 0.0
    %4026 = vmatpush1.msra.mxu0 %v4000
    %4027 = vmatprep.subr.mxu0 0.0
    %4028 = vmatpush1.msra.mxu0 %v4001
    %4029 = vmatprep.subr.mxu0 0.0
    %4030 = vmatpush1.msra.mxu0 %v4002
    %4031 = vmatprep.subr.mxu0 0.0
    %4032 = vmatpush1.msra.mxu0 0.0
    %4033 = vmatprep.subr.mxu0 0.0
    %4034 = vmatpush1.msra.mxu0 0.0
    %4035 = vmatprep.subr.mxu0 0.0
    %4036 = vmatpush1.msra.mxu0 0.0
    %4037 = vmatprep.subr.mxu0 0.0
    %4038 = vmatpush1.msra.mxu0 0.0
    %4039 = vmatprep.subr.mxu0 0.0
    %4040 = vmatpush1.msra.mxu0 0.0
    %4041 = vmatprep.subr.mxu0 0.0
    %4042 = vmatpush1.msra.mxu0 0.0
    %4043 = vmatprep.subr.mxu0 0.0
    %4044 = vmatpush1.msra.mxu0 0.0
    %4045 = vmatprep.subr.mxu0 0.0
    %4046 = vmatpush1.msra.mxu0 0.0
    %4047 = vmatprep.subr.mxu0 0.0
    %4048 = vmatpush1.msra.mxu0 0.0
    %4049 = vmatprep.subr.mxu0 0.0
    %4050 = vmatpush1.msra.mxu0 0.0
    %4051 = vmatprep.subr.mxu0 0.0
    %4052 = vmatpush1.msra.mxu0 0.0
    %4053 = vmatprep.subr.mxu0 0.0
    %4054 = vmatpush1.msra.mxu0 0.0
    %4055 = vmatprep.subr.mxu0 0.0
    %4056 = vmatpush1.msra.mxu0 0.0
    %4057 = vmatprep.subr.mxu0 0.0
    %4058 = vmatpush1.msra.mxu0 0.0
    %4059 = vmatprep.subr.mxu0 0.0
    %4060 = vmatpush1.msra.mxu0 0.0
    %4061 = vmatprep.subr.mxu0 0.0
    %4062 = vmatpush1.msra.mxu0 0.0
    %4063 = vmatprep.subr.mxu0 0.0
    %4064 = vmatpush1.msra.mxu0 0.0
    %4065 = vmatprep.subr.mxu0 0.0
    %4066 = vmatpush1.msra.mxu0 0.0
    %4067 = vmatprep.subr.mxu0 0.0
    %4068 = vmatpush1.msra.mxu0 0.0
    %4069 = vmatprep.subr.mxu0 0.0
    %4070 = vmatpush1.msra.mxu0 0.0
    %4071 = vmatprep.subr.mxu0 0.0
    %4072 = vmatpush1.msra.mxu0 0.0
    %4073 = vmatprep.subr.mxu0 0.0
    %4074 = vmatpush1.msra.mxu0 0.0
    %4075 = vmatprep.subr.mxu0 0.0
    %4076 = vmatpush1.msra.mxu0 0.0
    %4077 = vmatprep.subr.mxu0 0.0
    %4078 = vmatpush1.msra.mxu0 0.0
    %4079 = vmatprep.mubr.f32.mxu0 0.0
    %4080 = vmatmul.mubr.f32.gmra.mrb[0].mxu0 %v4004
    %v4081 = vpop.f32.mrb[0].mxu0
    %v4082 = vadd.f32 0.0, %v4081
    %v4083 = vpop.f32.mrb[0].mxu0
    %4084 = vmatprep.mubr.f32.mxu0 0.0
    %4085 = vmatmul.mubr.f32.gmra.mrb[0].mxu0 %v4007
    %v4086 = vpop.f32.mrb[0].mxu0
    %v4087 = vadd.f32 0.0, %v4086
    %v4088 = vpop.f32.mrb[0].mxu0
    %4089 = vmatprep.mubr.f32.mxu0 0.0
    %4090 = vmatmul.mubr.f32.gmra.mrb[0].mxu0 %v4010
    %v4091 = vpop.f32.mrb[0].mxu0
    %v4092 = vadd.f32 0.0, %v4091
    %v4093 = vpop.f32.mrb[0].mxu0
    %4094 = vmatprep.mubr.f32.mxu0 0.0
    %4095 = vmatmul.mubr.f32.gmra.mrb[0].mxu0 %v4013
    %v4096 = vpop.f32.mrb[0].mxu0
    %v4097 = vadd.f32 0.0, %v4096
    %v4098 = vpop.f32.mrb[0].mxu0
    %4099 = vdwg.mxu0
    %v4100 = vadd.f32 %v3901, %v4082
    %v4101 = vadd.f32 %v3902, %v4087
    %v4102 = vadd.f32 %v3903, %v4092
    %v4103 = vadd.f32 %v3904, %v4097
    %4104 = vmatprep.subr.mxu0 0.0
    %4105 = vmatpush1.msra.mxu0 %v3990
    %4106 = vmatprep.subr.mxu0 0.0
    %4107 = vmatpush1.msra.mxu0 %v3991
    %4108 = vmatprep.subr.mxu0 0.0
    %4109 = vmatpush1.msra.mxu0 %v3992
    %4110 = vmatprep.subr.mxu0 0.0
    %4111 = vmatpush1.msra.mxu0 %v3993
    %4112 = vmatprep.subr.mxu0 0.0
    %4113 = vmatpush1.msra.mxu0 0.0
    %4114 = vmatprep.subr.mxu0 0.0
    %4115 = vmatpush1.msra.mxu0 0.0
    %4116 = vmatprep.subr.mxu0 0.0
    %4117 = vmatpush1.msra.mxu0 0.0
    %4118 = vmatprep.subr.mxu0 0.0
    %4119 = vmatpush1.msra.mxu0 0.0
    %4120 = vmatprep.subr.mxu0 0.0
    %4121 = vmatpush1.msra.mxu0 0.0
    %4122 = vmatprep.subr.mxu0 0.0
    %4123 = vmatpush1.msra.mxu0 0.0
    %4124 = vmatprep.subr.mxu0 0.0
    %4125 = vmatpush1.msra.mxu0 0.0
    %4126 = vmatprep.subr.mxu0 0.0
    %4127 = vmatpush1.msra.mxu0 0.0
    %4128 = vmatprep.subr.mxu0 0.0
    %4129 = vmatpush1.msra.mxu0 0.0
    %4130 = vmatprep.subr.mxu0 0.0
    %4131 = vmatpush1.msra.mxu0 0.0
    %4132 = vmatprep.subr.mxu0 0.0
    %4133 = vmatpush1.msra.mxu0 0.0
    %4134 = vmatprep.subr.mxu0 0.0
    %4135 = vmatpush1.msra.mxu0 0.0
    %4136 = vmatprep.subr.mxu0 0.0
    %4137 = vmatpush1.msra.mxu0 0.0
    %4138 = vmatprep.subr.mxu0 0.0
    %4139 = vmatpush1.msra.mxu0 0.0
    %4140 = vmatprep.subr.mxu0 0.0
    %4141 = vmatpush1.msra.mxu0 0.0
    %4142 = vmatprep.subr.mxu0 0.0
    %4143 = vmatpush1.msra.mxu0 0.0
    %4144 = vmatprep.subr.mxu0 0.0
    %4145 = vmatpush1.msra.mxu0 0.0
    %4146 = vmatprep.subr.mxu0 0.0
    %4147 = vmatpush1.msra.mxu0 0.0
    %4148 = vmatprep.subr.mxu0 0.0
    %4149 = vmatpush1.msra.mxu0 0.0
    %4150 = vmatprep.subr.mxu0 0.0
    %4151 = vmatpush1.msra.mxu0 0.0
    %4152 = vmatprep.subr.mxu0 0.0
    %4153 = vmatpush1.msra.mxu0 0.0
    %4154 = vmatprep.subr.mxu0 0.0
    %4155 = vmatpush1.msra.mxu0 0.0
    %4156 = vmatprep.subr.mxu0 0.0
    %4157 = vmatpush1.msra.mxu0 0.0
    %4158 = vmatprep.subr.mxu0 0.0
    %4159 = vmatpush1.msra.mxu0 0.0
    %4160 = vmatprep.subr.mxu0 0.0
    %4161 = vmatpush1.msra.mxu0 0.0
    %4162 = vmatprep.subr.mxu0 0.0
    %4163 = vmatpush1.msra.mxu0 0.0
    %4164 = vmatprep.subr.mxu0 0.0
    %4165 = vmatpush1.msra.mxu0 0.0
    %4166 = vmatprep.subr.mxu0 0.0
    %4167 = vmatpush1.msra.mxu0 0.0
    %4168 = vmatprep.mubr.f32.mxu0 0.0
    %4169 = vmatmul.mubr.f32.gmra.mrb[0].mxu0 %v3496
    %v4170 = vpop.f32.mrb[0].mxu0
    %v4171 = vadd.f32 0.0, %v4170
    %v4172 = vpop.f32.mrb[0].mxu0
    %4173 = vmatprep.mubr.f32.mxu0 0.0
    %4174 = vmatmul.mubr.f32.gmra.mrb[0].mxu0 %v3499
    %v4175 = vpop.f32.mrb[0].mxu0
    %v4176 = vadd.f32 0.0, %v4175
    %v4177 = vpop.f32.mrb[0].mxu0
    %4178 = vmatprep.mubr.f32.mxu0 0.0
    %4179 = vmatmul.mubr.f32.gmra.mrb[0].mxu0 %v3502
    %v4180 = vpop.f32.mrb[0].mxu0
    %v4181 = vadd.f32 0.0, %v4180
    %v4182 = vpop.f32.mrb[0].mxu0
    %4183 = vmatprep.mubr.f32.mxu0 0.0
    %4184 = vmatmul.mubr.f32.gmra.mrb[0].mxu0 %v3505
    %v4185 = vpop.f32.mrb[0].mxu0
    %v4186 = vadd.f32 0.0, %v4185
    %v4187 = vpop.f32.mrb[0].mxu0
    %4188 = vdwg.mxu0
    %v4189 = vsub.f32 %v4171, %v3791
    %v4190 = vsub.f32 %v4176, %v3792
    %v4191 = vsub.f32 %v4181, %v3793
    %v4192 = vsub.f32 %v4186, %v3794
    %s4193 = scalar_lea.vmem %s6, 320
    %v4194 = vld [vmem:[%s4193] sm:$0xff]
    %v4195 = vld [vmem:[%s4193 + $0x8] sm:$0xff]
    %v4196 = vld [vmem:[%s4193 + $0x10] sm:$0xff]
    %v4197 = vld [vmem:[%s4193 + $0x18] sm:$0xff]
    %v4198 = vld [vmem:[%s4193 + $0x20] sm:$0xff]
    %v4199 = vld [vmem:[%s4193 + $0x28] sm:$0xff]
    %v4200 = vld [vmem:[%s4193 + $0x30] sm:$0xff]
    %v4201 = vld [vmem:[%s4193 + $0x38] sm:$0xff]
    %v4203 = vsel %vm69, %v4189, 0
    %v4206 = vsel %vm69, %v4190, 0
    %v4209 = vsel %vm69, %v4191, 0
    %v4212 = vsel %vm69, %v4192, 0
    %4214 = vmatprep.subr.mxu0 0.0
    %4215 = vmatpush1.msra.mxu0 %v4194
    %4216 = vmatprep.subr.mxu0 0.0
    %4217 = vmatpush1.msra.mxu0 %v4195
    %4218 = vmatprep.subr.mxu0 0.0
    %4219 = vmatpush1.msra.mxu0 %v4196
    %4220 = vmatprep.subr.mxu0 0.0
    %4221 = vmatpush1.msra.mxu0 %v4197
    %4222 = vmatprep.subr.mxu0 0.0
    %4223 = vmatpush1.msra.mxu0 %v4198
    %4224 = vmatprep.subr.mxu0 0.0
    %4225 = vmatpush1.msra.mxu0 %v4199
    %4226 = vmatprep.subr.mxu0 0.0
    %4227 = vmatpush1.msra.mxu0 %v4200
    %4228 = vmatprep.subr.mxu0 0.0
    %4229 = vmatpush1.msra.mxu0 %v4201
    %4230 = vmatprep.subr.mxu0 0.0
    %4231 = vmatpush1.msra.mxu0 0.0
    %4232 = vmatprep.subr.mxu0 0.0
    %4233 = vmatpush1.msra.mxu0 0.0
    %4234 = vmatprep.subr.mxu0 0.0
    %4235 = vmatpush1.msra.mxu0 0.0
    %4236 = vmatprep.subr.mxu0 0.0
    %4237 = vmatpush1.msra.mxu0 0.0
    %4238 = vmatprep.subr.mxu0 0.0
    %4239 = vmatpush1.msra.mxu0 0.0
    %4240 = vmatprep.subr.mxu0 0.0
    %4241 = vmatpush1.msra.mxu0 0.0
    %4242 = vmatprep.subr.mxu0 0.0
    %4243 = vmatpush1.msra.mxu0 0.0
    %4244 = vmatprep.subr.mxu0 0.0
    %4245 = vmatpush1.msra.mxu0 0.0
    %4246 = vmatprep.subr.mxu0 0.0
    %4247 = vmatpush1.msra.mxu0 0.0
    %4248 = vmatprep.subr.mxu0 0.0
    %4249 = vmatpush1.msra.mxu0 0.0
    %4250 = vmatprep.subr.mxu0 0.0
    %4251 = vmatpush1.msra.mxu0 0.0
    %4252 = vmatprep.subr.mxu0 0.0
    %4253 = vmatpush1.msra.mxu0 0.0
    %4254 = vmatprep.subr.mxu0 0.0
    %4255 = vmatpush1.msra.mxu0 0.0
    %4256 = vmatprep.subr.mxu0 0.0
    %4257 = vmatpush1.msra.mxu0 0.0
    %4258 = vmatprep.subr.mxu0 0.0
    %4259 = vmatpush1.msra.mxu0 0.0
    %4260 = vmatprep.subr.mxu0 0.0
    %4261 = vmatpush1.msra.mxu0 0.0
    %4262 = vmatprep.subr.mxu0 0.0
    %4263 = vmatpush1.msra.mxu0 0.0
    %4264 = vmatprep.subr.mxu0 0.0
    %4265 = vmatpush1.msra.mxu0 0.0
    %4266 = vmatprep.subr.mxu0 0.0
    %4267 = vmatpush1.msra.mxu0 0.0
    %4268 = vmatprep.subr.mxu0 0.0
    %4269 = vmatpush1.msra.mxu0 0.0
    %4270 = vmatprep.subr.mxu0 0.0
    %4271 = vmatpush1.msra.mxu0 0.0
    %4272 = vmatprep.subr.mxu0 0.0
    %4273 = vmatpush1.msra.mxu0 0.0
    %4274 = vmatprep.subr.mxu0 0.0
    %4275 = vmatpush1.msra.mxu0 0.0
    %4276 = vmatprep.subr.mxu0 0.0
    %4277 = vmatpush1.msra.mxu0 0.0
    %4278 = vmatprep.mubr.f32.mxu0 0.0
    %4279 = vmatmul.mubr.f32.gmra.mrb[0].mxu0 %v4203
    %v4280 = vpop.f32.mrb[0].mxu0
    %v4281 = vadd.f32 0.0, %v4280
    %v4282 = vpop.f32.mrb[0].mxu0
    %4283 = vmatprep.mubr.f32.mxu0 0.0
    %4284 = vmatmul.mubr.f32.gmra.mrb[0].mxu0 %v4206
    %v4285 = vpop.f32.mrb[0].mxu0
    %v4286 = vadd.f32 0.0, %v4285
    %v4287 = vpop.f32.mrb[0].mxu0
    %4288 = vmatprep.mubr.f32.mxu0 0.0
    %4289 = vmatmul.mubr.f32.gmra.mrb[0].mxu0 %v4209
    %v4290 = vpop.f32.mrb[0].mxu0
    %v4291 = vadd.f32 0.0, %v4290
    %v4292 = vpop.f32.mrb[0].mxu0
    %4293 = vmatprep.mubr.f32.mxu0 0.0
    %4294 = vmatmul.mubr.f32.gmra.mrb[0].mxu0 %v4212
    %v4295 = vpop.f32.mrb[0].mxu0
    %v4296 = vadd.f32 0.0, %v4295
    %v4297 = vpop.f32.mrb[0].mxu0
    %4298 = vdwg.mxu0
    %v4299 = vadd.f32 %v4100, %v4281
    %v4300 = vadd.f32 %v4101, %v4286
    %v4301 = vadd.f32 %v4102, %v4291
    %v4302 = vadd.f32 %v4103, %v4296
    %4303 = vmatprep.subr.mxu0 0.0
    %4304 = vmatpush1.msra.mxu0 %v4189
    %4305 = vmatprep.subr.mxu0 0.0
    %4306 = vmatpush1.msra.mxu0 %v4190
    %4307 = vmatprep.subr.mxu0 0.0
    %4308 = vmatpush1.msra.mxu0 %v4191
    %4309 = vmatprep.subr.mxu0 0.0
    %4310 = vmatpush1.msra.mxu0 %v4192
    %4311 = vmatprep.subr.mxu0 0.0
    %4312 = vmatpush1.msra.mxu0 0.0
    %4313 = vmatprep.subr.mxu0 0.0
    %4314 = vmatpush1.msra.mxu0 0.0
    %4315 = vmatprep.subr.mxu0 0.0
    %4316 = vmatpush1.msra.mxu0 0.0
    %4317 = vmatprep.subr.mxu0 0.0
    %4318 = vmatpush1.msra.mxu0 0.0
    %4319 = vmatprep.subr.mxu0 0.0
    %4320 = vmatpush1.msra.mxu0 0.0
    %4321 = vmatprep.subr.mxu0 0.0
    %4322 = vmatpush1.msra.mxu0 0.0
    %4323 = vmatprep.subr.mxu0 0.0
    %4324 = vmatpush1.msra.mxu0 0.0
    %4325 = vmatprep.subr.mxu0 0.0
    %4326 = vmatpush1.msra.mxu0 0.0
    %4327 = vmatprep.subr.mxu0 0.0
    %4328 = vmatpush1.msra.mxu0 0.0
    %4329 = vmatprep.subr.mxu0 0.0
    %4330 = vmatpush1.msra.mxu0 0.0
    %4331 = vmatprep.subr.mxu0 0.0
    %4332 = vmatpush1.msra.mxu0 0.0
    %4333 = vmatprep.subr.mxu0 0.0
    %4334 = vmatpush1.msra.mxu0 0.0
    %4335 = vmatprep.subr.mxu0 0.0
    %4336 = vmatpush1.msra.mxu0 0.0
    %4337 = vmatprep.subr.mxu0 0.0
    %4338 = vmatpush1.msra.mxu0 0.0
    %4339 = vmatprep.subr.mxu0 0.0
    %4340 = vmatpush1.msra.mxu0 0.0
    %4341 = vmatprep.subr.mxu0 0.0
    %4342 = vmatpush1.msra.mxu0 0.0
    %4343 = vmatprep.subr.mxu0 0.0
    %4344 = vmatpush1.msra.mxu0 0.0
    %4345 = vmatprep.subr.mxu0 0.0
    %4346 = vmatpush1.msra.mxu0 0.0
    %4347 = vmatprep.subr.mxu0 0.0
    %4348 = vmatpush1.msra.mxu0 0.0
    %4349 = vmatprep.subr.mxu0 0.0
    %4350 = vmatpush1.msra.mxu0 0.0
    %4351 = vmatprep.subr.mxu0 0.0
    %4352 = vmatpush1.msra.mxu0 0.0
    %4353 = vmatprep.subr.mxu0 0.0
    %4354 = vmatpush1.msra.mxu0 0.0
    %4355 = vmatprep.subr.mxu0 0.0
    %4356 = vmatpush1.msra.mxu0 0.0
    %4357 = vmatprep.subr.mxu0 0.0
    %4358 = vmatpush1.msra.mxu0 0.0
    %4359 = vmatprep.subr.mxu0 0.0
    %4360 = vmatpush1.msra.mxu0 0.0
    %4361 = vmatprep.subr.mxu0 0.0
    %4362 = vmatpush1.msra.mxu0 0.0
    %4363 = vmatprep.subr.mxu0 0.0
    %4364 = vmatpush1.msra.mxu0 0.0
    %4365 = vmatprep.subr.mxu0 0.0
    %4366 = vmatpush1.msra.mxu0 0.0
    %4367 = vmatprep.mubr.f32.mxu0 0.0
    %4368 = vmatmul.mubr.f32.gmra.mrb[0].mxu0 %v3496
    %v4369 = vpop.f32.mrb[0].mxu0
    %v4370 = vadd.f32 0.0, %v4369
    %v4371 = vpop.f32.mrb[0].mxu0
    %4372 = vmatprep.mubr.f32.mxu0 0.0
    %4373 = vmatmul.mubr.f32.gmra.mrb[0].mxu0 %v3499
    %v4374 = vpop.f32.mrb[0].mxu0
    %v4375 = vadd.f32 0.0, %v4374
    %v4376 = vpop.f32.mrb[0].mxu0
    %4377 = vmatprep.mubr.f32.mxu0 0.0
    %4378 = vmatmul.mubr.f32.gmra.mrb[0].mxu0 %v3502
    %v4379 = vpop.f32.mrb[0].mxu0
    %v4380 = vadd.f32 0.0, %v4379
    %v4381 = vpop.f32.mrb[0].mxu0
    %4382 = vmatprep.mubr.f32.mxu0 0.0
    %4383 = vmatmul.mubr.f32.gmra.mrb[0].mxu0 %v3505
    %v4384 = vpop.f32.mrb[0].mxu0
    %v4385 = vadd.f32 0.0, %v4384
    %v4386 = vpop.f32.mrb[0].mxu0
    %4387 = vdwg.mxu0
    %v4388 = vsub.f32 %v4370, %v3990
    %v4389 = vsub.f32 %v4375, %v3991
    %v4390 = vsub.f32 %v4380, %v3992
    %v4391 = vsub.f32 %v4385, %v3993
    %s4392 = scalar_lea.vmem %s6, 384
    %v4393 = vld [vmem:[%s4392] sm:$0xff]
    %v4394 = vld [vmem:[%s4392 + $0x8] sm:$0xff]
    %v4395 = vld [vmem:[%s4392 + $0x10] sm:$0xff]
    %v4396 = vld [vmem:[%s4392 + $0x18] sm:$0xff]
    %v4397 = vld [vmem:[%s4392 + $0x20] sm:$0xff]
    %v4398 = vld [vmem:[%s4392 + $0x28] sm:$0xff]
    %v4399 = vld [vmem:[%s4392 + $0x30] sm:$0xff]
    %v4400 = vld [vmem:[%s4392 + $0x38] sm:$0xff]
    %v4402 = vsel %vm69, %v4388, 0
    %v4405 = vsel %vm69, %v4389, 0
    %v4408 = vsel %vm69, %v4390, 0
    %v4411 = vsel %vm69, %v4391, 0
    %4413 = vmatprep.subr.mxu0 0.0
    %4414 = vmatpush1.msra.mxu0 %v4393
    %4415 = vmatprep.subr.mxu0 0.0
    %4416 = vmatpush1.msra.mxu0 %v4394
    %4417 = vmatprep.subr.mxu0 0.0
    %4418 = vmatpush1.msra.mxu0 %v4395
    %4419 = vmatprep.subr.mxu0 0.0
    %4420 = vmatpush1.msra.mxu0 %v4396
    %4421 = vmatprep.subr.mxu0 0.0
    %4422 = vmatpush1.msra.mxu0 %v4397
    %4423 = vmatprep.subr.mxu0 0.0
    %4424 = vmatpush1.msra.mxu0 %v4398
    %4425 = vmatprep.subr.mxu0 0.0
    %4426 = vmatpush1.msra.mxu0 %v4399
    %4427 = vmatprep.subr.mxu0 0.0
    %4428 = vmatpush1.msra.mxu0 %v4400
    %4429 = vmatprep.subr.mxu0 0.0
    %4430 = vmatpush1.msra.mxu0 0.0
    %4431 = vmatprep.subr.mxu0 0.0
    %4432 = vmatpush1.msra.mxu0 0.0
    %4433 = vmatprep.subr.mxu0 0.0
    %4434 = vmatpush1.msra.mxu0 0.0
    %4435 = vmatprep.subr.mxu0 0.0
    %4436 = vmatpush1.msra.mxu0 0.0
    %4437 = vmatprep.subr.mxu0 0.0
    %4438 = vmatpush1.msra.mxu0 0.0
    %4439 = vmatprep.subr.mxu0 0.0
    %4440 = vmatpush1.msra.mxu0 0.0
    %4441 = vmatprep.subr.mxu0 0.0
    %4442 = vmatpush1.msra.mxu0 0.0
    %4443 = vmatprep.subr.mxu0 0.0
    %4444 = vmatpush1.msra.mxu0 0.0
    %4445 = vmatprep.subr.mxu0 0.0
    %4446 = vmatpush1.msra.mxu0 0.0
    %4447 = vmatprep.subr.mxu0 0.0
    %4448 = vmatpush1.msra.mxu0 0.0
    %4449 = vmatprep.subr.mxu0 0.0
    %4450 = vmatpush1.msra.mxu0 0.0
    %4451 = vmatprep.subr.mxu0 0.0
    %4452 = vmatpush1.msra.mxu0 0.0
    %4453 = vmatprep.subr.mxu0 0.0
    %4454 = vmatpush1.msra.mxu0 0.0
    %4455 = vmatprep.subr.mxu0 0.0
    %4456 = vmatpush1.msra.mxu0 0.0
    %4457 = vmatprep.subr.mxu0 0.0
    %4458 = vmatpush1.msra.mxu0 0.0
    %4459 = vmatprep.subr.mxu0 0.0
    %4460 = vmatpush1.msra.mxu0 0.0
    %4461 = vmatprep.subr.mxu0 0.0
    %4462 = vmatpush1.msra.mxu0 0.0
    %4463 = vmatprep.subr.mxu0 0.0
    %4464 = vmatpush1.msra.mxu0 0.0
    %4465 = vmatprep.subr.mxu0 0.0
    %4466 = vmatpush1.msra.mxu0 0.0
    %4467 = vmatprep.subr.mxu0 0.0
    %4468 = vmatpush1.msra.mxu0 0.0
    %4469 = vmatprep.subr.mxu0 0.0
    %4470 = vmatpush1.msra.mxu0 0.0
    %4471 = vmatprep.subr.mxu0 0.0
    %4472 = vmatpush1.msra.mxu0 0.0
    %4473 = vmatprep.subr.mxu0 0.0
    %4474 = vmatpush1.msra.mxu0 0.0
    %4475 = vmatprep.subr.mxu0 0.0
    %4476 = vmatpush1.msra.mxu0 0.0
    %4477 = vmatprep.mubr.f32.mxu0 0.0
    %4478 = vmatmul.mubr.f32.gmra.mrb[0].mxu0 %v4402
    %v4479 = vpop.f32.mrb[0].mxu0
    %v4480 = vadd.f32 0.0, %v4479
    %v4481 = vpop.f32.mrb[0].mxu0
    %4482 = vmatprep.mubr.f32.mxu0 0.0
    %4483 = vmatmul.mubr.f32.gmra.mrb[0].mxu0 %v4405
    %v4484 = vpop.f32.mrb[0].mxu0
    %v4485 = vadd.f32 0.0, %v4484
    %v4486 = vpop.f32.mrb[0].mxu0
    %4487 = vmatprep.mubr.f32.mxu0 0.0
    %4488 = vmatmul.mubr.f32.gmra.mrb[0].mxu0 %v4408
    %v4489 = vpop.f32.mrb[0].mxu0
    %v4490 = vadd.f32 0.0, %v4489
    %v4491 = vpop.f32.mrb[0].mxu0
    %4492 = vmatprep.mubr.f32.mxu0 0.0
    %4493 = vmatmul.mubr.f32.gmra.mrb[0].mxu0 %v4411
    %v4494 = vpop.f32.mrb[0].mxu0
    %v4495 = vadd.f32 0.0, %v4494
    %v4496 = vpop.f32.mrb[0].mxu0
    %4497 = vdwg.mxu0
    %v4498 = vadd.f32 %v4299, %v4480
    %v4499 = vadd.f32 %v4300, %v4485
    %v4500 = vadd.f32 %v4301, %v4490
    %v4501 = vadd.f32 %v4302, %v4495
    %4502 = vmatprep.subr.mxu0 0.0
    %4503 = vmatpush1.msra.mxu0 %v4388
    %4504 = vmatprep.subr.mxu0 0.0
    %4505 = vmatpush1.msra.mxu0 %v4389
    %4506 = vmatprep.subr.mxu0 0.0
    %4507 = vmatpush1.msra.mxu0 %v4390
    %4508 = vmatprep.subr.mxu0 0.0
    %4509 = vmatpush1.msra.mxu0 %v4391
    %4510 = vmatprep.subr.mxu0 0.0
    %4511 = vmatpush1.msra.mxu0 0.0
    %4512 = vmatprep.subr.mxu0 0.0
    %4513 = vmatpush1.msra.mxu0 0.0
    %4514 = vmatprep.subr.mxu0 0.0
    %4515 = vmatpush1.msra.mxu0 0.0
    %4516 = vmatprep.subr.mxu0 0.0
    %4517 = vmatpush1.msra.mxu0 0.0
    %4518 = vmatprep.subr.mxu0 0.0
    %4519 = vmatpush1.msra.mxu0 0.0
    %4520 = vmatprep.subr.mxu0 0.0
    %4521 = vmatpush1.msra.mxu0 0.0
    %4522 = vmatprep.subr.mxu0 0.0
    %4523 = vmatpush1.msra.mxu0 0.0
    %4524 = vmatprep.subr.mxu0 0.0
    %4525 = vmatpush1.msra.mxu0 0.0
    %4526 = vmatprep.subr.mxu0 0.0
    %4527 = vmatpush1.msra.mxu0 0.0
    %4528 = vmatprep.subr.mxu0 0.0
    %4529 = vmatpush1.msra.mxu0 0.0
    %4530 = vmatprep.subr.mxu0 0.0
    %4531 = vmatpush1.msra.mxu0 0.0
    %4532 = vmatprep.subr.mxu0 0.0
    %4533 = vmatpush1.msra.mxu0 0.0
    %4534 = vmatprep.subr.mxu0 0.0
    %4535 = vmatpush1.msra.mxu0 0.0
    %4536 = vmatprep.subr.mxu0 0.0
    %4537 = vmatpush1.msra.mxu0 0.0
    %4538 = vmatprep.subr.mxu0 0.0
    %4539 = vmatpush1.msra.mxu0 0.0
    %4540 = vmatprep.subr.mxu0 0.0
    %4541 = vmatpush1.msra.mxu0 0.0
    %4542 = vmatprep.subr.mxu0 0.0
    %4543 = vmatpush1.msra.mxu0 0.0
    %4544 = vmatprep.subr.mxu0 0.0
    %4545 = vmatpush1.msra.mxu0 0.0
    %4546 = vmatprep.subr.mxu0 0.0
    %4547 = vmatpush1.msra.mxu0 0.0
    %4548 = vmatprep.subr.mxu0 0.0
    %4549 = vmatpush1.msra.mxu0 0.0
    %4550 = vmatprep.subr.mxu0 0.0
    %4551 = vmatpush1.msra.mxu0 0.0
    %4552 = vmatprep.subr.mxu0 0.0
    %4553 = vmatpush1.msra.mxu0 0.0
    %4554 = vmatprep.subr.mxu0 0.0
    %4555 = vmatpush1.msra.mxu0 0.0
    %4556 = vmatprep.subr.mxu0 0.0
    %4557 = vmatpush1.msra.mxu0 0.0
    %4558 = vmatprep.subr.mxu0 0.0
    %4559 = vmatpush1.msra.mxu0 0.0
    %4560 = vmatprep.subr.mxu0 0.0
    %4561 = vmatpush1.msra.mxu0 0.0
    %4562 = vmatprep.subr.mxu0 0.0
    %4563 = vmatpush1.msra.mxu0 0.0
    %4564 = vmatprep.subr.mxu0 0.0
    %4565 = vmatpush1.msra.mxu0 0.0
    %4566 = vmatprep.mubr.f32.mxu0 0.0
    %4567 = vmatmul.mubr.f32.gmra.mrb[0].mxu0 %v3496
    %v4568 = vpop.f32.mrb[0].mxu0
    %v4569 = vadd.f32 0.0, %v4568
    %v4570 = vpop.f32.mrb[0].mxu0
    %4571 = vmatprep.mubr.f32.mxu0 0.0
    %4572 = vmatmul.mubr.f32.gmra.mrb[0].mxu0 %v3499
    %v4573 = vpop.f32.mrb[0].mxu0
    %v4574 = vadd.f32 0.0, %v4573
    %v4575 = vpop.f32.mrb[0].mxu0
    %4576 = vmatprep.mubr.f32.mxu0 0.0
    %4577 = vmatmul.mubr.f32.gmra.mrb[0].mxu0 %v3502
    %v4578 = vpop.f32.mrb[0].mxu0
    %v4579 = vadd.f32 0.0, %v4578
    %v4580 = vpop.f32.mrb[0].mxu0
    %4581 = vmatprep.mubr.f32.mxu0 0.0
    %4582 = vmatmul.mubr.f32.gmra.mrb[0].mxu0 %v3505
    %v4583 = vpop.f32.mrb[0].mxu0
    %v4584 = vadd.f32 0.0, %v4583
    %v4585 = vpop.f32.mrb[0].mxu0
    %4586 = vdwg.mxu0
    %v4587 = vsub.f32 %v4569, %v4189
    %v4588 = vsub.f32 %v4574, %v4190
    %v4589 = vsub.f32 %v4579, %v4191
    %v4590 = vsub.f32 %v4584, %v4192
    %s4591 = scalar_lea.vmem %s6, 448
    %v4592 = vld [vmem:[%s4591] sm:$0xff]
    %v4593 = vld [vmem:[%s4591 + $0x8] sm:$0xff]
    %v4594 = vld [vmem:[%s4591 + $0x10] sm:$0xff]
    %v4595 = vld [vmem:[%s4591 + $0x18] sm:$0xff]
    %v4596 = vld [vmem:[%s4591 + $0x20] sm:$0xff]
    %v4597 = vld [vmem:[%s4591 + $0x28] sm:$0xff]
    %v4598 = vld [vmem:[%s4591 + $0x30] sm:$0xff]
    %v4599 = vld [vmem:[%s4591 + $0x38] sm:$0xff]
    %v4601 = vsel %vm69, %v4587, 0
    %v4604 = vsel %vm69, %v4588, 0
    %v4607 = vsel %vm69, %v4589, 0
    %v4610 = vsel %vm69, %v4590, 0
    %4612 = vmatprep.subr.mxu0 0.0
    %4613 = vmatpush1.msra.mxu0 %v4592
    %4614 = vmatprep.subr.mxu0 0.0
    %4615 = vmatpush1.msra.mxu0 %v4593
    %4616 = vmatprep.subr.mxu0 0.0
    %4617 = vmatpush1.msra.mxu0 %v4594
    %4618 = vmatprep.subr.mxu0 0.0
    %4619 = vmatpush1.msra.mxu0 %v4595
    %4620 = vmatprep.subr.mxu0 0.0
    %4621 = vmatpush1.msra.mxu0 %v4596
    %4622 = vmatprep.subr.mxu0 0.0
    %4623 = vmatpush1.msra.mxu0 %v4597
    %4624 = vmatprep.subr.mxu0 0.0
    %4625 = vmatpush1.msra.mxu0 %v4598
    %4626 = vmatprep.subr.mxu0 0.0
    %4627 = vmatpush1.msra.mxu0 %v4599
    %4628 = vmatprep.subr.mxu0 0.0
    %4629 = vmatpush1.msra.mxu0 0.0
    %4630 = vmatprep.subr.mxu0 0.0
    %4631 = vmatpush1.msra.mxu0 0.0
    %4632 = vmatprep.subr.mxu0 0.0
    %4633 = vmatpush1.msra.mxu0 0.0
    %4634 = vmatprep.subr.mxu0 0.0
    %4635 = vmatpush1.msra.mxu0 0.0
    %4636 = vmatprep.subr.mxu0 0.0
    %4637 = vmatpush1.msra.mxu0 0.0
    %4638 = vmatprep.subr.mxu0 0.0
    %4639 = vmatpush1.msra.mxu0 0.0
    %4640 = vmatprep.subr.mxu0 0.0
    %4641 = vmatpush1.msra.mxu0 0.0
    %4642 = vmatprep.subr.mxu0 0.0
    %4643 = vmatpush1.msra.mxu0 0.0
    %4644 = vmatprep.subr.mxu0 0.0
    %4645 = vmatpush1.msra.mxu0 0.0
    %4646 = vmatprep.subr.mxu0 0.0
    %4647 = vmatpush1.msra.mxu0 0.0
    %4648 = vmatprep.subr.mxu0 0.0
    %4649 = vmatpush1.msra.mxu0 0.0
    %4650 = vmatprep.subr.mxu0 0.0
    %4651 = vmatpush1.msra.mxu0 0.0
    %4652 = vmatprep.subr.mxu0 0.0
    %4653 = vmatpush1.msra.mxu0 0.0
    %4654 = vmatprep.subr.mxu0 0.0
    %4655 = vmatpush1.msra.mxu0 0.0
    %4656 = vmatprep.subr.mxu0 0.0
    %4657 = vmatpush1.msra.mxu0 0.0
    %4658 = vmatprep.subr.mxu0 0.0
    %4659 = vmatpush1.msra.mxu0 0.0
    %4660 = vmatprep.subr.mxu0 0.0
    %4661 = vmatpush1.msra.mxu0 0.0
    %4662 = vmatprep.subr.mxu0 0.0
    %4663 = vmatpush1.msra.mxu0 0.0
    %4664 = vmatprep.subr.mxu0 0.0
    %4665 = vmatpush1.msra.mxu0 0.0
    %4666 = vmatprep.subr.mxu0 0.0
    %4667 = vmatpush1.msra.mxu0 0.0
    %4668 = vmatprep.subr.mxu0 0.0
    %4669 = vmatpush1.msra.mxu0 0.0
    %4670 = vmatprep.subr.mxu0 0.0
    %4671 = vmatpush1.msra.mxu0 0.0
    %4672 = vmatprep.subr.mxu0 0.0
    %4673 = vmatpush1.msra.mxu0 0.0
    %4674 = vmatprep.subr.mxu0 0.0
    %4675 = vmatpush1.msra.mxu0 0.0
    %4676 = vmatprep.mubr.f32.mxu0 0.0
    %4677 = vmatmul.mubr.f32.gmra.mrb[0].mxu0 %v4601
    %v4678 = vpop.f32.mrb[0].mxu0
    %v4679 = vadd.f32 0.0, %v4678
    %v4680 = vpop.f32.mrb[0].mxu0
    %4681 = vmatprep.mubr.f32.mxu0 0.0
    %4682 = vmatmul.mubr.f32.gmra.mrb[0].mxu0 %v4604
    %v4683 = vpop.f32.mrb[0].mxu0
    %v4684 = vadd.f32 0.0, %v4683
    %v4685 = vpop.f32.mrb[0].mxu0
    %4686 = vmatprep.mubr.f32.mxu0 0.0
    %4687 = vmatmul.mubr.f32.gmra.mrb[0].mxu0 %v4607
    %v4688 = vpop.f32.mrb[0].mxu0
    %v4689 = vadd.f32 0.0, %v4688
    %v4690 = vpop.f32.mrb[0].mxu0
    %4691 = vmatprep.mubr.f32.mxu0 0.0
    %4692 = vmatmul.mubr.f32.gmra.mrb[0].mxu0 %v4610
    %v4693 = vpop.f32.mrb[0].mxu0
    %v4694 = vadd.f32 0.0, %v4693
    %v4695 = vpop.f32.mrb[0].mxu0
    %4696 = vdwg.mxu0
    %v4697 = vadd.f32 %v4498, %v4679
    %v4698 = vadd.f32 %v4499, %v4684
    %v4699 = vadd.f32 %v4500, %v4689
    %v4700 = vadd.f32 %v4501, %v4694
    %4701 = vmatprep.subr.mxu0 0.0
    %4702 = vmatpush1.msra.mxu0 %v4587
    %4703 = vmatprep.subr.mxu0 0.0
    %4704 = vmatpush1.msra.mxu0 %v4588
    %4705 = vmatprep.subr.mxu0 0.0
    %4706 = vmatpush1.msra.mxu0 %v4589
    %4707 = vmatprep.subr.mxu0 0.0
    %4708 = vmatpush1.msra.mxu0 %v4590
    %4709 = vmatprep.subr.mxu0 0.0
    %4710 = vmatpush1.msra.mxu0 0.0
    %4711 = vmatprep.subr.mxu0 0.0
    %4712 = vmatpush1.msra.mxu0 0.0
    %4713 = vmatprep.subr.mxu0 0.0
    %4714 = vmatpush1.msra.mxu0 0.0
    %4715 = vmatprep.subr.mxu0 0.0
    %4716 = vmatpush1.msra.mxu0 0.0
    %4717 = vmatprep.subr.mxu0 0.0
    %4718 = vmatpush1.msra.mxu0 0.0
    %4719 = vmatprep.subr.mxu0 0.0
    %4720 = vmatpush1.msra.mxu0 0.0
    %4721 = vmatprep.subr.mxu0 0.0
    %4722 = vmatpush1.msra.mxu0 0.0
    %4723 = vmatprep.subr.mxu0 0.0
    %4724 = vmatpush1.msra.mxu0 0.0
    %4725 = vmatprep.subr.mxu0 0.0
    %4726 = vmatpush1.msra.mxu0 0.0
    %4727 = vmatprep.subr.mxu0 0.0
    %4728 = vmatpush1.msra.mxu0 0.0
    %4729 = vmatprep.subr.mxu0 0.0
    %4730 = vmatpush1.msra.mxu0 0.0
    %4731 = vmatprep.subr.mxu0 0.0
    %4732 = vmatpush1.msra.mxu0 0.0
    %4733 = vmatprep.subr.mxu0 0.0
    %4734 = vmatpush1.msra.mxu0 0.0
    %4735 = vmatprep.subr.mxu0 0.0
    %4736 = vmatpush1.msra.mxu0 0.0
    %4737 = vmatprep.subr.mxu0 0.0
    %4738 = vmatpush1.msra.mxu0 0.0
    %4739 = vmatprep.subr.mxu0 0.0
    %4740 = vmatpush1.msra.mxu0 0.0
    %4741 = vmatprep.subr.mxu0 0.0
    %4742 = vmatpush1.msra.mxu0 0.0
    %4743 = vmatprep.subr.mxu0 0.0
    %4744 = vmatpush1.msra.mxu0 0.0
    %4745 = vmatprep.subr.mxu0 0.0
    %4746 = vmatpush1.msra.mxu0 0.0
    %4747 = vmatprep.subr.mxu0 0.0
    %4748 = vmatpush1.msra.mxu0 0.0
    %4749 = vmatprep.subr.mxu0 0.0
    %4750 = vmatpush1.msra.mxu0 0.0
    %4751 = vmatprep.subr.mxu0 0.0
    %4752 = vmatpush1.msra.mxu0 0.0
    %4753 = vmatprep.subr.mxu0 0.0
    %4754 = vmatpush1.msra.mxu0 0.0
    %4755 = vmatprep.subr.mxu0 0.0
    %4756 = vmatpush1.msra.mxu0 0.0
    %4757 = vmatprep.subr.mxu0 0.0
    %4758 = vmatpush1.msra.mxu0 0.0
    %4759 = vmatprep.subr.mxu0 0.0
    %4760 = vmatpush1.msra.mxu0 0.0
    %4761 = vmatprep.subr.mxu0 0.0
    %4762 = vmatpush1.msra.mxu0 0.0
    %4763 = vmatprep.subr.mxu0 0.0
    %4764 = vmatpush1.msra.mxu0 0.0
    %4765 = vmatprep.mubr.f32.mxu0 0.0
    %4766 = vmatmul.mubr.f32.gmra.mrb[0].mxu0 %v3496
    %v4767 = vpop.f32.mrb[0].mxu0
    %v4768 = vadd.f32 0.0, %v4767
    %v4769 = vpop.f32.mrb[0].mxu0
    %4770 = vmatprep.mubr.f32.mxu0 0.0
    %4771 = vmatmul.mubr.f32.gmra.mrb[0].mxu0 %v3499
    %v4772 = vpop.f32.mrb[0].mxu0
    %v4773 = vadd.f32 0.0, %v4772
    %v4774 = vpop.f32.mrb[0].mxu0
    %4775 = vmatprep.mubr.f32.mxu0 0.0
    %4776 = vmatmul.mubr.f32.gmra.mrb[0].mxu0 %v3502
    %v4777 = vpop.f32.mrb[0].mxu0
    %v4778 = vadd.f32 0.0, %v4777
    %v4779 = vpop.f32.mrb[0].mxu0
    %4780 = vmatprep.mubr.f32.mxu0 0.0
    %4781 = vmatmul.mubr.f32.gmra.mrb[0].mxu0 %v3505
    %v4782 = vpop.f32.mrb[0].mxu0
    %v4783 = vadd.f32 0.0, %v4782
    %v4784 = vpop.f32.mrb[0].mxu0
    %4785 = vdwg.mxu0
    %v4786 = vsub.f32 %v4768, %v4388
    %v4787 = vsub.f32 %v4773, %v4389
    %v4788 = vsub.f32 %v4778, %v4390
    %v4789 = vsub.f32 %v4783, %v4391
    %s4790 = scalar_lea.vmem %s6, 512
    %v4791 = vld [vmem:[%s4790] sm:$0xff]
    %v4792 = vld [vmem:[%s4790 + $0x8] sm:$0xff]
    %v4793 = vld [vmem:[%s4790 + $0x10] sm:$0xff]
    %v4794 = vld [vmem:[%s4790 + $0x18] sm:$0xff]
    %v4795 = vld [vmem:[%s4790 + $0x20] sm:$0xff]
    %v4796 = vld [vmem:[%s4790 + $0x28] sm:$0xff]
    %v4797 = vld [vmem:[%s4790 + $0x30] sm:$0xff]
    %v4798 = vld [vmem:[%s4790 + $0x38] sm:$0xff]
    %v4800 = vsel %vm69, %v4786, 0
    %v4803 = vsel %vm69, %v4787, 0
    %v4806 = vsel %vm69, %v4788, 0
    %v4809 = vsel %vm69, %v4789, 0
    %4811 = vmatprep.subr.mxu0 0.0
    %4812 = vmatpush1.msra.mxu0 %v4791
    %4813 = vmatprep.subr.mxu0 0.0
    %4814 = vmatpush1.msra.mxu0 %v4792
    %4815 = vmatprep.subr.mxu0 0.0
    %4816 = vmatpush1.msra.mxu0 %v4793
    %4817 = vmatprep.subr.mxu0 0.0
    %4818 = vmatpush1.msra.mxu0 %v4794
    %4819 = vmatprep.subr.mxu0 0.0
    %4820 = vmatpush1.msra.mxu0 %v4795
    %4821 = vmatprep.subr.mxu0 0.0
    %4822 = vmatpush1.msra.mxu0 %v4796
    %4823 = vmatprep.subr.mxu0 0.0
    %4824 = vmatpush1.msra.mxu0 %v4797
    %4825 = vmatprep.subr.mxu0 0.0
    %4826 = vmatpush1.msra.mxu0 %v4798
    %4827 = vmatprep.subr.mxu0 0.0
    %4828 = vmatpush1.msra.mxu0 0.0
    %4829 = vmatprep.subr.mxu0 0.0
    %4830 = vmatpush1.msra.mxu0 0.0
    %4831 = vmatprep.subr.mxu0 0.0
    %4832 = vmatpush1.msra.mxu0 0.0
    %4833 = vmatprep.subr.mxu0 0.0
    %4834 = vmatpush1.msra.mxu0 0.0
    %4835 = vmatprep.subr.mxu0 0.0
    %4836 = vmatpush1.msra.mxu0 0.0
    %4837 = vmatprep.subr.mxu0 0.0
    %4838 = vmatpush1.msra.mxu0 0.0
    %4839 = vmatprep.subr.mxu0 0.0
    %4840 = vmatpush1.msra.mxu0 0.0
    %4841 = vmatprep.subr.mxu0 0.0
    %4842 = vmatpush1.msra.mxu0 0.0
    %4843 = vmatprep.subr.mxu0 0.0
    %4844 = vmatpush1.msra.mxu0 0.0
    %4845 = vmatprep.subr.mxu0 0.0
    %4846 = vmatpush1.msra.mxu0 0.0
    %4847 = vmatprep.subr.mxu0 0.0
    %4848 = vmatpush1.msra.mxu0 0.0
    %4849 = vmatprep.subr.mxu0 0.0
    %4850 = vmatpush1.msra.mxu0 0.0
    %4851 = vmatprep.subr.mxu0 0.0
    %4852 = vmatpush1.msra.mxu0 0.0
    %4853 = vmatprep.subr.mxu0 0.0
    %4854 = vmatpush1.msra.mxu0 0.0
    %4855 = vmatprep.subr.mxu0 0.0
    %4856 = vmatpush1.msra.mxu0 0.0
    %4857 = vmatprep.subr.mxu0 0.0
    %4858 = vmatpush1.msra.mxu0 0.0
    %4859 = vmatprep.subr.mxu0 0.0
    %4860 = vmatpush1.msra.mxu0 0.0
    %4861 = vmatprep.subr.mxu0 0.0
    %4862 = vmatpush1.msra.mxu0 0.0
    %4863 = vmatprep.subr.mxu0 0.0
    %4864 = vmatpush1.msra.mxu0 0.0
    %4865 = vmatprep.subr.mxu0 0.0
    %4866 = vmatpush1.msra.mxu0 0.0
    %4867 = vmatprep.subr.mxu0 0.0
    %4868 = vmatpush1.msra.mxu0 0.0
    %4869 = vmatprep.subr.mxu0 0.0
    %4870 = vmatpush1.msra.mxu0 0.0
    %4871 = vmatprep.subr.mxu0 0.0
    %4872 = vmatpush1.msra.mxu0 0.0
    %4873 = vmatprep.subr.mxu0 0.0
    %4874 = vmatpush1.msra.mxu0 0.0
    %4875 = vmatprep.mubr.f32.mxu0 0.0
    %4876 = vmatmul.mubr.f32.gmra.mrb[0].mxu0 %v4800
    %v4877 = vpop.f32.mrb[0].mxu0
    %v4878 = vadd.f32 0.0, %v4877
    %v4879 = vpop.f32.mrb[0].mxu0
    %4880 = vmatprep.mubr.f32.mxu0 0.0
    %4881 = vmatmul.mubr.f32.gmra.mrb[0].mxu0 %v4803
    %v4882 = vpop.f32.mrb[0].mxu0
    %v4883 = vadd.f32 0.0, %v4882
    %v4884 = vpop.f32.mrb[0].mxu0
    %4885 = vmatprep.mubr.f32.mxu0 0.0
    %4886 = vmatmul.mubr.f32.gmra.mrb[0].mxu0 %v4806
    %v4887 = vpop.f32.mrb[0].mxu0
    %v4888 = vadd.f32 0.0, %v4887
    %v4889 = vpop.f32.mrb[0].mxu0
    %4890 = vmatprep.mubr.f32.mxu0 0.0
    %4891 = vmatmul.mubr.f32.gmra.mrb[0].mxu0 %v4809
    %v4892 = vpop.f32.mrb[0].mxu0
    %v4893 = vadd.f32 0.0, %v4892
    %v4894 = vpop.f32.mrb[0].mxu0
    %4895 = vdwg.mxu0
    %v4896 = vadd.f32 %v4697, %v4878
    %v4897 = vadd.f32 %v4698, %v4883
    %v4898 = vadd.f32 %v4699, %v4888
    %v4899 = vadd.f32 %v4700, %v4893
    %4900 = vmatprep.subr.mxu0 0.0
    %4901 = vmatpush1.msra.mxu0 %v4786
    %4902 = vmatprep.subr.mxu0 0.0
    %4903 = vmatpush1.msra.mxu0 %v4787
    %4904 = vmatprep.subr.mxu0 0.0
    %4905 = vmatpush1.msra.mxu0 %v4788
    %4906 = vmatprep.subr.mxu0 0.0
    %4907 = vmatpush1.msra.mxu0 %v4789
    %4908 = vmatprep.subr.mxu0 0.0
    %4909 = vmatpush1.msra.mxu0 0.0
    %4910 = vmatprep.subr.mxu0 0.0
    %4911 = vmatpush1.msra.mxu0 0.0
    %4912 = vmatprep.subr.mxu0 0.0
    %4913 = vmatpush1.msra.mxu0 0.0
    %4914 = vmatprep.subr.mxu0 0.0
    %4915 = vmatpush1.msra.mxu0 0.0
    %4916 = vmatprep.subr.mxu0 0.0
    %4917 = vmatpush1.msra.mxu0 0.0
    %4918 = vmatprep.subr.mxu0 0.0
    %4919 = vmatpush1.msra.mxu0 0.0
    %4920 = vmatprep.subr.mxu0 0.0
    %4921 = vmatpush1.msra.mxu0 0.0
    %4922 = vmatprep.subr.mxu0 0.0
    %4923 = vmatpush1.msra.mxu0 0.0
    %4924 = vmatprep.subr.mxu0 0.0
    %4925 = vmatpush1.msra.mxu0 0.0
    %4926 = vmatprep.subr.mxu0 0.0
    %4927 = vmatpush1.msra.mxu0 0.0
    %4928 = vmatprep.subr.mxu0 0.0
    %4929 = vmatpush1.msra.mxu0 0.0
    %4930 = vmatprep.subr.mxu0 0.0
    %4931 = vmatpush1.msra.mxu0 0.0
    %4932 = vmatprep.subr.mxu0 0.0
    %4933 = vmatpush1.msra.mxu0 0.0
    %4934 = vmatprep.subr.mxu0 0.0
    %4935 = vmatpush1.msra.mxu0 0.0
    %4936 = vmatprep.subr.mxu0 0.0
    %4937 = vmatpush1.msra.mxu0 0.0
    %4938 = vmatprep.subr.mxu0 0.0
    %4939 = vmatpush1.msra.mxu0 0.0
    %4940 = vmatprep.subr.mxu0 0.0
    %4941 = vmatpush1.msra.mxu0 0.0
    %4942 = vmatprep.subr.mxu0 0.0
    %4943 = vmatpush1.msra.mxu0 0.0
    %4944 = vmatprep.subr.mxu0 0.0
    %4945 = vmatpush1.msra.mxu0 0.0
    %4946 = vmatprep.subr.mxu0 0.0
    %4947 = vmatpush1.msra.mxu0 0.0
    %4948 = vmatprep.subr.mxu0 0.0
    %4949 = vmatpush1.msra.mxu0 0.0
    %4950 = vmatprep.subr.mxu0 0.0
    %4951 = vmatpush1.msra.mxu0 0.0
    %4952 = vmatprep.subr.mxu0 0.0
    %4953 = vmatpush1.msra.mxu0 0.0
    %4954 = vmatprep.subr.mxu0 0.0
    %4955 = vmatpush1.msra.mxu0 0.0
    %4956 = vmatprep.subr.mxu0 0.0
    %4957 = vmatpush1.msra.mxu0 0.0
    %4958 = vmatprep.subr.mxu0 0.0
    %4959 = vmatpush1.msra.mxu0 0.0
    %4960 = vmatprep.subr.mxu0 0.0
    %4961 = vmatpush1.msra.mxu0 0.0
    %4962 = vmatprep.subr.mxu0 0.0
    %4963 = vmatpush1.msra.mxu0 0.0
    %4964 = vmatprep.mubr.f32.mxu0 0.0
    %4965 = vmatmul.mubr.f32.gmra.mrb[0].mxu0 %v3496
    %v4966 = vpop.f32.mrb[0].mxu0
    %v4967 = vadd.f32 0.0, %v4966
    %v4968 = vpop.f32.mrb[0].mxu0
    %4969 = vmatprep.mubr.f32.mxu0 0.0
    %4970 = vmatmul.mubr.f32.gmra.mrb[0].mxu0 %v3499
    %v4971 = vpop.f32.mrb[0].mxu0
    %v4972 = vadd.f32 0.0, %v4971
    %v4973 = vpop.f32.mrb[0].mxu0
    %4974 = vmatprep.mubr.f32.mxu0 0.0
    %4975 = vmatmul.mubr.f32.gmra.mrb[0].mxu0 %v3502
    %v4976 = vpop.f32.mrb[0].mxu0
    %v4977 = vadd.f32 0.0, %v4976
    %v4978 = vpop.f32.mrb[0].mxu0
    %4979 = vmatprep.mubr.f32.mxu0 0.0
    %4980 = vmatmul.mubr.f32.gmra.mrb[0].mxu0 %v3505
    %v4981 = vpop.f32.mrb[0].mxu0
    %v4982 = vadd.f32 0.0, %v4981
    %v4983 = vpop.f32.mrb[0].mxu0
    %4984 = vdwg.mxu0
    %v4985 = vsub.f32 %v4967, %v4587
    %v4986 = vsub.f32 %v4972, %v4588
    %v4987 = vsub.f32 %v4977, %v4589
    %v4988 = vsub.f32 %v4982, %v4590
    %s4989 = scalar_lea.vmem %s6, 576
    %v4990 = vld [vmem:[%s4989] sm:$0xff]
    %v4991 = vld [vmem:[%s4989 + $0x8] sm:$0xff]
    %v4992 = vld [vmem:[%s4989 + $0x10] sm:$0xff]
    %v4993 = vld [vmem:[%s4989 + $0x18] sm:$0xff]
    %v4994 = vld [vmem:[%s4989 + $0x20] sm:$0xff]
    %v4995 = vld [vmem:[%s4989 + $0x28] sm:$0xff]
    %v4996 = vld [vmem:[%s4989 + $0x30] sm:$0xff]
    %v4997 = vld [vmem:[%s4989 + $0x38] sm:$0xff]
    %v4999 = vsel %vm69, %v4985, 0
    %v5002 = vsel %vm69, %v4986, 0
    %v5005 = vsel %vm69, %v4987, 0
    %v5008 = vsel %vm69, %v4988, 0
    %5010 = vmatprep.subr.mxu0 0.0
    %5011 = vmatpush1.msra.mxu0 %v4990
    %5012 = vmatprep.subr.mxu0 0.0
    %5013 = vmatpush1.msra.mxu0 %v4991
    %5014 = vmatprep.subr.mxu0 0.0
    %5015 = vmatpush1.msra.mxu0 %v4992
    %5016 = vmatprep.subr.mxu0 0.0
    %5017 = vmatpush1.msra.mxu0 %v4993
    %5018 = vmatprep.subr.mxu0 0.0
    %5019 = vmatpush1.msra.mxu0 %v4994
    %5020 = vmatprep.subr.mxu0 0.0
    %5021 = vmatpush1.msra.mxu0 %v4995
    %5022 = vmatprep.subr.mxu0 0.0
    %5023 = vmatpush1.msra.mxu0 %v4996
    %5024 = vmatprep.subr.mxu0 0.0
    %5025 = vmatpush1.msra.mxu0 %v4997
    %5026 = vmatprep.subr.mxu0 0.0
    %5027 = vmatpush1.msra.mxu0 0.0
    %5028 = vmatprep.subr.mxu0 0.0
    %5029 = vmatpush1.msra.mxu0 0.0
    %5030 = vmatprep.subr.mxu0 0.0
    %5031 = vmatpush1.msra.mxu0 0.0
    %5032 = vmatprep.subr.mxu0 0.0
    %5033 = vmatpush1.msra.mxu0 0.0
    %5034 = vmatprep.subr.mxu0 0.0
    %5035 = vmatpush1.msra.mxu0 0.0
    %5036 = vmatprep.subr.mxu0 0.0
    %5037 = vmatpush1.msra.mxu0 0.0
    %5038 = vmatprep.subr.mxu0 0.0
    %5039 = vmatpush1.msra.mxu0 0.0
    %5040 = vmatprep.subr.mxu0 0.0
    %5041 = vmatpush1.msra.mxu0 0.0
    %5042 = vmatprep.subr.mxu0 0.0
    %5043 = vmatpush1.msra.mxu0 0.0
    %5044 = vmatprep.subr.mxu0 0.0
    %5045 = vmatpush1.msra.mxu0 0.0
    %5046 = vmatprep.subr.mxu0 0.0
    %5047 = vmatpush1.msra.mxu0 0.0
    %5048 = vmatprep.subr.mxu0 0.0
    %5049 = vmatpush1.msra.mxu0 0.0
    %5050 = vmatprep.subr.mxu0 0.0
    %5051 = vmatpush1.msra.mxu0 0.0
    %5052 = vmatprep.subr.mxu0 0.0
    %5053 = vmatpush1.msra.mxu0 0.0
    %5054 = vmatprep.subr.mxu0 0.0
    %5055 = vmatpush1.msra.mxu0 0.0
    %5056 = vmatprep.subr.mxu0 0.0
    %5057 = vmatpush1.msra.mxu0 0.0
    %5058 = vmatprep.subr.mxu0 0.0
    %5059 = vmatpush1.msra.mxu0 0.0
    %5060 = vmatprep.subr.mxu0 0.0
    %5061 = vmatpush1.msra.mxu0 0.0
    %5062 = vmatprep.subr.mxu0 0.0
    %5063 = vmatpush1.msra.mxu0 0.0
    %5064 = vmatprep.subr.mxu0 0.0
    %5065 = vmatpush1.msra.mxu0 0.0
    %5066 = vmatprep.subr.mxu0 0.0
    %5067 = vmatpush1.msra.mxu0 0.0
    %5068 = vmatprep.subr.mxu0 0.0
    %5069 = vmatpush1.msra.mxu0 0.0
    %5070 = vmatprep.subr.mxu0 0.0
    %5071 = vmatpush1.msra.mxu0 0.0
    %5072 = vmatprep.subr.mxu0 0.0
    %5073 = vmatpush1.msra.mxu0 0.0
    %5074 = vmatprep.mubr.f32.mxu0 0.0
    %5075 = vmatmul.mubr.f32.gmra.mrb[0].mxu0 %v4999
    %v5076 = vpop.f32.mrb[0].mxu0
    %v5077 = vadd.f32 0.0, %v5076
    %v5078 = vpop.f32.mrb[0].mxu0
    %5079 = vmatprep.mubr.f32.mxu0 0.0
    %5080 = vmatmul.mubr.f32.gmra.mrb[0].mxu0 %v5002
    %v5081 = vpop.f32.mrb[0].mxu0
    %v5082 = vadd.f32 0.0, %v5081
    %v5083 = vpop.f32.mrb[0].mxu0
    %5084 = vmatprep.mubr.f32.mxu0 0.0
    %5085 = vmatmul.mubr.f32.gmra.mrb[0].mxu0 %v5005
    %v5086 = vpop.f32.mrb[0].mxu0
    %v5087 = vadd.f32 0.0, %v5086
    %v5088 = vpop.f32.mrb[0].mxu0
    %5089 = vmatprep.mubr.f32.mxu0 0.0
    %5090 = vmatmul.mubr.f32.gmra.mrb[0].mxu0 %v5008
    %v5091 = vpop.f32.mrb[0].mxu0
    %v5092 = vadd.f32 0.0, %v5091
    %v5093 = vpop.f32.mrb[0].mxu0
    %5094 = vdwg.mxu0
    %v5095 = vadd.f32 %v4896, %v5077
    %v5096 = vadd.f32 %v4897, %v5082
    %v5097 = vadd.f32 %v4898, %v5087
    %v5098 = vadd.f32 %v4899, %v5092
    %5099 = vmatprep.subr.mxu0 0.0
    %5100 = vmatpush1.msra.mxu0 %v4985
    %5101 = vmatprep.subr.mxu0 0.0
    %5102 = vmatpush1.msra.mxu0 %v4986
    %5103 = vmatprep.subr.mxu0 0.0
    %5104 = vmatpush1.msra.mxu0 %v4987
    %5105 = vmatprep.subr.mxu0 0.0
    %5106 = vmatpush1.msra.mxu0 %v4988
    %5107 = vmatprep.subr.mxu0 0.0
    %5108 = vmatpush1.msra.mxu0 0.0
    %5109 = vmatprep.subr.mxu0 0.0
    %5110 = vmatpush1.msra.mxu0 0.0
    %5111 = vmatprep.subr.mxu0 0.0
    %5112 = vmatpush1.msra.mxu0 0.0
    %5113 = vmatprep.subr.mxu0 0.0
    %5114 = vmatpush1.msra.mxu0 0.0
    %5115 = vmatprep.subr.mxu0 0.0
    %5116 = vmatpush1.msra.mxu0 0.0
    %5117 = vmatprep.subr.mxu0 0.0
    %5118 = vmatpush1.msra.mxu0 0.0
    %5119 = vmatprep.subr.mxu0 0.0
    %5120 = vmatpush1.msra.mxu0 0.0
    %5121 = vmatprep.subr.mxu0 0.0
    %5122 = vmatpush1.msra.mxu0 0.0
    %5123 = vmatprep.subr.mxu0 0.0
    %5124 = vmatpush1.msra.mxu0 0.0
    %5125 = vmatprep.subr.mxu0 0.0
    %5126 = vmatpush1.msra.mxu0 0.0
    %5127 = vmatprep.subr.mxu0 0.0
    %5128 = vmatpush1.msra.mxu0 0.0
    %5129 = vmatprep.subr.mxu0 0.0
    %5130 = vmatpush1.msra.mxu0 0.0
    %5131 = vmatprep.subr.mxu0 0.0
    %5132 = vmatpush1.msra.mxu0 0.0
    %5133 = vmatprep.subr.mxu0 0.0
    %5134 = vmatpush1.msra.mxu0 0.0
    %5135 = vmatprep.subr.mxu0 0.0
    %5136 = vmatpush1.msra.mxu0 0.0
    %5137 = vmatprep.subr.mxu0 0.0
    %5138 = vmatpush1.msra.mxu0 0.0
    %5139 = vmatprep.subr.mxu0 0.0
    %5140 = vmatpush1.msra.mxu0 0.0
    %5141 = vmatprep.subr.mxu0 0.0
    %5142 = vmatpush1.msra.mxu0 0.0
    %5143 = vmatprep.subr.mxu0 0.0
    %5144 = vmatpush1.msra.mxu0 0.0
    %5145 = vmatprep.subr.mxu0 0.0
    %5146 = vmatpush1.msra.mxu0 0.0
    %5147 = vmatprep.subr.mxu0 0.0
    %5148 = vmatpush1.msra.mxu0 0.0
    %5149 = vmatprep.subr.mxu0 0.0
    %5150 = vmatpush1.msra.mxu0 0.0
    %5151 = vmatprep.subr.mxu0 0.0
    %5152 = vmatpush1.msra.mxu0 0.0
    %5153 = vmatprep.subr.mxu0 0.0
    %5154 = vmatpush1.msra.mxu0 0.0
    %5155 = vmatprep.subr.mxu0 0.0
    %5156 = vmatpush1.msra.mxu0 0.0
    %5157 = vmatprep.subr.mxu0 0.0
    %5158 = vmatpush1.msra.mxu0 0.0
    %5159 = vmatprep.subr.mxu0 0.0
    %5160 = vmatpush1.msra.mxu0 0.0
    %5161 = vmatprep.subr.mxu0 0.0
    %5162 = vmatpush1.msra.mxu0 0.0
    %5163 = vmatprep.mubr.f32.mxu0 0.0
    %5164 = vmatmul.mubr.f32.gmra.mrb[0].mxu0 %v3496
    %v5165 = vpop.f32.mrb[0].mxu0
    %v5166 = vadd.f32 0.0, %v5165
    %v5167 = vpop.f32.mrb[0].mxu0
    %5168 = vmatprep.mubr.f32.mxu0 0.0
    %5169 = vmatmul.mubr.f32.gmra.mrb[0].mxu0 %v3499
    %v5170 = vpop.f32.mrb[0].mxu0
    %v5171 = vadd.f32 0.0, %v5170
    %v5172 = vpop.f32.mrb[0].mxu0
    %5173 = vmatprep.mubr.f32.mxu0 0.0
    %5174 = vmatmul.mubr.f32.gmra.mrb[0].mxu0 %v3502
    %v5175 = vpop.f32.mrb[0].mxu0
    %v5176 = vadd.f32 0.0, %v5175
    %v5177 = vpop.f32.mrb[0].mxu0
    %5178 = vmatprep.mubr.f32.mxu0 0.0
    %5179 = vmatmul.mubr.f32.gmra.mrb[0].mxu0 %v3505
    %v5180 = vpop.f32.mrb[0].mxu0
    %v5181 = vadd.f32 0.0, %v5180
    %v5182 = vpop.f32.mrb[0].mxu0
    %5183 = vdwg.mxu0
    %v5184 = vsub.f32 %v5166, %v4786
    %v5185 = vsub.f32 %v5171, %v4787
    %v5186 = vsub.f32 %v5176, %v4788
    %v5187 = vsub.f32 %v5181, %v4789
    %s5188 = scalar_lea.vmem %s6, 640
    %v5189 = vld [vmem:[%s5188] sm:$0xff]
    %v5190 = vld [vmem:[%s5188 + $0x8] sm:$0xff]
    %v5191 = vld [vmem:[%s5188 + $0x10] sm:$0xff]
    %v5192 = vld [vmem:[%s5188 + $0x18] sm:$0xff]
    %v5193 = vld [vmem:[%s5188 + $0x20] sm:$0xff]
    %v5194 = vld [vmem:[%s5188 + $0x28] sm:$0xff]
    %v5195 = vld [vmem:[%s5188 + $0x30] sm:$0xff]
    %v5196 = vld [vmem:[%s5188 + $0x38] sm:$0xff]
    %v5198 = vsel %vm69, %v5184, 0
    %v5201 = vsel %vm69, %v5185, 0
    %v5204 = vsel %vm69, %v5186, 0
    %v5207 = vsel %vm69, %v5187, 0
    %5209 = vmatprep.subr.mxu0 0.0
    %5210 = vmatpush1.msra.mxu0 %v5189
    %5211 = vmatprep.subr.mxu0 0.0
    %5212 = vmatpush1.msra.mxu0 %v5190
    %5213 = vmatprep.subr.mxu0 0.0
    %5214 = vmatpush1.msra.mxu0 %v5191
    %5215 = vmatprep.subr.mxu0 0.0
    %5216 = vmatpush1.msra.mxu0 %v5192
    %5217 = vmatprep.subr.mxu0 0.0
    %5218 = vmatpush1.msra.mxu0 %v5193
    %5219 = vmatprep.subr.mxu0 0.0
    %5220 = vmatpush1.msra.mxu0 %v5194
    %5221 = vmatprep.subr.mxu0 0.0
    %5222 = vmatpush1.msra.mxu0 %v5195
    %5223 = vmatprep.subr.mxu0 0.0
    %5224 = vmatpush1.msra.mxu0 %v5196
    %5225 = vmatprep.subr.mxu0 0.0
    %5226 = vmatpush1.msra.mxu0 0.0
    %5227 = vmatprep.subr.mxu0 0.0
    %5228 = vmatpush1.msra.mxu0 0.0
    %5229 = vmatprep.subr.mxu0 0.0
    %5230 = vmatpush1.msra.mxu0 0.0
    %5231 = vmatprep.subr.mxu0 0.0
    %5232 = vmatpush1.msra.mxu0 0.0
    %5233 = vmatprep.subr.mxu0 0.0
    %5234 = vmatpush1.msra.mxu0 0.0
    %5235 = vmatprep.subr.mxu0 0.0
    %5236 = vmatpush1.msra.mxu0 0.0
    %5237 = vmatprep.subr.mxu0 0.0
    %5238 = vmatpush1.msra.mxu0 0.0
    %5239 = vmatprep.subr.mxu0 0.0
    %5240 = vmatpush1.msra.mxu0 0.0
    %5241 = vmatprep.subr.mxu0 0.0
    %5242 = vmatpush1.msra.mxu0 0.0
    %5243 = vmatprep.subr.mxu0 0.0
    %5244 = vmatpush1.msra.mxu0 0.0
    %5245 = vmatprep.subr.mxu0 0.0
    %5246 = vmatpush1.msra.mxu0 0.0
    %5247 = vmatprep.subr.mxu0 0.0
    %5248 = vmatpush1.msra.mxu0 0.0
    %5249 = vmatprep.subr.mxu0 0.0
    %5250 = vmatpush1.msra.mxu0 0.0
    %5251 = vmatprep.subr.mxu0 0.0
    %5252 = vmatpush1.msra.mxu0 0.0
    %5253 = vmatprep.subr.mxu0 0.0
    %5254 = vmatpush1.msra.mxu0 0.0
    %5255 = vmatprep.subr.mxu0 0.0
    %5256 = vmatpush1.msra.mxu0 0.0
    %5257 = vmatprep.subr.mxu0 0.0
    %5258 = vmatpush1.msra.mxu0 0.0
    %5259 = vmatprep.subr.mxu0 0.0
    %5260 = vmatpush1.msra.mxu0 0.0
    %5261 = vmatprep.subr.mxu0 0.0
    %5262 = vmatpush1.msra.mxu0 0.0
    %5263 = vmatprep.subr.mxu0 0.0
    %5264 = vmatpush1.msra.mxu0 0.0
    %5265 = vmatprep.subr.mxu0 0.0
    %5266 = vmatpush1.msra.mxu0 0.0
    %5267 = vmatprep.subr.mxu0 0.0
    %5268 = vmatpush1.msra.mxu0 0.0
    %5269 = vmatprep.subr.mxu0 0.0
    %5270 = vmatpush1.msra.mxu0 0.0
    %5271 = vmatprep.subr.mxu0 0.0
    %5272 = vmatpush1.msra.mxu0 0.0
    %5273 = vmatprep.mubr.f32.mxu0 0.0
    %5274 = vmatmul.mubr.f32.gmra.mrb[0].mxu0 %v5198
    %v5275 = vpop.f32.mrb[0].mxu0
    %v5276 = vadd.f32 0.0, %v5275
    %v5277 = vpop.f32.mrb[0].mxu0
    %5278 = vmatprep.mubr.f32.mxu0 0.0
    %5279 = vmatmul.mubr.f32.gmra.mrb[0].mxu0 %v5201
    %v5280 = vpop.f32.mrb[0].mxu0
    %v5281 = vadd.f32 0.0, %v5280
    %v5282 = vpop.f32.mrb[0].mxu0
    %5283 = vmatprep.mubr.f32.mxu0 0.0
    %5284 = vmatmul.mubr.f32.gmra.mrb[0].mxu0 %v5204
    %v5285 = vpop.f32.mrb[0].mxu0
    %v5286 = vadd.f32 0.0, %v5285
    %v5287 = vpop.f32.mrb[0].mxu0
    %5288 = vmatprep.mubr.f32.mxu0 0.0
    %5289 = vmatmul.mubr.f32.gmra.mrb[0].mxu0 %v5207
    %v5290 = vpop.f32.mrb[0].mxu0
    %v5291 = vadd.f32 0.0, %v5290
    %v5292 = vpop.f32.mrb[0].mxu0
    %5293 = vdwg.mxu0
    %v5294 = vadd.f32 %v5095, %v5276
    %v5295 = vadd.f32 %v5096, %v5281
    %v5296 = vadd.f32 %v5097, %v5286
    %v5297 = vadd.f32 %v5098, %v5291
    %5298 = vmatprep.subr.mxu0 0.0
    %5299 = vmatpush1.msra.mxu0 %v5184
    %5300 = vmatprep.subr.mxu0 0.0
    %5301 = vmatpush1.msra.mxu0 %v5185
    %5302 = vmatprep.subr.mxu0 0.0
    %5303 = vmatpush1.msra.mxu0 %v5186
    %5304 = vmatprep.subr.mxu0 0.0
    %5305 = vmatpush1.msra.mxu0 %v5187
    %5306 = vmatprep.subr.mxu0 0.0
    %5307 = vmatpush1.msra.mxu0 0.0
    %5308 = vmatprep.subr.mxu0 0.0
    %5309 = vmatpush1.msra.mxu0 0.0
    %5310 = vmatprep.subr.mxu0 0.0
    %5311 = vmatpush1.msra.mxu0 0.0
    %5312 = vmatprep.subr.mxu0 0.0
    %5313 = vmatpush1.msra.mxu0 0.0
    %5314 = vmatprep.subr.mxu0 0.0
    %5315 = vmatpush1.msra.mxu0 0.0
    %5316 = vmatprep.subr.mxu0 0.0
    %5317 = vmatpush1.msra.mxu0 0.0
    %5318 = vmatprep.subr.mxu0 0.0
    %5319 = vmatpush1.msra.mxu0 0.0
    %5320 = vmatprep.subr.mxu0 0.0
    %5321 = vmatpush1.msra.mxu0 0.0
    %5322 = vmatprep.subr.mxu0 0.0
    %5323 = vmatpush1.msra.mxu0 0.0
    %5324 = vmatprep.subr.mxu0 0.0
    %5325 = vmatpush1.msra.mxu0 0.0
    %5326 = vmatprep.subr.mxu0 0.0
    %5327 = vmatpush1.msra.mxu0 0.0
    %5328 = vmatprep.subr.mxu0 0.0
    %5329 = vmatpush1.msra.mxu0 0.0
    %5330 = vmatprep.subr.mxu0 0.0
    %5331 = vmatpush1.msra.mxu0 0.0
    %5332 = vmatprep.subr.mxu0 0.0
    %5333 = vmatpush1.msra.mxu0 0.0
    %5334 = vmatprep.subr.mxu0 0.0
    %5335 = vmatpush1.msra.mxu0 0.0
    %5336 = vmatprep.subr.mxu0 0.0
    %5337 = vmatpush1.msra.mxu0 0.0
    %5338 = vmatprep.subr.mxu0 0.0
    %5339 = vmatpush1.msra.mxu0 0.0
    %5340 = vmatprep.subr.mxu0 0.0
    %5341 = vmatpush1.msra.mxu0 0.0
    %5342 = vmatprep.subr.mxu0 0.0
    %5343 = vmatpush1.msra.mxu0 0.0
    %5344 = vmatprep.subr.mxu0 0.0
    %5345 = vmatpush1.msra.mxu0 0.0
    %5346 = vmatprep.subr.mxu0 0.0
    %5347 = vmatpush1.msra.mxu0 0.0
    %5348 = vmatprep.subr.mxu0 0.0
    %5349 = vmatpush1.msra.mxu0 0.0
    %5350 = vmatprep.subr.mxu0 0.0
    %5351 = vmatpush1.msra.mxu0 0.0
    %5352 = vmatprep.subr.mxu0 0.0
    %5353 = vmatpush1.msra.mxu0 0.0
    %5354 = vmatprep.subr.mxu0 0.0
    %5355 = vmatpush1.msra.mxu0 0.0
    %5356 = vmatprep.subr.mxu0 0.0
    %5357 = vmatpush1.msra.mxu0 0.0
    %5358 = vmatprep.subr.mxu0 0.0
    %5359 = vmatpush1.msra.mxu0 0.0
    %5360 = vmatprep.subr.mxu0 0.0
    %5361 = vmatpush1.msra.mxu0 0.0
    %5362 = vmatprep.mubr.f32.mxu0 0.0
    %5363 = vmatmul.mubr.f32.gmra.mrb[0].mxu0 %v3496
    %v5364 = vpop.f32.mrb[0].mxu0
    %v5365 = vadd.f32 0.0, %v5364
    %v5366 = vpop.f32.mrb[0].mxu0
    %5367 = vmatprep.mubr.f32.mxu0 0.0
    %5368 = vmatmul.mubr.f32.gmra.mrb[0].mxu0 %v3499
    %v5369 = vpop.f32.mrb[0].mxu0
    %v5370 = vadd.f32 0.0, %v5369
    %v5371 = vpop.f32.mrb[0].mxu0
    %5372 = vmatprep.mubr.f32.mxu0 0.0
    %5373 = vmatmul.mubr.f32.gmra.mrb[0].mxu0 %v3502
    %v5374 = vpop.f32.mrb[0].mxu0
    %v5375 = vadd.f32 0.0, %v5374
    %v5376 = vpop.f32.mrb[0].mxu0
    %5377 = vmatprep.mubr.f32.mxu0 0.0
    %5378 = vmatmul.mubr.f32.gmra.mrb[0].mxu0 %v3505
    %v5379 = vpop.f32.mrb[0].mxu0
    %v5380 = vadd.f32 0.0, %v5379
    %v5381 = vpop.f32.mrb[0].mxu0
    %5382 = vdwg.mxu0
    %v5383 = vsub.f32 %v5365, %v4985
    %v5384 = vsub.f32 %v5370, %v4986
    %v5385 = vsub.f32 %v5375, %v4987
    %v5386 = vsub.f32 %v5380, %v4988
    %s5387 = scalar_lea.vmem %s6, 704
    %v5388 = vld [vmem:[%s5387] sm:$0xff]
    %v5389 = vld [vmem:[%s5387 + $0x8] sm:$0xff]
    %v5390 = vld [vmem:[%s5387 + $0x10] sm:$0xff]
    %v5391 = vld [vmem:[%s5387 + $0x18] sm:$0xff]
    %v5392 = vld [vmem:[%s5387 + $0x20] sm:$0xff]
    %v5393 = vld [vmem:[%s5387 + $0x28] sm:$0xff]
    %v5394 = vld [vmem:[%s5387 + $0x30] sm:$0xff]
    %v5395 = vld [vmem:[%s5387 + $0x38] sm:$0xff]
    %v5397 = vsel %vm69, %v5383, 0
    %v5400 = vsel %vm69, %v5384, 0
    %v5403 = vsel %vm69, %v5385, 0
    %v5406 = vsel %vm69, %v5386, 0
    %5408 = vmatprep.subr.mxu0 0.0
    %5409 = vmatpush1.msra.mxu0 %v5388
    %5410 = vmatprep.subr.mxu0 0.0
    %5411 = vmatpush1.msra.mxu0 %v5389
    %5412 = vmatprep.subr.mxu0 0.0
    %5413 = vmatpush1.msra.mxu0 %v5390
    %5414 = vmatprep.subr.mxu0 0.0
    %5415 = vmatpush1.msra.mxu0 %v5391
    %5416 = vmatprep.subr.mxu0 0.0
    %5417 = vmatpush1.msra.mxu0 %v5392
    %5418 = vmatprep.subr.mxu0 0.0
    %5419 = vmatpush1.msra.mxu0 %v5393
    %5420 = vmatprep.subr.mxu0 0.0
    %5421 = vmatpush1.msra.mxu0 %v5394
    %5422 = vmatprep.subr.mxu0 0.0
    %5423 = vmatpush1.msra.mxu0 %v5395
    %5424 = vmatprep.subr.mxu0 0.0
    %5425 = vmatpush1.msra.mxu0 0.0
    %5426 = vmatprep.subr.mxu0 0.0
    %5427 = vmatpush1.msra.mxu0 0.0
    %5428 = vmatprep.subr.mxu0 0.0
    %5429 = vmatpush1.msra.mxu0 0.0
    %5430 = vmatprep.subr.mxu0 0.0
    %5431 = vmatpush1.msra.mxu0 0.0
    %5432 = vmatprep.subr.mxu0 0.0
    %5433 = vmatpush1.msra.mxu0 0.0
    %5434 = vmatprep.subr.mxu0 0.0
    %5435 = vmatpush1.msra.mxu0 0.0
    %5436 = vmatprep.subr.mxu0 0.0
    %5437 = vmatpush1.msra.mxu0 0.0
    %5438 = vmatprep.subr.mxu0 0.0
    %5439 = vmatpush1.msra.mxu0 0.0
    %5440 = vmatprep.subr.mxu0 0.0
    %5441 = vmatpush1.msra.mxu0 0.0
    %5442 = vmatprep.subr.mxu0 0.0
    %5443 = vmatpush1.msra.mxu0 0.0
    %5444 = vmatprep.subr.mxu0 0.0
    %5445 = vmatpush1.msra.mxu0 0.0
    %5446 = vmatprep.subr.mxu0 0.0
    %5447 = vmatpush1.msra.mxu0 0.0
    %5448 = vmatprep.subr.mxu0 0.0
    %5449 = vmatpush1.msra.mxu0 0.0
    %5450 = vmatprep.subr.mxu0 0.0
    %5451 = vmatpush1.msra.mxu0 0.0
    %5452 = vmatprep.subr.mxu0 0.0
    %5453 = vmatpush1.msra.mxu0 0.0
    %5454 = vmatprep.subr.mxu0 0.0
    %5455 = vmatpush1.msra.mxu0 0.0
    %5456 = vmatprep.subr.mxu0 0.0
    %5457 = vmatpush1.msra.mxu0 0.0
    %5458 = vmatprep.subr.mxu0 0.0
    %5459 = vmatpush1.msra.mxu0 0.0
    %5460 = vmatprep.subr.mxu0 0.0
    %5461 = vmatpush1.msra.mxu0 0.0
    %5462 = vmatprep.subr.mxu0 0.0
    %5463 = vmatpush1.msra.mxu0 0.0
    %5464 = vmatprep.subr.mxu0 0.0
    %5465 = vmatpush1.msra.mxu0 0.0
    %5466 = vmatprep.subr.mxu0 0.0
    %5467 = vmatpush1.msra.mxu0 0.0
    %5468 = vmatprep.subr.mxu0 0.0
    %5469 = vmatpush1.msra.mxu0 0.0
    %5470 = vmatprep.subr.mxu0 0.0
    %5471 = vmatpush1.msra.mxu0 0.0
    %5472 = vmatprep.mubr.f32.mxu0 0.0
    %5473 = vmatmul.mubr.f32.gmra.mrb[0].mxu0 %v5397
    %v5474 = vpop.f32.mrb[0].mxu0
    %v5475 = vadd.f32 0.0, %v5474
    %v5476 = vpop.f32.mrb[0].mxu0
    %5477 = vmatprep.mubr.f32.mxu0 0.0
    %5478 = vmatmul.mubr.f32.gmra.mrb[0].mxu0 %v5400
    %v5479 = vpop.f32.mrb[0].mxu0
    %v5480 = vadd.f32 0.0, %v5479
    %v5481 = vpop.f32.mrb[0].mxu0
    %5482 = vmatprep.mubr.f32.mxu0 0.0
    %5483 = vmatmul.mubr.f32.gmra.mrb[0].mxu0 %v5403
    %v5484 = vpop.f32.mrb[0].mxu0
    %v5485 = vadd.f32 0.0, %v5484
    %v5486 = vpop.f32.mrb[0].mxu0
    %5487 = vmatprep.mubr.f32.mxu0 0.0
    %5488 = vmatmul.mubr.f32.gmra.mrb[0].mxu0 %v5406
    %v5489 = vpop.f32.mrb[0].mxu0
    %v5490 = vadd.f32 0.0, %v5489
    %v5491 = vpop.f32.mrb[0].mxu0
    %5492 = vdwg.mxu0
    %v5493 = vadd.f32 %v5294, %v5475
    %v5494 = vadd.f32 %v5295, %v5480
    %v5495 = vadd.f32 %v5296, %v5485
    %v5496 = vadd.f32 %v5297, %v5490
    %v5497 = vld [vmem:[%s7] sm:$0x1]
    %v5499 = vlaneseq
    %v5500 = vshrl.u32 %v5499, 7
    %v5501 = vsub.s32 0, %v5500
    %v5502 = vrot.slane %v5497, %v5501
    %v5504 = vadd.f32 %v5493, %v5502
    %v5505 = vadd.f32 %v5494, %v5502
    %v5506 = vadd.f32 %v5495, %v5502
    %v5507 = vadd.f32 %v5496, %v5502
    %v5508 = vld [vmem:[%s8] sm:$0xff]
    %v5509 = vld [vmem:[%s8 + $0x8] sm:$0xff]
    %v5510 = vld [vmem:[%s8 + $0x10] sm:$0xff]
    %v5511 = vld [vmem:[%s8 + $0x18] sm:$0xff]
    %v5513 = vsel %vm3186, %v5504, 0
    %v5516 = vsel %vm3186, %v5505, 0
    %v5519 = vsel %vm3186, %v5506, 0
    %v5522 = vsel %vm3186, %v5507, 0
    %5524 = vmatprep.subr.mxu0 0.0
    %5525 = vmatpush1.msra.mxu0 %v5508
    %5526 = vmatprep.subr.mxu0 0.0
    %5527 = vmatpush1.msra.mxu0 %v5509
    %5528 = vmatprep.subr.mxu0 0.0
    %5529 = vmatpush1.msra.mxu0 %v5510
    %5530 = vmatprep.subr.mxu0 0.0
    %5531 = vmatpush1.msra.mxu0 %v5511
    %5532 = vmatprep.subr.mxu0 0.0
    %5533 = vmatpush1.msra.mxu0 0.0
    %5534 = vmatprep.subr.mxu0 0.0
    %5535 = vmatpush1.msra.mxu0 0.0
    %5536 = vmatprep.subr.mxu0 0.0
    %5537 = vmatpush1.msra.mxu0 0.0
    %5538 = vmatprep.subr.mxu0 0.0
    %5539 = vmatpush1.msra.mxu0 0.0
    %5540 = vmatprep.subr.mxu0 0.0
    %5541 = vmatpush1.msra.mxu0 0.0
    %5542 = vmatprep.subr.mxu0 0.0
    %5543 = vmatpush1.msra.mxu0 0.0
    %5544 = vmatprep.subr.mxu0 0.0
    %5545 = vmatpush1.msra.mxu0 0.0
    %5546 = vmatprep.subr.mxu0 0.0
    %5547 = vmatpush1.msra.mxu0 0.0
    %5548 = vmatprep.subr.mxu0 0.0
    %5549 = vmatpush1.msra.mxu0 0.0
    %5550 = vmatprep.subr.mxu0 0.0
    %5551 = vmatpush1.msra.mxu0 0.0
    %5552 = vmatprep.subr.mxu0 0.0
    %5553 = vmatpush1.msra.mxu0 0.0
    %5554 = vmatprep.subr.mxu0 0.0
    %5555 = vmatpush1.msra.mxu0 0.0
    %5556 = vmatprep.subr.mxu0 0.0
    %5557 = vmatpush1.msra.mxu0 0.0
    %5558 = vmatprep.subr.mxu0 0.0
    %5559 = vmatpush1.msra.mxu0 0.0
    %5560 = vmatprep.subr.mxu0 0.0
    %5561 = vmatpush1.msra.mxu0 0.0
    %5562 = vmatprep.subr.mxu0 0.0
    %5563 = vmatpush1.msra.mxu0 0.0
    %5564 = vmatprep.subr.mxu0 0.0
    %5565 = vmatpush1.msra.mxu0 0.0
    %5566 = vmatprep.subr.mxu0 0.0
    %5567 = vmatpush1.msra.mxu0 0.0
    %5568 = vmatprep.subr.mxu0 0.0
    %5569 = vmatpush1.msra.mxu0 0.0
    %5570 = vmatprep.subr.mxu0 0.0
    %5571 = vmatpush1.msra.mxu0 0.0
    %5572 = vmatprep.subr.mxu0 0.0
    %5573 = vmatpush1.msra.mxu0 0.0
    %5574 = vmatprep.subr.mxu0 0.0
    %5575 = vmatpush1.msra.mxu0 0.0
    %5576 = vmatprep.subr.mxu0 0.0
    %5577 = vmatpush1.msra.mxu0 0.0
    %5578 = vmatprep.subr.mxu0 0.0
    %5579 = vmatpush1.msra.mxu0 0.0
    %5580 = vmatprep.subr.mxu0 0.0
    %5581 = vmatpush1.msra.mxu0 0.0
    %5582 = vmatprep.subr.mxu0 0.0
    %5583 = vmatpush1.msra.mxu0 0.0
    %5584 = vmatprep.subr.mxu0 0.0
    %5585 = vmatpush1.msra.mxu0 0.0
    %5586 = vmatprep.subr.mxu0 0.0
    %5587 = vmatpush1.msra.mxu0 0.0
    %5588 = vmatprep.mubr.f32.mxu0 0.0
    %5589 = vmatmul.mubr.f32.gmra.mrb[0].mxu0 %v5513
    %v5590 = vpop.f32.mrb[0].mxu0
    %v5591 = vadd.f32 0.0, %v5590
    %v5592 = vpop.f32.mrb[0].mxu0
    %5593 = vmatprep.mubr.f32.mxu0 0.0
    %5594 = vmatmul.mubr.f32.gmra.mrb[0].mxu0 %v5516
    %v5595 = vpop.f32.mrb[0].mxu0
    %v5596 = vadd.f32 0.0, %v5595
    %v5597 = vpop.f32.mrb[0].mxu0
    %5598 = vmatprep.mubr.f32.mxu0 0.0
    %5599 = vmatmul.mubr.f32.gmra.mrb[0].mxu0 %v5519
    %v5600 = vpop.f32.mrb[0].mxu0
    %v5601 = vadd.f32 0.0, %v5600
    %v5602 = vpop.f32.mrb[0].mxu0
    %5603 = vmatprep.mubr.f32.mxu0 0.0
    %5604 = vmatmul.mubr.f32.gmra.mrb[0].mxu0 %v5522
    %v5605 = vpop.f32.mrb[0].mxu0
    %v5606 = vadd.f32 0.0, %v5605
    %v5607 = vpop.f32.mrb[0].mxu0
    %5608 = vdwg.mxu0
    %v5609 = vld [vmem:[%s9] sm:$0xff]
    %v5610 = vld [vmem:[%s9 + $0x8] sm:$0xff]
    %v5611 = vld [vmem:[%s9 + $0x10] sm:$0xff]
    %v5612 = vld [vmem:[%s9 + $0x18] sm:$0xff]
    %v5613 = vmul.f32 %v5591, %v5609
    %v5614 = vmul.f32 %v5596, %v5610
    %v5615 = vmul.f32 %v5601, %v5611
    %v5616 = vmul.f32 %v5606, %v5612
    %v5617 = vld [vmem:[%s10] sm:$0xff]
    %v5618 = vld [vmem:[%s10 + $0x8] sm:$0xff]
    %v5619 = vld [vmem:[%s10 + $0x10] sm:$0xff]
    %v5620 = vld [vmem:[%s10 + $0x18] sm:$0xff]
    %v5621 = vld [vmem:[%s10 + $0x20] sm:$0xff]
    %v5622 = vld [vmem:[%s10 + $0x28] sm:$0xff]
    %v5623 = vld [vmem:[%s10 + $0x30] sm:$0xff]
    %v5624 = vld [vmem:[%s10 + $0x38] sm:$0xff]
    %v5625 = vld [vmem:[%s10 + $0x40] sm:$0xff]
    %v5626 = vld [vmem:[%s10 + $0x48] sm:$0xff]
    %v5627 = vld [vmem:[%s10 + $0x50] sm:$0xff]
    %v5628 = vld [vmem:[%s10 + $0x58] sm:$0xff]
    %vm5629 = vcmask 785408
    %v5631 = vsel %vm5629, %v5613, 0
    %v5634 = vsel %vm5629, %v5614, 0
    %v5637 = vsel %vm5629, %v5615, 0
    %v5640 = vsel %vm5629, %v5616, 0
    %5642 = vmatprep.subr.mxu0 0.0
    %5643 = vmatpush1.msra.mxu0 %v5617
    %5644 = vmatprep.subr.mxu0 0.0
    %5645 = vmatpush1.msra.mxu0 %v5618
    %5646 = vmatprep.subr.mxu0 0.0
    %5647 = vmatpush1.msra.mxu0 %v5619
    %5648 = vmatprep.subr.mxu0 0.0
    %5649 = vmatpush1.msra.mxu0 %v5620
    %5650 = vmatprep.subr.mxu0 0.0
    %5651 = vmatpush1.msra.mxu0 %v5621
    %5652 = vmatprep.subr.mxu0 0.0
    %5653 = vmatpush1.msra.mxu0 %v5622
    %5654 = vmatprep.subr.mxu0 0.0
    %5655 = vmatpush1.msra.mxu0 %v5623
    %5656 = vmatprep.subr.mxu0 0.0
    %5657 = vmatpush1.msra.mxu0 %v5624
    %5658 = vmatprep.subr.mxu0 0.0
    %5659 = vmatpush1.msra.mxu0 %v5625
    %5660 = vmatprep.subr.mxu0 0.0
    %5661 = vmatpush1.msra.mxu0 %v5626
    %5662 = vmatprep.subr.mxu0 0.0
    %5663 = vmatpush1.msra.mxu0 %v5627
    %5664 = vmatprep.subr.mxu0 0.0
    %5665 = vmatpush1.msra.mxu0 %v5628
    %5666 = vmatprep.subr.mxu0 0.0
    %5667 = vmatpush1.msra.mxu0 0.0
    %5668 = vmatprep.subr.mxu0 0.0
    %5669 = vmatpush1.msra.mxu0 0.0
    %5670 = vmatprep.subr.mxu0 0.0
    %5671 = vmatpush1.msra.mxu0 0.0
    %5672 = vmatprep.subr.mxu0 0.0
    %5673 = vmatpush1.msra.mxu0 0.0
    %5674 = vmatprep.subr.mxu0 0.0
    %5675 = vmatpush1.msra.mxu0 0.0
    %5676 = vmatprep.subr.mxu0 0.0
    %5677 = vmatpush1.msra.mxu0 0.0
    %5678 = vmatprep.subr.mxu0 0.0
    %5679 = vmatpush1.msra.mxu0 0.0
    %5680 = vmatprep.subr.mxu0 0.0
    %5681 = vmatpush1.msra.mxu0 0.0
    %5682 = vmatprep.subr.mxu0 0.0
    %5683 = vmatpush1.msra.mxu0 0.0
    %5684 = vmatprep.subr.mxu0 0.0
    %5685 = vmatpush1.msra.mxu0 0.0
    %5686 = vmatprep.subr.mxu0 0.0
    %5687 = vmatpush1.msra.mxu0 0.0
    %5688 = vmatprep.subr.mxu0 0.0
    %5689 = vmatpush1.msra.mxu0 0.0
    %5690 = vmatprep.subr.mxu0 0.0
    %5691 = vmatpush1.msra.mxu0 0.0
    %5692 = vmatprep.subr.mxu0 0.0
    %5693 = vmatpush1.msra.mxu0 0.0
    %5694 = vmatprep.subr.mxu0 0.0
    %5695 = vmatpush1.msra.mxu0 0.0
    %5696 = vmatprep.subr.mxu0 0.0
    %5697 = vmatpush1.msra.mxu0 0.0
    %5698 = vmatprep.subr.mxu0 0.0
    %5699 = vmatpush1.msra.mxu0 0.0
    %5700 = vmatprep.subr.mxu0 0.0
    %5701 = vmatpush1.msra.mxu0 0.0
    %5702 = vmatprep.subr.mxu0 0.0
    %5703 = vmatpush1.msra.mxu0 0.0
    %5704 = vmatprep.subr.mxu0 0.0
    %5705 = vmatpush1.msra.mxu0 0.0
    %5706 = vmatprep.mubr.f32.mxu0 0.0
    %5707 = vmatmul.mubr.f32.gmra.mrb[0].mxu0 %v5631
    %v5708 = vpop.f32.mrb[0].mxu0
    %v5709 = vadd.f32 0.0, %v5708
    %v5710 = vpop.f32.mrb[0].mxu0
    %5711 = vmatprep.mubr.f32.mxu0 0.0
    %5712 = vmatmul.mubr.f32.gmra.mrb[0].mxu0 %v5634
    %v5713 = vpop.f32.mrb[0].mxu0
    %v5714 = vadd.f32 0.0, %v5713
    %v5715 = vpop.f32.mrb[0].mxu0
    %5716 = vmatprep.mubr.f32.mxu0 0.0
    %5717 = vmatmul.mubr.f32.gmra.mrb[0].mxu0 %v5637
    %v5718 = vpop.f32.mrb[0].mxu0
    %v5719 = vadd.f32 0.0, %v5718
    %v5720 = vpop.f32.mrb[0].mxu0
    %5721 = vmatprep.mubr.f32.mxu0 0.0
    %5722 = vmatmul.mubr.f32.gmra.mrb[0].mxu0 %v5640
    %v5723 = vpop.f32.mrb[0].mxu0
    %v5724 = vadd.f32 0.0, %v5723
    %v5725 = vpop.f32.mrb[0].mxu0
    %5726 = vdwg.mxu0
    %v5727 = vld [vmem:[%s11] sm:$0x3]
    %v5728 = vld [vmem:[%s12] sm:$0x1]
    %v5730 = vlaneseq
    %v5731 = vshrl.u32 %v5730, 7
    %v5732 = vsub.s32 0, %v5731
    %v5733 = vrot.slane %v5728, %v5732
    %v5736 = vsel %vm3186, %v5727, 0
    %5738 = vmatprep.subr.mxu0 0.0
    %5739 = vmatpush1.msra.mxu0 %v5709
    %5740 = vmatprep.subr.mxu0 0.0
    %5741 = vmatpush1.msra.mxu0 %v5714
    %5742 = vmatprep.subr.mxu0 0.0
    %5743 = vmatpush1.msra.mxu0 %v5719
    %5744 = vmatprep.subr.mxu0 0.0
    %5745 = vmatpush1.msra.mxu0 %v5724
    %5746 = vmatprep.subr.mxu0 0.0
    %5747 = vmatpush1.msra.mxu0 0.0
    %5748 = vmatprep.subr.mxu0 0.0
    %5749 = vmatpush1.msra.mxu0 0.0
    %5750 = vmatprep.subr.mxu0 0.0
    %5751 = vmatpush1.msra.mxu0 0.0
    %5752 = vmatprep.subr.mxu0 0.0
    %5753 = vmatpush1.msra.mxu0 0.0
    %5754 = vmatprep.subr.mxu0 0.0
    %5755 = vmatpush1.msra.mxu0 0.0
    %5756 = vmatprep.subr.mxu0 0.0
    %5757 = vmatpush1.msra.mxu0 0.0
    %5758 = vmatprep.subr.mxu0 0.0
    %5759 = vmatpush1.msra.mxu0 0.0
    %5760 = vmatprep.subr.mxu0 0.0
    %5761 = vmatpush1.msra.mxu0 0.0
    %5762 = vmatprep.subr.mxu0 0.0
    %5763 = vmatpush1.msra.mxu0 0.0
    %5764 = vmatprep.subr.mxu0 0.0
    %5765 = vmatpush1.msra.mxu0 0.0
    %5766 = vmatprep.subr.mxu0 0.0
    %5767 = vmatpush1.msra.mxu0 0.0
    %5768 = vmatprep.subr.mxu0 0.0
    %5769 = vmatpush1.msra.mxu0 0.0
    %5770 = vmatprep.subr.mxu0 0.0
    %5771 = vmatpush1.msra.mxu0 0.0
    %5772 = vmatprep.subr.mxu0 0.0
    %5773 = vmatpush1.msra.mxu0 0.0
    %5774 = vmatprep.subr.mxu0 0.0
    %5775 = vmatpush1.msra.mxu0 0.0
    %5776 = vmatprep.subr.mxu0 0.0
    %5777 = vmatpush1.msra.mxu0 0.0
    %5778 = vmatprep.subr.mxu0 0.0
    %5779 = vmatpush1.msra.mxu0 0.0
    %5780 = vmatprep.subr.mxu0 0.0
    %5781 = vmatpush1.msra.mxu0 0.0
    %5782 = vmatprep.subr.mxu0 0.0
    %5783 = vmatpush1.msra.mxu0 0.0
    %5784 = vmatprep.subr.mxu0 0.0
    %5785 = vmatpush1.msra.mxu0 0.0
    %5786 = vmatprep.subr.mxu0 0.0
    %5787 = vmatpush1.msra.mxu0 0.0
    %5788 = vmatprep.subr.mxu0 0.0
    %5789 = vmatpush1.msra.mxu0 0.0
    %5790 = vmatprep.subr.mxu0 0.0
    %5791 = vmatpush1.msra.mxu0 0.0
    %5792 = vmatprep.subr.mxu0 0.0
    %5793 = vmatpush1.msra.mxu0 0.0
    %5794 = vmatprep.subr.mxu0 0.0
    %5795 = vmatpush1.msra.mxu0 0.0
    %5796 = vmatprep.subr.mxu0 0.0
    %5797 = vmatpush1.msra.mxu0 0.0
    %5798 = vmatprep.subr.mxu0 0.0
    %5799 = vmatpush1.msra.mxu0 0.0
    %5800 = vmatprep.subr.mxu0 0.0
    %5801 = vmatpush1.msra.mxu0 0.0
    %5802 = vmatprep.mubr.f32.mxu0 0.0
    %5803 = vmatmul.mubr.f32.gmra.mrb[0].mxu0 %v5736
    %v5804 = vpop.f32.mrb[0].mxu0
    %v5805 = vadd.f32 %v5733, %v5804
    %v5806 = vpop.f32.mrb[0].mxu0
    %5807 = vdwg.mxu0
    %vm5808 = vcmask 41984
    %v5809 = vsel %vm5808, %v5805, -inf
    %5810 = vmax.xlane.f32.xlu0 %v5809
    %v5811 = vpop.xlane.xlu0 %5810
    %v5812 = vsub.f32 %v5805, %v5811
    %v5813 = vmul.f32 %v5812, 1.442695
    %v5814 = vpow.pop %v5813
    %v5815 = vsel %vm5808, %v5814, 0.0
    %5816 = vadd.xlane.f32.xlu0 %v5815
    %v5817 = vpop.xlane.xlu0 %5816
    %v5818 = vlog2.pop %v5817
    %v5819 = vmul.f32 %v5818, 0.6931472
    %v5820 = vsub.f32 %v5812, %v5819
    %5821 = vst.msk [vmem:[#allocation2] sm:$0x3] %vm5808, %v5820
    // Predicated region
    $region54: #{tgcn_forward.1} parent=1 // pred_check
      _
    $region55: #{tgcn_forward.1} parent=1 // pred_check_branch
      %5823 = sbr.rel (0) target = $region57
    $region56: #{tgcn_forward.1} parent=1 // pred_region
      %s5825 = ssub.s32 32, 32
      %5826 = vsyncadd [#allocation3], %s5825
      %s5828 = sshll.u32 [#allocation2], 4
      %s5829 = int_to_ptr.vmem [resolvable:$true] %s5828
      %5831 = dma.vmem_to_hbm [thread:$0]  %s5829, 32, %s13, [#allocation3]
    $region57: #{tgcn_forward.1} parent=1 // pred_fallthru
      _
    // Predicated region
    $region58: #{tgcn_forward.1} parent=1 // pred_check
      _
    $region59: #{tgcn_forward.1} parent=1 // pred_check_branch
      %5833 = sbr.rel (0) target = $region61
    $region60: #{tgcn_forward.1} parent=1 // pred_region
      %5834 = dma.done [#allocation3], 32
    $region61: #{tgcn_forward.1} parent=1 // pred_fallthru
      _
    %5835 = vsyncpa [#allocation3], 1

</llo_original>
